<compile_context>
chip_gen: v6e
topology: v6e:2x2x1
jax: 0.10.0
libtpu: 0.0.40
codegen_flags: <defaults>
</compile_context>

<pallas_src>
import functools

import jax
import jax.numpy as jnp
from jax.experimental import pallas as pl
from jax.experimental.pallas import tpu as pltpu

# --------------------- small config (ModelArgs semantics) ---------------------
DIM = 256
N_HEAD = 4
N_KV_HEAD = 2                        # n_local_heads (GQA)
HEAD_DIM = DIM // N_HEAD             # 64
INTERMEDIATE = 512
NORM_EPS = 1e-5
ROPE_BASE = 10000.0
KV_SIZE = N_KV_HEAD * HEAD_DIM                         # 128
TOTAL_HEAD_DIM = (N_HEAD + 2 * N_KV_HEAD) * HEAD_DIM   # 512
QK_WIDTH = (N_HEAD + N_KV_HEAD) * HEAD_DIM             # 384 (roped q|k columns)
FUSED_WIDTH = TOTAL_HEAD_DIM + QK_WIDTH                # 896 (q|k|v|q_rot|k_rot)


# ------------------------- fused transformer-block kernel -------------------------
def _block_kernel(x_ref, cos_ref, sin_ref, anorm_ref,
                  wfused_ref, wo_ref, fnorm_ref, w1_ref, w3_ref, w2_ref,
                  o_ref, *, eps, scale, n_head, n_kv_head, head_dim, batch, seqlen):
    """Whole transformer block on the flattened [B*S, D] token slab, all in VMEM."""
    dt = x_ref.dtype
    S = seqlen
    rep = n_head // n_kv_head
    q_width = n_head * head_dim            # 256
    k_width = n_kv_head * head_dim         # 128
    qk_width = q_width + k_width           # 384
    v_off = qk_width                       # 384
    rot_off = qk_width + k_width           # 512

    x = x_ref[...]                         # [B*S, D]
    xf = x.astype(jnp.float32)

    # ---- RMSNorm (attention_norm), f32 math ----
    xn = (xf * jax.lax.rsqrt(jnp.mean(xf * xf, axis=-1, keepdims=True) + eps)
          ).astype(dt) * anorm_ref[...]
    xn = xn.astype(dt)                     # MXU operands stay in model dtype

    # ---- one fused, lane-dense QKV (+ rotate-half columns) projection ----
    qkv = jnp.dot(xn, wfused_ref[...], preferred_element_type=jnp.float32)  # [B*S, 896]

    # ---- RoPE: single FMA over the 384 q|k lanes (cos/sin pre-broadcast per head) ----
    cos = cos_ref[...].astype(jnp.float32)           # [B*S, 384]
    sin = sin_ref[...].astype(jnp.float32)           # [B*S, 384]
    qk_rot = (qkv[:, :qk_width] * cos
              + qkv[:, rot_off:rot_off + qk_width] * sin).astype(dt)        # [B*S, 384]
    v_all = qkv[:, v_off:v_off + k_width].astype(dt)                        # [B*S, 128]

    # causal mask (fresh cache: attend only within the current call's tokens)
    row = jax.lax.broadcasted_iota(jnp.int32, (S, S), 0)
    col = jax.lax.broadcasted_iota(jnp.int32, (S, S), 1)
    causal = col <= row

    qk_dims = (((1,), (1,)), ((), ()))     # contract last axes: q @ k^T without transpose

    # ---- attention: tiny per-(batch, head) score/softmax/PV; heads packed lane-wise ----
    y_rows = []
    for b in range(batch):                 # static python loops (B, H small)
        r0 = b * S
        q_b = qk_rot[r0:r0 + S, :q_width]                   # [S, 256]
        k_b = qk_rot[r0:r0 + S, q_width:qk_width]           # [S, 128]
        v_b = v_all[r0:r0 + S, :]                           # [S, 128]
        head_cols = []
        for h in range(n_head):
            kvh = h // rep                                   # GQA: shared kv head
            q_h = q_b[:, h * head_dim:(h + 1) * head_dim]
            k_h = k_b[:, kvh * head_dim:(kvh + 1) * head_dim]
            v_h = v_b[:, kvh * head_dim:(kvh + 1) * head_dim]
            s = jax.lax.dot_general(q_h, k_h, qk_dims,
                                    preferred_element_type=jnp.float32) * scale
            s = jnp.where(causal, s, -1e30)
            s = s - jnp.max(s, axis=-1, keepdims=True)
            p = jnp.exp(s)
            p = p * pl.reciprocal(jnp.sum(p, axis=-1, keepdims=True), approx=True)
            head_cols.append(jnp.dot(p.astype(dt), v_h,
                                     preferred_element_type=jnp.float32))
        y_rows.append(jnp.concatenate(head_cols, axis=-1))   # [S, 256] lane-contiguous
    y_all = jnp.concatenate(y_rows, axis=0).astype(dt)       # [B*S, 256]

    # ---- single fused output projection + residual ----
    h_res = xf + jnp.dot(y_all, wo_ref[...], preferred_element_type=jnp.float32)

    # ---- RMSNorm (ffn_norm) + SwiGLU FFN + residual ----
    hn = (h_res * jax.lax.rsqrt(jnp.mean(h_res * h_res, axis=-1, keepdims=True) + eps)
          ).astype(dt) * fnorm_ref[...]
    hn = hn.astype(dt)
    a = jnp.dot(hn, w1_ref[...], preferred_element_type=jnp.float32)
    g = (a * jax.nn.sigmoid(a)) * jnp.dot(hn, w3_ref[...],
                                          preferred_element_type=jnp.float32)
    f = jnp.dot(g.astype(dt), w2_ref[...], preferred_element_type=jnp.float32)
    o_ref[...] = (h_res + f).astype(o_ref.dtype)


# --------------------------- one-time weight preparation ---------------------------
def _rotate_half_cols(w, n_heads):
    # xn @ w gives per-head [c1 | c2]; xn @ w_rot gives per-head [-c2 | c1]
    d_in = w.shape[0]
    wh = w.reshape(d_in, n_heads, HEAD_DIM)
    half = HEAD_DIM // 2
    wr = jnp.concatenate([-wh[..., half:], wh[..., :half]], axis=-1)
    return wr.reshape(d_in, n_heads * HEAD_DIM)


def prepare_weights(params):
    """One-time re-layout (call once, outside the per-token forward)."""
    wqkv_t = params["wqkv_t"]                      # [D, 512]  (stored [in, out])
    wq = wqkv_t[:, :DIM]                           # [D, 256]
    wk = wqkv_t[:, DIM:DIM + KV_SIZE]              # [D, 128]
    wv = wqkv_t[:, DIM + KV_SIZE:]                 # [D, 128]
    w_fused = jnp.concatenate(
        [wq, wk, wv, _rotate_half_cols(wq, N_HEAD), _rotate_half_cols(wk, N_KV_HEAD)],
        axis=1)                                    # [D, 896], 128-aligned column groups
    return {
        "w_fused": w_fused,
        "wo_t": params["wo_t"],
        "w1_t": params["w1_t"], "w3_t": params["w3_t"], "w2_t": params["w2_t"],
        "attention_norm": params["attention_norm"].reshape(1, DIM),
        "ffn_norm": params["ffn_norm"].reshape(1, DIM),
    }


# ------------------------------ per-call RoPE tables ------------------------------
def _rope_tables(offsets, seqlen):
    """Lane-dense [B*S, 384] cos/sin, pre-broadcast over (n_head + n_kv_head) heads."""
    pos = (offsets[:, None] + jnp.arange(seqlen)[None, :]).astype(jnp.float32)  # [B,S]
    inv_freq = 1.0 / (ROPE_BASE ** (jnp.arange(0, HEAD_DIM, 2, dtype=jnp.float32)
                                    / HEAD_DIM))
    ang = pos.reshape(-1)[:, None] * inv_freq[None, :]          # [B*S, Dh/2]
    cos = jnp.concatenate([jnp.cos(ang), jnp.cos(ang)], axis=-1)  # [B*S, 64]
    sin = jnp.concatenate([jnp.sin(ang), jnp.sin(ang)], axis=-1)  # [B*S, 64]
    reps = N_HEAD + N_KV_HEAD
    return jnp.tile(cos, (1, reps)), jnp.tile(sin, (1, reps))     # [B*S, 384]


# ----------------------------------- forward --------------------------------------
def transformer_block_forward(prepped, x, offsets,
                              kv_append_indptr=None, kv_page_indices=None,
                              kv_page_indptr=None, kv_page_lastlen=None):
    """h = x + Attn(RMSNorm(x));  out = h + FFN(RMSNorm(h)) — one fused Pallas call."""
    # TODO(synk): paged-KV-cache update / flashinfer attn_decode path (page-table
    # args) has no clean Pallas equivalent here; args accepted but unused.
    B, S, D = x.shape
    BS = B * S
    cos_tab, sin_tab = _rope_tables(offsets, S)
    x2 = x.reshape(BS, D)

    kernel = functools.partial(
        _block_kernel, eps=NORM_EPS, scale=1.0 / float(HEAD_DIM) ** 0.5,
        n_head=N_HEAD, n_kv_head=N_KV_HEAD, head_dim=HEAD_DIM, batch=B, seqlen=S)

    out2 = pl.pallas_call(
        kernel,
        out_shape=jax.ShapeDtypeStruct((BS, D), x.dtype),
        # no grid: single invocation, whole arrays resident in VMEM (no per-step
        # pipeline overhead, no double-buffered weight copies at these sizes)
        compiler_params=pltpu.CompilerParams(vmem_limit_bytes=32 * 1024 * 1024),
    )(x2, cos_tab, sin_tab,
      prepped["attention_norm"], prepped["w_fused"], prepped["wo_t"],
      prepped["ffn_norm"], prepped["w1_t"], prepped["w3_t"], prepped["w2_t"])
    return out2.reshape(B, S, D)


# --------------------------- pure-JAX reference ---------------------------------
def _apply_rope_ref(q, k, offsets, base=ROPE_BASE):
    B, S, _, Dh = q.shape
    pos = (offsets[:, None] + jnp.arange(S)[None, :]).astype(jnp.float32)
    inv_freq = 1.0 / (base ** (jnp.arange(0, Dh, 2, dtype=jnp.float32) / Dh))
    ang = pos[..., None] * inv_freq
    cos = jnp.cos(ang)[:, :, None, :]
    sin = jnp.sin(ang)[:, :, None, :]

    def rot(t):
        t1, t2 = t[..., :Dh // 2], t[..., Dh // 2:]
        return jnp.concatenate([t1 * cos - t2 * sin, t2 * cos + t1 * sin], axis=-1)

    return rot(q), rot(k)


def _reference(params, x, offsets):
    B, S, D = x.shape
    M = B * S
    x2 = x.reshape(M, D)

    def rms(z, w):
        zf = z.astype(jnp.float32)
        n = zf * jax.lax.rsqrt(jnp.mean(zf * zf, axis=-1, keepdims=True) + NORM_EPS)
        return n.astype(z.dtype) * w

    xn = rms(x2, params["attention_norm"])
    qkv = xn @ params["wqkv_t"]
    q = qkv[:, :DIM].reshape(B, S, N_HEAD, HEAD_DIM)
    k = qkv[:, DIM:DIM + KV_SIZE].reshape(B, S, N_KV_HEAD, HEAD_DIM)
    v = qkv[:, DIM + KV_SIZE:].reshape(B, S, N_KV_HEAD, HEAD_DIM)
    q, k = _apply_rope_ref(q, k, offsets)
    q = q.transpose(0, 2, 1, 3)
    k = jnp.repeat(k.transpose(0, 2, 1, 3), N_HEAD // N_KV_HEAD, axis=1)
    v = jnp.repeat(v.transpose(0, 2, 1, 3), N_HEAD // N_KV_HEAD, axis=1)
    s = jnp.einsum("bhqd,bhkd->bhqk", q, k) / (HEAD_DIM ** 0.5)
    mask = jnp.tril(jnp.ones((S, S), dtype=bool))
    s = jnp.where(mask[None, None], s, -1e30)
    p = jax.nn.softmax(s, axis=-1)
    y = jnp.einsum("bhqk,bhkd->bhqd", p, v)
    y = y.transpose(0, 2, 1, 3).reshape(M, D) @ params["wo_t"]
    h = x2 + y
    hn = rms(h, params["ffn_norm"])
    a = hn @ params["w1_t"]
    f = ((a * jax.nn.sigmoid(a)) * (hn @ params["w3_t"])) @ params["w2_t"]
    return (h + f).reshape(B, S, D)


# ----------------------------------- main ----------------------------------------
if __name__ == "__main__":
    key = jax.random.PRNGKey(0)
    ks = jax.random.split(key, 8)
    scale_w = 0.02
    params = {
        # weights stored transposed ([in, out]) relative to nn.Linear's [out, in]
        "wqkv_t": scale_w * jax.random.normal(ks[0], (DIM, TOTAL_HEAD_DIM), jnp.float32),
        "wo_t":   scale_w * jax.random.normal(ks[1], (DIM, DIM), jnp.float32),
        "w1_t":   scale_w * jax.random.normal(ks[2], (DIM, INTERMEDIATE), jnp.float32),
        "w3_t":   scale_w * jax.random.normal(ks[3], (DIM, INTERMEDIATE), jnp.float32),
        "w2_t":   scale_w * jax.random.normal(ks[4], (INTERMEDIATE, DIM), jnp.float32),
        "attention_norm": 1.0 + 0.1 * jax.random.normal(ks[6], (DIM,), jnp.float32),
        "ffn_norm":       1.0 + 0.1 * jax.random.normal(ks[7], (DIM,), jnp.float32),
    }

    B, S = 2, 8
    x = jax.random.normal(ks[5], (B, S, DIM), jnp.float32)
    offsets = jnp.array([0, 3], dtype=jnp.int32)
    # paged-KV page-table args (accepted for signature parity; unused — see TODO above)
    kv_append_indptr = jnp.arange(B + 1, dtype=jnp.int32) * S
    kv_page_indices = jnp.arange(B, dtype=jnp.int32)
    kv_page_indptr = jnp.arange(B + 1, dtype=jnp.int32)
    kv_page_lastlen = jnp.full((B,), S, jnp.int32)

    prepped = prepare_weights(params)          # one-time weight re-layout
    out = transformer_block_forward(prepped, x, offsets, kv_append_indptr,
                                    kv_page_indices, kv_page_indptr, kv_page_lastlen)
    out = jax.block_until_ready(out)

    ref = jax.block_until_ready(_reference(params, x, offsets))
    assert out.shape == (B, S, DIM)
    assert jnp.allclose(out, ref, rtol=2e-2, atol=2e-2), "mismatch vs reference"

    print("KERNEL_OK")
</pallas_src>

<mosaic_0001>
module attributes {stable_mosaic.version = 11 : i64} {
  func.func @_block_kernel(%arg0: memref<16x256xf32, #tpu.memory_space<vmem>>, %arg1: memref<16x384xf32, #tpu.memory_space<vmem>>, %arg2: memref<16x384xf32, #tpu.memory_space<vmem>>, %arg3: memref<1x256xf32, #tpu.memory_space<vmem>>, %arg4: memref<256x896xf32, #tpu.memory_space<vmem>>, %arg5: memref<256x256xf32, #tpu.memory_space<vmem>>, %arg6: memref<1x256xf32, #tpu.memory_space<vmem>>, %arg7: memref<256x512xf32, #tpu.memory_space<vmem>>, %arg8: memref<256x512xf32, #tpu.memory_space<vmem>>, %arg9: memref<512x256xf32, #tpu.memory_space<vmem>>, %arg10: memref<16x256xf32, #tpu.memory_space<vmem>>) attributes {dimension_semantics = [], scalar_prefetch = 0 : i64, scratch_operands = 0 : i64, tpu.core_type = #tpu.core_type<tc>} {
    %c0 = arith.constant 0 : index
    %c0_0 = arith.constant 0 : index
    %0 = vector.load %arg0[%c0, %c0_0] : memref<16x256xf32, #tpu.memory_space<vmem>>, vector<16x256xf32>
    %1 = arith.mulf %0, %0 : vector<16x256xf32>
    %cst = arith.constant dense<0.000000e+00> : vector<16xf32>
    %2 = vector.multi_reduction <add>, %1, %cst [1] : vector<16x256xf32> to vector<16xf32>
    %3 = vector.shape_cast %2 : vector<16xf32> to vector<16x1xf32>
    %cst_1 = arith.constant 2.560000e+02 : f32
    %4 = vector.broadcast %cst_1 : f32 to vector<16x1xf32>
    %5 = arith.divf %3, %4 : vector<16x1xf32>
    %cst_2 = arith.constant 9.99999974E-6 : f32
    %6 = vector.broadcast %cst_2 : f32 to vector<16x1xf32>
    %7 = arith.addf %5, %6 : vector<16x1xf32>
    %8 = math.rsqrt %7 : vector<16x1xf32>
    %9 = vector.broadcast %8 : vector<16x1xf32> to vector<16x256xf32>
    %10 = arith.mulf %0, %9 : vector<16x256xf32>
    %c0_3 = arith.constant 0 : index
    %c0_4 = arith.constant 0 : index
    %11 = vector.load %arg3[%c0_3, %c0_4] : memref<1x256xf32, #tpu.memory_space<vmem>>, vector<1x256xf32>
    %12 = vector.broadcast %11 : vector<1x256xf32> to vector<16x256xf32>
    %13 = arith.mulf %10, %12 : vector<16x256xf32>
    %c0_5 = arith.constant 0 : index
    %c0_6 = arith.constant 0 : index
    %14 = vector.load %arg4[%c0_5, %c0_6] : memref<256x896xf32, #tpu.memory_space<vmem>>, vector<256x896xf32>
    %cst_7 = arith.constant dense<0.000000e+00> : vector<16x896xf32>
    %15 = tpu.matmul %13, %14, %cst_7 {dimension_numbers = #tpu.dot_dimension_numbers<[1], [0], [0], [1], [0, 0, 1, 1], [], []>} : vector<16x256xf32>, vector<256x896xf32>, vector<16x896xf32> -> vector<16x896xf32>
    %c0_8 = arith.constant 0 : index
    %c0_9 = arith.constant 0 : index
    %16 = vector.load %arg1[%c0_8, %c0_9] : memref<16x384xf32, #tpu.memory_space<vmem>>, vector<16x384xf32>
    %c0_10 = arith.constant 0 : index
    %c0_11 = arith.constant 0 : index
    %17 = vector.load %arg2[%c0_10, %c0_11] : memref<16x384xf32, #tpu.memory_space<vmem>>, vector<16x384xf32>
    %18 = vector.extract_strided_slice %15 {offsets = [0, 0], sizes = [16, 384], strides = [1, 1]} : vector<16x896xf32> to vector<16x384xf32>
    %19 = arith.mulf %18, %16 : vector<16x384xf32>
    %20 = vector.extract_strided_slice %15 {offsets = [0, 512], sizes = [16, 384], strides = [1, 1]} : vector<16x896xf32> to vector<16x384xf32>
    %21 = arith.mulf %20, %17 : vector<16x384xf32>
    %22 = arith.addf %19, %21 : vector<16x384xf32>
    %23 = vector.extract_strided_slice %15 {offsets = [0, 384], sizes = [16, 128], strides = [1, 1]} : vector<16x896xf32> to vector<16x128xf32>
    %24 = tpu.iota {dimensions = array<i32: 0>} : vector<8x8xi32>
    %25 = tpu.iota {dimensions = array<i32: 1>} : vector<8x8xi32>
    %26 = arith.cmpi sle, %25, %24 : vector<8x8xi32>
    %27 = vector.extract_strided_slice %22 {offsets = [0, 0], sizes = [8, 256], strides = [1, 1]} : vector<16x384xf32> to vector<8x256xf32>
    %28 = vector.extract_strided_slice %22 {offsets = [0, 256], sizes = [8, 128], strides = [1, 1]} : vector<16x384xf32> to vector<8x128xf32>
    %29 = vector.extract_strided_slice %23 {offsets = [0, 0], sizes = [8, 128], strides = [1, 1]} : vector<16x128xf32> to vector<8x128xf32>
    %30 = vector.extract_strided_slice %27 {offsets = [0, 0], sizes = [8, 64], strides = [1, 1]} : vector<8x256xf32> to vector<8x64xf32>
    %31 = vector.extract_strided_slice %28 {offsets = [0, 0], sizes = [8, 64], strides = [1, 1]} : vector<8x128xf32> to vector<8x64xf32>
    %32 = vector.extract_strided_slice %29 {offsets = [0, 0], sizes = [8, 64], strides = [1, 1]} : vector<8x128xf32> to vector<8x64xf32>
    %cst_12 = arith.constant dense<0.000000e+00> : vector<8x8xf32>
    %33 = tpu.matmul %30, %31, %cst_12 {dimension_numbers = #tpu.dot_dimension_numbers<[1], [1], [0], [0], [0, 0, 1, 0], [], []>} : vector<8x64xf32>, vector<8x64xf32>, vector<8x8xf32> -> vector<8x8xf32>
    %cst_13 = arith.constant 1.250000e-01 : f32
    %34 = vector.broadcast %cst_13 : f32 to vector<8x8xf32>
    %35 = arith.mulf %33, %34 : vector<8x8xf32>
    %cst_14 = arith.constant -1.000000e+30 : f32
    %36 = vector.broadcast %cst_14 : f32 to vector<8x8xf32>
    %37 = arith.select %26, %35, %36 : vector<8x8xi1>, vector<8x8xf32>
    %cst_15 = arith.constant dense<0xFF800000> : vector<8xf32>
    %38 = vector.multi_reduction <maximumf>, %37, %cst_15 [1] : vector<8x8xf32> to vector<8xf32>
    %39 = vector.shape_cast %38 : vector<8xf32> to vector<8x1xf32>
    %40 = vector.broadcast %39 : vector<8x1xf32> to vector<8x8xf32>
    %41 = arith.subf %37, %40 : vector<8x8xf32>
    %42 = math.exp %41 : vector<8x8xf32>
    %cst_16 = arith.constant dense<0.000000e+00> : vector<8xf32>
    %43 = vector.multi_reduction <add>, %42, %cst_16 [1] : vector<8x8xf32> to vector<8xf32>
    %44 = vector.shape_cast %43 : vector<8xf32> to vector<8x1xf32>
    %45 = tpu.reciprocal %44 {approx = true} : vector<8x1xf32> -> vector<8x1xf32>
    %46 = vector.broadcast %45 : vector<8x1xf32> to vector<8x8xf32>
    %47 = arith.mulf %42, %46 : vector<8x8xf32>
    %cst_17 = arith.constant dense<0.000000e+00> : vector<8x64xf32>
    %48 = tpu.matmul %47, %32, %cst_17 {dimension_numbers = #tpu.dot_dimension_numbers<[1], [0], [0], [1], [0, 0, 1, 1], [], []>} : vector<8x8xf32>, vector<8x64xf32>, vector<8x64xf32> -> vector<8x64xf32>
    %49 = vector.extract_strided_slice %27 {offsets = [0, 64], sizes = [8, 64], strides = [1, 1]} : vector<8x256xf32> to vector<8x64xf32>
    %50 = vector.extract_strided_slice %28 {offsets = [0, 0], sizes = [8, 64], strides = [1, 1]} : vector<8x128xf32> to vector<8x64xf32>
    %51 = vector.extract_strided_slice %29 {offsets = [0, 0], sizes = [8, 64], strides = [1, 1]} : vector<8x128xf32> to vector<8x64xf32>
    %cst_18 = arith.constant dense<0.000000e+00> : vector<8x8xf32>
    %52 = tpu.matmul %49, %50, %cst_18 {dimension_numbers = #tpu.dot_dimension_numbers<[1], [1], [0], [0], [0, 0, 1, 0], [], []>} : vector<8x64xf32>, vector<8x64xf32>, vector<8x8xf32> -> vector<8x8xf32>
    %cst_19 = arith.constant 1.250000e-01 : f32
    %53 = vector.broadcast %cst_19 : f32 to vector<8x8xf32>
    %54 = arith.mulf %52, %53 : vector<8x8xf32>
    %cst_20 = arith.constant -1.000000e+30 : f32
    %55 = vector.broadcast %cst_20 : f32 to vector<8x8xf32>
    %56 = arith.select %26, %54, %55 : vector<8x8xi1>, vector<8x8xf32>
    %cst_21 = arith.constant dense<0xFF800000> : vector<8xf32>
    %57 = vector.multi_reduction <maximumf>, %56, %cst_21 [1] : vector<8x8xf32> to vector<8xf32>
    %58 = vector.shape_cast %57 : vector<8xf32> to vector<8x1xf32>
    %59 = vector.broadcast %58 : vector<8x1xf32> to vector<8x8xf32>
    %60 = arith.subf %56, %59 : vector<8x8xf32>
    %61 = math.exp %60 : vector<8x8xf32>
    %cst_22 = arith.constant dense<0.000000e+00> : vector<8xf32>
    %62 = vector.multi_reduction <add>, %61, %cst_22 [1] : vector<8x8xf32> to vector<8xf32>
    %63 = vector.shape_cast %62 : vector<8xf32> to vector<8x1xf32>
    %64 = tpu.reciprocal %63 {approx = true} : vector<8x1xf32> -> vector<8x1xf32>
    %65 = vector.broadcast %64 : vector<8x1xf32> to vector<8x8xf32>
    %66 = arith.mulf %61, %65 : vector<8x8xf32>
    %cst_23 = arith.constant dense<0.000000e+00> : vector<8x64xf32>
    %67 = tpu.matmul %66, %51, %cst_23 {dimension_numbers = #tpu.dot_dimension_numbers<[1], [0], [0], [1], [0, 0, 1, 1], [], []>} : vector<8x8xf32>, vector<8x64xf32>, vector<8x64xf32> -> vector<8x64xf32>
    %68 = vector.extract_strided_slice %27 {offsets = [0, 128], sizes = [8, 64], strides = [1, 1]} : vector<8x256xf32> to vector<8x64xf32>
    %69 = vector.extract_strided_slice %28 {offsets = [0, 64], sizes = [8, 64], strides = [1, 1]} : vector<8x128xf32> to vector<8x64xf32>
    %70 = vector.extract_strided_slice %29 {offsets = [0, 64], sizes = [8, 64], strides = [1, 1]} : vector<8x128xf32> to vector<8x64xf32>
    %cst_24 = arith.constant dense<0.000000e+00> : vector<8x8xf32>
    %71 = tpu.matmul %68, %69, %cst_24 {dimension_numbers = #tpu.dot_dimension_numbers<[1], [1], [0], [0], [0, 0, 1, 0], [], []>} : vector<8x64xf32>, vector<8x64xf32>, vector<8x8xf32> -> vector<8x8xf32>
    %cst_25 = arith.constant 1.250000e-01 : f32
    %72 = vector.broadcast %cst_25 : f32 to vector<8x8xf32>
    %73 = arith.mulf %71, %72 : vector<8x8xf32>
    %cst_26 = arith.constant -1.000000e+30 : f32
    %74 = vector.broadcast %cst_26 : f32 to vector<8x8xf32>
    %75 = arith.select %26, %73, %74 : vector<8x8xi1>, vector<8x8xf32>
    %cst_27 = arith.constant dense<0xFF800000> : vector<8xf32>
    %76 = vector.multi_reduction <maximumf>, %75, %cst_27 [1] : vector<8x8xf32> to vector<8xf32>
    %77 = vector.shape_cast %76 : vector<8xf32> to vector<8x1xf32>
    %78 = vector.broadcast %77 : vector<8x1xf32> to vector<8x8xf32>
    %79 = arith.subf %75, %78 : vector<8x8xf32>
    %80 = math.exp %79 : vector<8x8xf32>
    %cst_28 = arith.constant dense<0.000000e+00> : vector<8xf32>
    %81 = vector.multi_reduction <add>, %80, %cst_28 [1] : vector<8x8xf32> to vector<8xf32>
    %82 = vector.shape_cast %81 : vector<8xf32> to vector<8x1xf32>
    %83 = tpu.reciprocal %82 {approx = true} : vector<8x1xf32> -> vector<8x1xf32>
    %84 = vector.broadcast %83 : vector<8x1xf32> to vector<8x8xf32>
    %85 = arith.mulf %80, %84 : vector<8x8xf32>
    %cst_29 = arith.constant dense<0.000000e+00> : vector<8x64xf32>
    %86 = tpu.matmul %85, %70, %cst_29 {dimension_numbers = #tpu.dot_dimension_numbers<[1], [0], [0], [1], [0, 0, 1, 1], [], []>} : vector<8x8xf32>, vector<8x64xf32>, vector<8x64xf32> -> vector<8x64xf32>
    %87 = vector.extract_strided_slice %27 {offsets = [0, 192], sizes = [8, 64], strides = [1, 1]} : vector<8x256xf32> to vector<8x64xf32>
    %88 = vector.extract_strided_slice %28 {offsets = [0, 64], sizes = [8, 64], strides = [1, 1]} : vector<8x128xf32> to vector<8x64xf32>
    %89 = vector.extract_strided_slice %29 {offsets = [0, 64], sizes = [8, 64], strides = [1, 1]} : vector<8x128xf32> to vector<8x64xf32>
    %cst_30 = arith.constant dense<0.000000e+00> : vector<8x8xf32>
    %90 = tpu.matmul %87, %88, %cst_30 {dimension_numbers = #tpu.dot_dimension_numbers<[1], [1], [0], [0], [0, 0, 1, 0], [], []>} : vector<8x64xf32>, vector<8x64xf32>, vector<8x8xf32> -> vector<8x8xf32>
    %cst_31 = arith.constant 1.250000e-01 : f32
    %91 = vector.broadcast %cst_31 : f32 to vector<8x8xf32>
    %92 = arith.mulf %90, %91 : vector<8x8xf32>
    %cst_32 = arith.constant -1.000000e+30 : f32
    %93 = vector.broadcast %cst_32 : f32 to vector<8x8xf32>
    %94 = arith.select %26, %92, %93 : vector<8x8xi1>, vector<8x8xf32>
    %cst_33 = arith.constant dense<0xFF800000> : vector<8xf32>
    %95 = vector.multi_reduction <maximumf>, %94, %cst_33 [1] : vector<8x8xf32> to vector<8xf32>
    %96 = vector.shape_cast %95 : vector<8xf32> to vector<8x1xf32>
    %97 = vector.broadcast %96 : vector<8x1xf32> to vector<8x8xf32>
    %98 = arith.subf %94, %97 : vector<8x8xf32>
    %99 = math.exp %98 : vector<8x8xf32>
    %cst_34 = arith.constant dense<0.000000e+00> : vector<8xf32>
    %100 = vector.multi_reduction <add>, %99, %cst_34 [1] : vector<8x8xf32> to vector<8xf32>
    %101 = vector.shape_cast %100 : vector<8xf32> to vector<8x1xf32>
    %102 = tpu.reciprocal %101 {approx = true} : vector<8x1xf32> -> vector<8x1xf32>
    %103 = vector.broadcast %102 : vector<8x1xf32> to vector<8x8xf32>
    %104 = arith.mulf %99, %103 : vector<8x8xf32>
    %cst_35 = arith.constant dense<0.000000e+00> : vector<8x64xf32>
    %105 = tpu.matmul %104, %89, %cst_35 {dimension_numbers = #tpu.dot_dimension_numbers<[1], [0], [0], [1], [0, 0, 1, 1], [], []>} : vector<8x8xf32>, vector<8x64xf32>, vector<8x64xf32> -> vector<8x64xf32>
    %106 = tpu.concatenate %48, %67, %86, %105 in 1 : vector<8x64xf32>, vector<8x64xf32>, vector<8x64xf32>, vector<8x64xf32> -> vector<8x256xf32>
    %107 = vector.extract_strided_slice %22 {offsets = [8, 0], sizes = [8, 256], strides = [1, 1]} : vector<16x384xf32> to vector<8x256xf32>
    %108 = vector.extract_strided_slice %22 {offsets = [8, 256], sizes = [8, 128], strides = [1, 1]} : vector<16x384xf32> to vector<8x128xf32>
    %109 = vector.extract_strided_slice %23 {offsets = [8, 0], sizes = [8, 128], strides = [1, 1]} : vector<16x128xf32> to vector<8x128xf32>
    %110 = vector.extract_strided_slice %107 {offsets = [0, 0], sizes = [8, 64], strides = [1, 1]} : vector<8x256xf32> to vector<8x64xf32>
    %111 = vector.extract_strided_slice %108 {offsets = [0, 0], sizes = [8, 64], strides = [1, 1]} : vector<8x128xf32> to vector<8x64xf32>
    %112 = vector.extract_strided_slice %109 {offsets = [0, 0], sizes = [8, 64], strides = [1, 1]} : vector<8x128xf32> to vector<8x64xf32>
    %cst_36 = arith.constant dense<0.000000e+00> : vector<8x8xf32>
    %113 = tpu.matmul %110, %111, %cst_36 {dimension_numbers = #tpu.dot_dimension_numbers<[1], [1], [0], [0], [0, 0, 1, 0], [], []>} : vector<8x64xf32>, vector<8x64xf32>, vector<8x8xf32> -> vector<8x8xf32>
    %cst_37 = arith.constant 1.250000e-01 : f32
    %114 = vector.broadcast %cst_37 : f32 to vector<8x8xf32>
    %115 = arith.mulf %113, %114 : vector<8x8xf32>
    %cst_38 = arith.constant -1.000000e+30 : f32
    %116 = vector.broadcast %cst_38 : f32 to vector<8x8xf32>
    %117 = arith.select %26, %115, %116 : vector<8x8xi1>, vector<8x8xf32>
    %cst_39 = arith.constant dense<0xFF800000> : vector<8xf32>
    %118 = vector.multi_reduction <maximumf>, %117, %cst_39 [1] : vector<8x8xf32> to vector<8xf32>
    %119 = vector.shape_cast %118 : vector<8xf32> to vector<8x1xf32>
    %120 = vector.broadcast %119 : vector<8x1xf32> to vector<8x8xf32>
    %121 = arith.subf %117, %120 : vector<8x8xf32>
    %122 = math.exp %121 : vector<8x8xf32>
    %cst_40 = arith.constant dense<0.000000e+00> : vector<8xf32>
    %123 = vector.multi_reduction <add>, %122, %cst_40 [1] : vector<8x8xf32> to vector<8xf32>
    %124 = vector.shape_cast %123 : vector<8xf32> to vector<8x1xf32>
    %125 = tpu.reciprocal %124 {approx = true} : vector<8x1xf32> -> vector<8x1xf32>
    %126 = vector.broadcast %125 : vector<8x1xf32> to vector<8x8xf32>
    %127 = arith.mulf %122, %126 : vector<8x8xf32>
    %cst_41 = arith.constant dense<0.000000e+00> : vector<8x64xf32>
    %128 = tpu.matmul %127, %112, %cst_41 {dimension_numbers = #tpu.dot_dimension_numbers<[1], [0], [0], [1], [0, 0, 1, 1], [], []>} : vector<8x8xf32>, vector<8x64xf32>, vector<8x64xf32> -> vector<8x64xf32>
    %129 = vector.extract_strided_slice %107 {offsets = [0, 64], sizes = [8, 64], strides = [1, 1]} : vector<8x256xf32> to vector<8x64xf32>
    %130 = vector.extract_strided_slice %108 {offsets = [0, 0], sizes = [8, 64], strides = [1, 1]} : vector<8x128xf32> to vector<8x64xf32>
    %131 = vector.extract_strided_slice %109 {offsets = [0, 0], sizes = [8, 64], strides = [1, 1]} : vector<8x128xf32> to vector<8x64xf32>
    %cst_42 = arith.constant dense<0.000000e+00> : vector<8x8xf32>
    %132 = tpu.matmul %129, %130, %cst_42 {dimension_numbers = #tpu.dot_dimension_numbers<[1], [1], [0], [0], [0, 0, 1, 0], [], []>} : vector<8x64xf32>, vector<8x64xf32>, vector<8x8xf32> -> vector<8x8xf32>
    %cst_43 = arith.constant 1.250000e-01 : f32
    %133 = vector.broadcast %cst_43 : f32 to vector<8x8xf32>
    %134 = arith.mulf %132, %133 : vector<8x8xf32>
    %cst_44 = arith.constant -1.000000e+30 : f32
    %135 = vector.broadcast %cst_44 : f32 to vector<8x8xf32>
    %136 = arith.select %26, %134, %135 : vector<8x8xi1>, vector<8x8xf32>
    %cst_45 = arith.constant dense<0xFF800000> : vector<8xf32>
    %137 = vector.multi_reduction <maximumf>, %136, %cst_45 [1] : vector<8x8xf32> to vector<8xf32>
    %138 = vector.shape_cast %137 : vector<8xf32> to vector<8x1xf32>
    %139 = vector.broadcast %138 : vector<8x1xf32> to vector<8x8xf32>
    %140 = arith.subf %136, %139 : vector<8x8xf32>
    %141 = math.exp %140 : vector<8x8xf32>
    %cst_46 = arith.constant dense<0.000000e+00> : vector<8xf32>
    %142 = vector.multi_reduction <add>, %141, %cst_46 [1] : vector<8x8xf32> to vector<8xf32>
    %143 = vector.shape_cast %142 : vector<8xf32> to vector<8x1xf32>
    %144 = tpu.reciprocal %143 {approx = true} : vector<8x1xf32> -> vector<8x1xf32>
    %145 = vector.broadcast %144 : vector<8x1xf32> to vector<8x8xf32>
    %146 = arith.mulf %141, %145 : vector<8x8xf32>
    %cst_47 = arith.constant dense<0.000000e+00> : vector<8x64xf32>
    %147 = tpu.matmul %146, %131, %cst_47 {dimension_numbers = #tpu.dot_dimension_numbers<[1], [0], [0], [1], [0, 0, 1, 1], [], []>} : vector<8x8xf32>, vector<8x64xf32>, vector<8x64xf32> -> vector<8x64xf32>
    %148 = vector.extract_strided_slice %107 {offsets = [0, 128], sizes = [8, 64], strides = [1, 1]} : vector<8x256xf32> to vector<8x64xf32>
    %149 = vector.extract_strided_slice %108 {offsets = [0, 64], sizes = [8, 64], strides = [1, 1]} : vector<8x128xf32> to vector<8x64xf32>
    %150 = vector.extract_strided_slice %109 {offsets = [0, 64], sizes = [8, 64], strides = [1, 1]} : vector<8x128xf32> to vector<8x64xf32>
    %cst_48 = arith.constant dense<0.000000e+00> : vector<8x8xf32>
    %151 = tpu.matmul %148, %149, %cst_48 {dimension_numbers = #tpu.dot_dimension_numbers<[1], [1], [0], [0], [0, 0, 1, 0], [], []>} : vector<8x64xf32>, vector<8x64xf32>, vector<8x8xf32> -> vector<8x8xf32>
    %cst_49 = arith.constant 1.250000e-01 : f32
    %152 = vector.broadcast %cst_49 : f32 to vector<8x8xf32>
    %153 = arith.mulf %151, %152 : vector<8x8xf32>
    %cst_50 = arith.constant -1.000000e+30 : f32
    %154 = vector.broadcast %cst_50 : f32 to vector<8x8xf32>
    %155 = arith.select %26, %153, %154 : vector<8x8xi1>, vector<8x8xf32>
    %cst_51 = arith.constant dense<0xFF800000> : vector<8xf32>
    %156 = vector.multi_reduction <maximumf>, %155, %cst_51 [1] : vector<8x8xf32> to vector<8xf32>
    %157 = vector.shape_cast %156 : vector<8xf32> to vector<8x1xf32>
    %158 = vector.broadcast %157 : vector<8x1xf32> to vector<8x8xf32>
    %159 = arith.subf %155, %158 : vector<8x8xf32>
    %160 = math.exp %159 : vector<8x8xf32>
    %cst_52 = arith.constant dense<0.000000e+00> : vector<8xf32>
    %161 = vector.multi_reduction <add>, %160, %cst_52 [1] : vector<8x8xf32> to vector<8xf32>
    %162 = vector.shape_cast %161 : vector<8xf32> to vector<8x1xf32>
    %163 = tpu.reciprocal %162 {approx = true} : vector<8x1xf32> -> vector<8x1xf32>
    %164 = vector.broadcast %163 : vector<8x1xf32> to vector<8x8xf32>
    %165 = arith.mulf %160, %164 : vector<8x8xf32>
    %cst_53 = arith.constant dense<0.000000e+00> : vector<8x64xf32>
    %166 = tpu.matmul %165, %150, %cst_53 {dimension_numbers = #tpu.dot_dimension_numbers<[1], [0], [0], [1], [0, 0, 1, 1], [], []>} : vector<8x8xf32>, vector<8x64xf32>, vector<8x64xf32> -> vector<8x64xf32>
    %167 = vector.extract_strided_slice %107 {offsets = [0, 192], sizes = [8, 64], strides = [1, 1]} : vector<8x256xf32> to vector<8x64xf32>
    %168 = vector.extract_strided_slice %108 {offsets = [0, 64], sizes = [8, 64], strides = [1, 1]} : vector<8x128xf32> to vector<8x64xf32>
    %169 = vector.extract_strided_slice %109 {offsets = [0, 64], sizes = [8, 64], strides = [1, 1]} : vector<8x128xf32> to vector<8x64xf32>
    %cst_54 = arith.constant dense<0.000000e+00> : vector<8x8xf32>
    %170 = tpu.matmul %167, %168, %cst_54 {dimension_numbers = #tpu.dot_dimension_numbers<[1], [1], [0], [0], [0, 0, 1, 0], [], []>} : vector<8x64xf32>, vector<8x64xf32>, vector<8x8xf32> -> vector<8x8xf32>
    %cst_55 = arith.constant 1.250000e-01 : f32
    %171 = vector.broadcast %cst_55 : f32 to vector<8x8xf32>
    %172 = arith.mulf %170, %171 : vector<8x8xf32>
    %cst_56 = arith.constant -1.000000e+30 : f32
    %173 = vector.broadcast %cst_56 : f32 to vector<8x8xf32>
    %174 = arith.select %26, %172, %173 : vector<8x8xi1>, vector<8x8xf32>
    %cst_57 = arith.constant dense<0xFF800000> : vector<8xf32>
    %175 = vector.multi_reduction <maximumf>, %174, %cst_57 [1] : vector<8x8xf32> to vector<8xf32>
    %176 = vector.shape_cast %175 : vector<8xf32> to vector<8x1xf32>
    %177 = vector.broadcast %176 : vector<8x1xf32> to vector<8x8xf32>
    %178 = arith.subf %174, %177 : vector<8x8xf32>
    %179 = math.exp %178 : vector<8x8xf32>
    %cst_58 = arith.constant dense<0.000000e+00> : vector<8xf32>
    %180 = vector.multi_reduction <add>, %179, %cst_58 [1] : vector<8x8xf32> to vector<8xf32>
    %181 = vector.shape_cast %180 : vector<8xf32> to vector<8x1xf32>
    %182 = tpu.reciprocal %181 {approx = true} : vector<8x1xf32> -> vector<8x1xf32>
    %183 = vector.broadcast %182 : vector<8x1xf32> to vector<8x8xf32>
    %184 = arith.mulf %179, %183 : vector<8x8xf32>
    %cst_59 = arith.constant dense<0.000000e+00> : vector<8x64xf32>
    %185 = tpu.matmul %184, %169, %cst_59 {dimension_numbers = #tpu.dot_dimension_numbers<[1], [0], [0], [1], [0, 0, 1, 1], [], []>} : vector<8x8xf32>, vector<8x64xf32>, vector<8x64xf32> -> vector<8x64xf32>
    %186 = tpu.concatenate %128, %147, %166, %185 in 1 : vector<8x64xf32>, vector<8x64xf32>, vector<8x64xf32>, vector<8x64xf32> -> vector<8x256xf32>
    %187 = tpu.concatenate %106, %186 in 0 : vector<8x256xf32>, vector<8x256xf32> -> vector<16x256xf32>
    %c0_60 = arith.constant 0 : index
    %c0_61 = arith.constant 0 : index
    %188 = vector.load %arg5[%c0_60, %c0_61] : memref<256x256xf32, #tpu.memory_space<vmem>>, vector<256x256xf32>
    %cst_62 = arith.constant dense<0.000000e+00> : vector<16x256xf32>
    %189 = tpu.matmul %187, %188, %cst_62 {dimension_numbers = #tpu.dot_dimension_numbers<[1], [0], [0], [1], [0, 0, 1, 1], [], []>} : vector<16x256xf32>, vector<256x256xf32>, vector<16x256xf32> -> vector<16x256xf32>
    %190 = arith.addf %0, %189 : vector<16x256xf32>
    %191 = arith.mulf %190, %190 : vector<16x256xf32>
    %cst_63 = arith.constant dense<0.000000e+00> : vector<16xf32>
    %192 = vector.multi_reduction <add>, %191, %cst_63 [1] : vector<16x256xf32> to vector<16xf32>
    %193 = vector.shape_cast %192 : vector<16xf32> to vector<16x1xf32>
    %cst_64 = arith.constant 2.560000e+02 : f32
    %194 = vector.broadcast %cst_64 : f32 to vector<16x1xf32>
    %195 = arith.divf %193, %194 : vector<16x1xf32>
    %cst_65 = arith.constant 9.99999974E-6 : f32
    %196 = vector.broadcast %cst_65 : f32 to vector<16x1xf32>
    %197 = arith.addf %195, %196 : vector<16x1xf32>
    %198 = math.rsqrt %197 : vector<16x1xf32>
    %199 = vector.broadcast %198 : vector<16x1xf32> to vector<16x256xf32>
    %200 = arith.mulf %190, %199 : vector<16x256xf32>
    %c0_66 = arith.constant 0 : index
    %c0_67 = arith.constant 0 : index
    %201 = vector.load %arg6[%c0_66, %c0_67] : memref<1x256xf32, #tpu.memory_space<vmem>>, vector<1x256xf32>
    %202 = vector.broadcast %201 : vector<1x256xf32> to vector<16x256xf32>
    %203 = arith.mulf %200, %202 : vector<16x256xf32>
    %c0_68 = arith.constant 0 : index
    %c0_69 = arith.constant 0 : index
    %204 = vector.load %arg7[%c0_68, %c0_69] : memref<256x512xf32, #tpu.memory_space<vmem>>, vector<256x512xf32>
    %cst_70 = arith.constant dense<0.000000e+00> : vector<16x512xf32>
    %205 = tpu.matmul %203, %204, %cst_70 {dimension_numbers = #tpu.dot_dimension_numbers<[1], [0], [0], [1], [0, 0, 1, 1], [], []>} : vector<16x256xf32>, vector<256x512xf32>, vector<16x512xf32> -> vector<16x512xf32>
    %206 = arith.negf %205 : vector<16x512xf32>
    %207 = math.exp %206 : vector<16x512xf32>
    %cst_71 = arith.constant 1.000000e+00 : f32
    %208 = vector.broadcast %cst_71 : f32 to vector<16x512xf32>
    %209 = arith.addf %208, %207 : vector<16x512xf32>
    %210 = arith.divf %208, %209 : vector<16x512xf32>
    %211 = arith.mulf %205, %210 : vector<16x512xf32>
    %c0_72 = arith.constant 0 : index
    %c0_73 = arith.constant 0 : index
    %212 = vector.load %arg8[%c0_72, %c0_73] : memref<256x512xf32, #tpu.memory_space<vmem>>, vector<256x512xf32>
    %cst_74 = arith.constant dense<0.000000e+00> : vector<16x512xf32>
    %213 = tpu.matmul %203, %212, %cst_74 {dimension_numbers = #tpu.dot_dimension_numbers<[1], [0], [0], [1], [0, 0, 1, 1], [], []>} : vector<16x256xf32>, vector<256x512xf32>, vector<16x512xf32> -> vector<16x512xf32>
    %214 = arith.mulf %211, %213 : vector<16x512xf32>
    %c0_75 = arith.constant 0 : index
    %c0_76 = arith.constant 0 : index
    %215 = vector.load %arg9[%c0_75, %c0_76] : memref<512x256xf32, #tpu.memory_space<vmem>>, vector<512x256xf32>
    %cst_77 = arith.constant dense<0.000000e+00> : vector<16x256xf32>
    %216 = tpu.matmul %214, %215, %cst_77 {dimension_numbers = #tpu.dot_dimension_numbers<[1], [0], [0], [1], [0, 0, 1, 1], [], []>} : vector<16x512xf32>, vector<512x256xf32>, vector<16x256xf32> -> vector<16x256xf32>
    %217 = arith.addf %190, %216 : vector<16x256xf32>
    %c0_78 = arith.constant 0 : index
    %c0_79 = arith.constant 0 : index
    %218 = vector.load %arg10[%c0_78, %c0_79] : memref<16x256xf32, #tpu.memory_space<vmem>>, vector<16x256xf32>
    tpu.vector_store %arg10[%c0_78, %c0_79], %217 {strides = array<i32>} : memref<16x256xf32, #tpu.memory_space<vmem>>, vector<16x256xf32>,
    return
  }
}

</mosaic_0001>

<llo_original>
// kernel: tpu_custom_call.1
$region0: #{tpu_custom_call.1}
  #allocation0 [shape = 'u32[]', space=smem, size = 0x4, offset = 0x4, fixed_abs, tag = 'smem constant byte address 0x4 - core index']
  #allocation1 [shape = 'u32[144,128]{1,0:T(1,128)}', space=vmem, size = 0x12000, scoped, tag = 'internal scratch']
  %s0 = inlined_call_operand.hbm [shape: f32[16,256], index: 0, kind: input, shape index: {}]
  %s1 = inlined_call_operand.hbm [shape: f32[16,384], index: 1, kind: input, shape index: {}]
  %s2 = inlined_call_operand.hbm [shape: f32[16,384], index: 2, kind: input, shape index: {}]
  %s3 = inlined_call_operand.vmem [shape: f32[1,256], index: 3, kind: input, shape index: {}]
  %s4 = inlined_call_operand.hbm [shape: f32[256,896], index: 4, kind: input, shape index: {}]
  %s5 = inlined_call_operand.hbm [shape: f32[256,256], index: 5, kind: input, shape index: {}]
  %s6 = inlined_call_operand.vmem [shape: f32[1,256], index: 6, kind: input, shape index: {}]
  %s7 = inlined_call_operand.hbm [shape: f32[256,512], index: 7, kind: input, shape index: {}]
  %s8 = inlined_call_operand.hbm [shape: f32[256,512], index: 8, kind: input, shape index: {}]
  %s9 = inlined_call_operand.hbm [shape: f32[512,256], index: 9, kind: input, shape index: {}]
  %s10 = inlined_call_operand.hbm [shape: f32[16,256], index: 10, kind: output, shape index: {}]
  %s11 = sld [smem:[#allocation0]]
  $region82: #{tpu_custom_call.1} parent=0
    _
  %s13 = ssub.s32 1, %s11
  %s14 = scalar_select 0, %s13, %s11
  $region1: #{tpu_custom_call.1} parent=0
    #allocation2 [shape = 'u8[16384]{0}', space=vmem, size = 0x4000, scoped, tag = 'input window, operand 0, single buffered']
    #allocation3 [shape = 's32[1]{0}', space=sflag, size = 0x4, scoped, tag = 'scoped memory for tpu_custom_call.1']
    #allocation4 [shape = 's32[1]{0}', space=sflag, size = 0x4, scoped, tag = 'scoped memory for tpu_custom_call.1']
    #allocation5 [shape = 'u8[24576]{0}', space=vmem, size = 0x6000, scoped, tag = 'input window, operand 1, single buffered']
    #allocation6 [shape = 's32[1]{0}', space=sflag, size = 0x4, scoped, tag = 'scoped memory for tpu_custom_call.1']
    #allocation7 [shape = 'u8[24576]{0}', space=vmem, size = 0x6000, scoped, tag = 'input window, operand 2, single buffered']
    #allocation8 [shape = 'u8[917504]{0}', space=vmem, size = 0xe0000, scoped, tag = 'input window, operand 4, single buffered']
    #allocation9 [shape = 's32[1]{0}', space=sflag, size = 0x4, scoped, tag = 'scoped memory for tpu_custom_call.1']
    #allocation10 [shape = 'u8[262144]{0}', space=vmem, size = 0x40000, scoped, tag = 'input window, operand 5, single buffered']
    #allocation11 [shape = 'u8[524288]{0}', space=vmem, size = 0x80000, scoped, tag = 'input window, operand 7, single buffered']
    #allocation12 [shape = 's32[1]{0}', space=sflag, size = 0x4, scoped, tag = 'scoped memory for tpu_custom_call.1']
    #allocation13 [shape = 'u8[524288]{0}', space=vmem, size = 0x80000, scoped, tag = 'input window, operand 8, single buffered']
    #allocation14 [shape = 'u8[524288]{0}', space=vmem, size = 0x80000, scoped, tag = 'input window, operand 9, single buffered']
    #allocation15 [shape = 's32[1]{0}', space=sflag, size = 0x4, scoped, tag = 'scoped memory for tpu_custom_call.1']
    #allocation16 [shape = 'u8[16384]{0}', space=vmem, size = 0x4000, scoped, tag = 'output window, operand 0, single buffered']
    %15 = vsyncpa [#allocation3], 0
    %16 = vsyncpa [#allocation6], 0
    %17 = vsyncpa [#allocation9], 0
    %18 = vsyncpa [#allocation12], 0
    %19 = vsyncpa [#allocation15], 0
    %20 = vsyncpa [#allocation4], 0
    // Predicated region
    $region2: #{tpu_custom_call.1} parent=1 // pred_check
      _
    $region3: #{tpu_custom_call.1} parent=1 // pred_check_branch
      %22 = sbr.rel (0) target = $region5
    $region4: #{tpu_custom_call.1} parent=1 // pred_region
      %s24 = ssub.s32 512, 512
      %25 = vsyncadd [#allocation3], %s24
      %s26 = sshll.u32 [#allocation2], 4
      %s27 = int_to_ptr.vmem [resolvable:$true] %s26
      %32 = dma.hbm_to_vmem [thread:$0]  %s0, 512, %s27, [#allocation3], 256, 256, 16
    $region5: #{tpu_custom_call.1} parent=1 // pred_fallthru
      _
    // Predicated region
    $region6: #{tpu_custom_call.1} parent=1 // pred_check
      _
    $region7: #{tpu_custom_call.1} parent=1 // pred_check_branch
      %34 = sbr.rel (0) target = $region9
    $region8: #{tpu_custom_call.1} parent=1 // pred_region
      %s36 = ssub.s32 768, 768
      %37 = vsyncadd [#allocation6], %s36
      %s38 = sshll.u32 [#allocation5], 4
      %s39 = int_to_ptr.vmem [resolvable:$true] %s38
      %44 = dma.hbm_to_vmem [thread:$0]  %s1, 768, %s39, [#allocation6], 384, 384, 24
    $region9: #{tpu_custom_call.1} parent=1 // pred_fallthru
      _
    // Predicated region
    $region10: #{tpu_custom_call.1} parent=1 // pred_check
      _
    $region11: #{tpu_custom_call.1} parent=1 // pred_check_branch
      %46 = sbr.rel (0) target = $region13
    $region12: #{tpu_custom_call.1} parent=1 // pred_region
      %s48 = ssub.s32 768, 768
      %49 = vsyncadd [#allocation6], %s48
      %s50 = sshll.u32 [#allocation7], 4
      %s51 = int_to_ptr.vmem [resolvable:$true] %s50
      %56 = dma.hbm_to_vmem [thread:$0]  %s2, 768, %s51, [#allocation6], 384, 384, 24
    $region13: #{tpu_custom_call.1} parent=1 // pred_fallthru
      _
    // Predicated region
    $region14: #{tpu_custom_call.1} parent=1 // pred_check
      _
    $region15: #{tpu_custom_call.1} parent=1 // pred_check_branch
      %58 = sbr.rel (0) target = $region17
    $region16: #{tpu_custom_call.1} parent=1 // pred_region
      _
    $region17: #{tpu_custom_call.1} parent=1 // pred_fallthru
      _
    // Predicated region
    $region18: #{tpu_custom_call.1} parent=1 // pred_check
      _
    $region19: #{tpu_custom_call.1} parent=1 // pred_check_branch
      %60 = sbr.rel (0) target = $region21
    $region20: #{tpu_custom_call.1} parent=1 // pred_region
      %s62 = ssub.s32 28672, 28672
      %63 = vsyncadd [#allocation9], %s62
      %s64 = sshll.u32 [#allocation8], 4
      %s65 = int_to_ptr.vmem [resolvable:$true] %s64
      %70 = dma.hbm_to_vmem [thread:$0]  %s4, 28672, %s65, [#allocation9], 896, 896, 56
    $region21: #{tpu_custom_call.1} parent=1 // pred_fallthru
      _
    // Predicated region
    $region22: #{tpu_custom_call.1} parent=1 // pred_check
      _
    $region23: #{tpu_custom_call.1} parent=1 // pred_check_branch
      %72 = sbr.rel (0) target = $region25
    $region24: #{tpu_custom_call.1} parent=1 // pred_region
      %s74 = ssub.s32 8192, 8192
      %75 = vsyncadd [#allocation9], %s74
      %s76 = sshll.u32 [#allocation10], 4
      %s77 = int_to_ptr.vmem [resolvable:$true] %s76
      %82 = dma.hbm_to_vmem [thread:$0]  %s5, 8192, %s77, [#allocation9], 256, 256, 16
    $region25: #{tpu_custom_call.1} parent=1 // pred_fallthru
      _
    // Predicated region
    $region26: #{tpu_custom_call.1} parent=1 // pred_check
      _
    $region27: #{tpu_custom_call.1} parent=1 // pred_check_branch
      %84 = sbr.rel (0) target = $region29
    $region28: #{tpu_custom_call.1} parent=1 // pred_region
      _
    $region29: #{tpu_custom_call.1} parent=1 // pred_fallthru
      _
    // Predicated region
    $region30: #{tpu_custom_call.1} parent=1 // pred_check
      _
    $region31: #{tpu_custom_call.1} parent=1 // pred_check_branch
      %86 = sbr.rel (0) target = $region33
    $region32: #{tpu_custom_call.1} parent=1 // pred_region
      %s88 = ssub.s32 16384, 16384
      %89 = vsyncadd [#allocation12], %s88
      %s90 = sshll.u32 [#allocation11], 4
      %s91 = int_to_ptr.vmem [resolvable:$true] %s90
      %96 = dma.hbm_to_vmem [thread:$0]  %s7, 16384, %s91, [#allocation12], 512, 512, 32
    $region33: #{tpu_custom_call.1} parent=1 // pred_fallthru
      _
    // Predicated region
    $region34: #{tpu_custom_call.1} parent=1 // pred_check
      _
    $region35: #{tpu_custom_call.1} parent=1 // pred_check_branch
      %98 = sbr.rel (0) target = $region37
    $region36: #{tpu_custom_call.1} parent=1 // pred_region
      %s100 = ssub.s32 16384, 16384
      %101 = vsyncadd [#allocation12], %s100
      %s102 = sshll.u32 [#allocation13], 4
      %s103 = int_to_ptr.vmem [resolvable:$true] %s102
      %108 = dma.hbm_to_vmem [thread:$0]  %s8, 16384, %s103, [#allocation12], 512, 512, 32
    $region37: #{tpu_custom_call.1} parent=1 // pred_fallthru
      _
    // Predicated region
    $region38: #{tpu_custom_call.1} parent=1 // pred_check
      _
    $region39: #{tpu_custom_call.1} parent=1 // pred_check_branch
      %110 = sbr.rel (0) target = $region41
    $region40: #{tpu_custom_call.1} parent=1 // pred_region
      %s112 = ssub.s32 16384, 16384
      %113 = vsyncadd [#allocation15], %s112
      %s114 = sshll.u32 [#allocation14], 4
      %s115 = int_to_ptr.vmem [resolvable:$true] %s114
      %120 = dma.hbm_to_vmem [thread:$0]  %s9, 16384, %s115, [#allocation15], 256, 256, 16
    $region41: #{tpu_custom_call.1} parent=1 // pred_fallthru
      _
    // Predicated region
    $region42: #{tpu_custom_call.1} parent=1 // pred_check
      _
    $region43: #{tpu_custom_call.1} parent=1 // pred_check_branch
      %122 = sbr.rel (0) target = $region45
    $region44: #{tpu_custom_call.1} parent=1 // pred_region
      %123 = dma.done [#allocation3], 512
    $region45: #{tpu_custom_call.1} parent=1 // pred_fallthru
      _
    // Predicated region
    $region46: #{tpu_custom_call.1} parent=1 // pred_check
      _
    $region47: #{tpu_custom_call.1} parent=1 // pred_check_branch
      %125 = sbr.rel (0) target = $region49
    $region48: #{tpu_custom_call.1} parent=1 // pred_region
      %126 = dma.done [#allocation6], 768
    $region49: #{tpu_custom_call.1} parent=1 // pred_fallthru
      _
    // Predicated region
    $region50: #{tpu_custom_call.1} parent=1 // pred_check
      _
    $region51: #{tpu_custom_call.1} parent=1 // pred_check_branch
      %128 = sbr.rel (0) target = $region53
    $region52: #{tpu_custom_call.1} parent=1 // pred_region
      %129 = dma.done [#allocation6], 768
    $region53: #{tpu_custom_call.1} parent=1 // pred_fallthru
      _
    // Predicated region
    $region54: #{tpu_custom_call.1} parent=1 // pred_check
      _
    $region55: #{tpu_custom_call.1} parent=1 // pred_check_branch
      %131 = sbr.rel (0) target = $region57
    $region56: #{tpu_custom_call.1} parent=1 // pred_region
      %132 = dma.done [#allocation9], 28672
    $region57: #{tpu_custom_call.1} parent=1 // pred_fallthru
      _
    // Predicated region
    $region58: #{tpu_custom_call.1} parent=1 // pred_check
      _
    $region59: #{tpu_custom_call.1} parent=1 // pred_check_branch
      %134 = sbr.rel (0) target = $region61
    $region60: #{tpu_custom_call.1} parent=1 // pred_region
      %135 = dma.done [#allocation9], 8192
    $region61: #{tpu_custom_call.1} parent=1 // pred_fallthru
      _
    // Predicated region
    $region62: #{tpu_custom_call.1} parent=1 // pred_check
      _
    $region63: #{tpu_custom_call.1} parent=1 // pred_check_branch
      %137 = sbr.rel (0) target = $region65
    $region64: #{tpu_custom_call.1} parent=1 // pred_region
      %138 = dma.done [#allocation12], 16384
    $region65: #{tpu_custom_call.1} parent=1 // pred_fallthru
      _
    // Predicated region
    $region66: #{tpu_custom_call.1} parent=1 // pred_check
      _
    $region67: #{tpu_custom_call.1} parent=1 // pred_check_branch
      %140 = sbr.rel (0) target = $region69
    $region68: #{tpu_custom_call.1} parent=1 // pred_region
      %141 = dma.done [#allocation12], 16384
    $region69: #{tpu_custom_call.1} parent=1 // pred_fallthru
      _
    // Predicated region
    $region70: #{tpu_custom_call.1} parent=1 // pred_check
      _
    $region71: #{tpu_custom_call.1} parent=1 // pred_check_branch
      %143 = sbr.rel (0) target = $region73
    $region72: #{tpu_custom_call.1} parent=1 // pred_region
      %144 = dma.done [#allocation15], 16384
    $region73: #{tpu_custom_call.1} parent=1 // pred_fallthru
      _
    %v145 = vld [vmem:[#allocation2] sm:$0xff]
    %v146 = vld [vmem:[#allocation2 + $0x8] sm:$0xff]
    %v147 = vld [vmem:[#allocation2 + $0x10] sm:$0xff]
    %v148 = vld [vmem:[#allocation2 + $0x18] sm:$0xff]
    %v149 = vmul.f32 %v145, %v145
    %v150 = vmul.f32 %v146, %v146
    %v151 = vmul.f32 %v147, %v147
    %v152 = vmul.f32 %v148, %v148
    %v153 = vadd.f32 %v149, %v150
    %154 = vadd.xlane.f32.xlu0 %v153
    %v155 = vpop.xlane.xlu0 %154
    %v156 = vadd.f32 %v151, %v152
    %157 = vadd.xlane.f32.xlu0 %v156
    %v158 = vpop.xlane.xlu0 %157
    %v159 = vrcp.pop 256.0
    %v160 = vmul.f32 %v155, %v159
    %v161 = vmul.f32 %v158, %v159
    %v162 = vadd.f32 %v160, 1e-05
    %v163 = vadd.f32 %v161, 1e-05
    %v164 = vrsqrt.pop %v162
    %v165 = vrsqrt.pop %v163
    %v166 = vmul.f32 %v145, %v164
    %v167 = vmul.f32 %v146, %v164
    %v168 = vmul.f32 %v147, %v165
    %v169 = vmul.f32 %v148, %v165
    %v170 = vld [vmem:[%s3] sm:$0x3]
    %v172 = vlaneseq
    %v173 = vshrl.u32 %v172, 7
    %v174 = vsub.s32 0, %v173
    %v175 = vrot.slane %v170, %v174
    %v176 = vlaneseq
    %v177 = vshrl.u32 %v176, 7
    %v178 = vsub.s32 1, %v177
    %v179 = vrot.slane %v170, %v178
    %v182 = vmul.f32 %v166, %v175
    %v183 = vmul.f32 %v167, %v179
    %v184 = vmul.f32 %v168, %v175
    %v185 = vmul.f32 %v169, %v179
    %v186 = vld [vmem:[#allocation8] sm:$0xff]
    %v187 = vld [vmem:[#allocation8 + $0x8] sm:$0xff]
    %v188 = vld [vmem:[#allocation8 + $0x10] sm:$0xff]
    %v189 = vld [vmem:[#allocation8 + $0x18] sm:$0xff]
    %v190 = vld [vmem:[#allocation8 + $0x20] sm:$0xff]
    %v191 = vld [vmem:[#allocation8 + $0x28] sm:$0xff]
    %v192 = vld [vmem:[#allocation8 + $0x30] sm:$0xff]
    %v193 = vld [vmem:[#allocation8 + $0x38] sm:$0xff]
    %v194 = vld [vmem:[#allocation8 + $0x40] sm:$0xff]
    %v195 = vld [vmem:[#allocation8 + $0x48] sm:$0xff]
    %v196 = vld [vmem:[#allocation8 + $0x50] sm:$0xff]
    %v197 = vld [vmem:[#allocation8 + $0x58] sm:$0xff]
    %v198 = vld [vmem:[#allocation8 + $0x60] sm:$0xff]
    %v199 = vld [vmem:[#allocation8 + $0x68] sm:$0xff]
    %v200 = vld [vmem:[#allocation8 + $0x70] sm:$0xff]
    %v201 = vld [vmem:[#allocation8 + $0x78] sm:$0xff]
    %v202 = vld [vmem:[#allocation8 + $0x80] sm:$0xff]
    %v203 = vld [vmem:[#allocation8 + $0x88] sm:$0xff]
    %v204 = vld [vmem:[#allocation8 + $0x90] sm:$0xff]
    %v205 = vld [vmem:[#allocation8 + $0x98] sm:$0xff]
    %v206 = vld [vmem:[#allocation8 + $0xa0] sm:$0xff]
    %v207 = vld [vmem:[#allocation8 + $0xa8] sm:$0xff]
    %v208 = vld [vmem:[#allocation8 + $0xb0] sm:$0xff]
    %v209 = vld [vmem:[#allocation8 + $0xb8] sm:$0xff]
    %v210 = vld [vmem:[#allocation8 + $0xc0] sm:$0xff]
    %v211 = vld [vmem:[#allocation8 + $0xc8] sm:$0xff]
    %v212 = vld [vmem:[#allocation8 + $0xd0] sm:$0xff]
    %v213 = vld [vmem:[#allocation8 + $0xd8] sm:$0xff]
    %v214 = vld [vmem:[#allocation8 + $0xe0] sm:$0xff]
    %v215 = vld [vmem:[#allocation8 + $0xe8] sm:$0xff]
    %v216 = vld [vmem:[#allocation8 + $0xf0] sm:$0xff]
    %v217 = vld [vmem:[#allocation8 + $0xf8] sm:$0xff]
    %v218 = vld [vmem:[#allocation8 + $0x100] sm:$0xff]
    %v219 = vld [vmem:[#allocation8 + $0x108] sm:$0xff]
    %v220 = vld [vmem:[#allocation8 + $0x110] sm:$0xff]
    %v221 = vld [vmem:[#allocation8 + $0x118] sm:$0xff]
    %v222 = vld [vmem:[#allocation8 + $0x120] sm:$0xff]
    %v223 = vld [vmem:[#allocation8 + $0x128] sm:$0xff]
    %v224 = vld [vmem:[#allocation8 + $0x130] sm:$0xff]
    %v225 = vld [vmem:[#allocation8 + $0x138] sm:$0xff]
    %v226 = vld [vmem:[#allocation8 + $0x140] sm:$0xff]
    %v227 = vld [vmem:[#allocation8 + $0x148] sm:$0xff]
    %v228 = vld [vmem:[#allocation8 + $0x150] sm:$0xff]
    %v229 = vld [vmem:[#allocation8 + $0x158] sm:$0xff]
    %v230 = vld [vmem:[#allocation8 + $0x160] sm:$0xff]
    %v231 = vld [vmem:[#allocation8 + $0x168] sm:$0xff]
    %v232 = vld [vmem:[#allocation8 + $0x170] sm:$0xff]
    %v233 = vld [vmem:[#allocation8 + $0x178] sm:$0xff]
    %v234 = vld [vmem:[#allocation8 + $0x180] sm:$0xff]
    %v235 = vld [vmem:[#allocation8 + $0x188] sm:$0xff]
    %v236 = vld [vmem:[#allocation8 + $0x190] sm:$0xff]
    %v237 = vld [vmem:[#allocation8 + $0x198] sm:$0xff]
    %v238 = vld [vmem:[#allocation8 + $0x1a0] sm:$0xff]
    %v239 = vld [vmem:[#allocation8 + $0x1a8] sm:$0xff]
    %v240 = vld [vmem:[#allocation8 + $0x1b0] sm:$0xff]
    %v241 = vld [vmem:[#allocation8 + $0x1b8] sm:$0xff]
    %v242 = vld [vmem:[#allocation8 + $0x1c0] sm:$0xff]
    %v243 = vld [vmem:[#allocation8 + $0x1c8] sm:$0xff]
    %v244 = vld [vmem:[#allocation8 + $0x1d0] sm:$0xff]
    %v245 = vld [vmem:[#allocation8 + $0x1d8] sm:$0xff]
    %v246 = vld [vmem:[#allocation8 + $0x1e0] sm:$0xff]
    %v247 = vld [vmem:[#allocation8 + $0x1e8] sm:$0xff]
    %v248 = vld [vmem:[#allocation8 + $0x1f0] sm:$0xff]
    %v249 = vld [vmem:[#allocation8 + $0x1f8] sm:$0xff]
    %v250 = vld [vmem:[#allocation8 + $0x200] sm:$0xff]
    %v251 = vld [vmem:[#allocation8 + $0x208] sm:$0xff]
    %v252 = vld [vmem:[#allocation8 + $0x210] sm:$0xff]
    %v253 = vld [vmem:[#allocation8 + $0x218] sm:$0xff]
    %v254 = vld [vmem:[#allocation8 + $0x220] sm:$0xff]
    %v255 = vld [vmem:[#allocation8 + $0x228] sm:$0xff]
    %v256 = vld [vmem:[#allocation8 + $0x230] sm:$0xff]
    %v257 = vld [vmem:[#allocation8 + $0x238] sm:$0xff]
    %v258 = vld [vmem:[#allocation8 + $0x240] sm:$0xff]
    %v259 = vld [vmem:[#allocation8 + $0x248] sm:$0xff]
    %v260 = vld [vmem:[#allocation8 + $0x250] sm:$0xff]
    %v261 = vld [vmem:[#allocation8 + $0x258] sm:$0xff]
    %v262 = vld [vmem:[#allocation8 + $0x260] sm:$0xff]
    %v263 = vld [vmem:[#allocation8 + $0x268] sm:$0xff]
    %v264 = vld [vmem:[#allocation8 + $0x270] sm:$0xff]
    %v265 = vld [vmem:[#allocation8 + $0x278] sm:$0xff]
    %v266 = vld [vmem:[#allocation8 + $0x280] sm:$0xff]
    %v267 = vld [vmem:[#allocation8 + $0x288] sm:$0xff]
    %v268 = vld [vmem:[#allocation8 + $0x290] sm:$0xff]
    %v269 = vld [vmem:[#allocation8 + $0x298] sm:$0xff]
    %v270 = vld [vmem:[#allocation8 + $0x2a0] sm:$0xff]
    %v271 = vld [vmem:[#allocation8 + $0x2a8] sm:$0xff]
    %v272 = vld [vmem:[#allocation8 + $0x2b0] sm:$0xff]
    %v273 = vld [vmem:[#allocation8 + $0x2b8] sm:$0xff]
    %v274 = vld [vmem:[#allocation8 + $0x2c0] sm:$0xff]
    %v275 = vld [vmem:[#allocation8 + $0x2c8] sm:$0xff]
    %v276 = vld [vmem:[#allocation8 + $0x2d0] sm:$0xff]
    %v277 = vld [vmem:[#allocation8 + $0x2d8] sm:$0xff]
    %v278 = vld [vmem:[#allocation8 + $0x2e0] sm:$0xff]
    %v279 = vld [vmem:[#allocation8 + $0x2e8] sm:$0xff]
    %v280 = vld [vmem:[#allocation8 + $0x2f0] sm:$0xff]
    %v281 = vld [vmem:[#allocation8 + $0x2f8] sm:$0xff]
    %v282 = vld [vmem:[#allocation8 + $0x300] sm:$0xff]
    %v283 = vld [vmem:[#allocation8 + $0x308] sm:$0xff]
    %v284 = vld [vmem:[#allocation8 + $0x310] sm:$0xff]
    %v285 = vld [vmem:[#allocation8 + $0x318] sm:$0xff]
    %v286 = vld [vmem:[#allocation8 + $0x320] sm:$0xff]
    %v287 = vld [vmem:[#allocation8 + $0x328] sm:$0xff]
    %v288 = vld [vmem:[#allocation8 + $0x330] sm:$0xff]
    %v289 = vld [vmem:[#allocation8 + $0x338] sm:$0xff]
    %v290 = vld [vmem:[#allocation8 + $0x340] sm:$0xff]
    %v291 = vld [vmem:[#allocation8 + $0x348] sm:$0xff]
    %v292 = vld [vmem:[#allocation8 + $0x350] sm:$0xff]
    %v293 = vld [vmem:[#allocation8 + $0x358] sm:$0xff]
    %v294 = vld [vmem:[#allocation8 + $0x360] sm:$0xff]
    %v295 = vld [vmem:[#allocation8 + $0x368] sm:$0xff]
    %v296 = vld [vmem:[#allocation8 + $0x370] sm:$0xff]
    %v297 = vld [vmem:[#allocation8 + $0x378] sm:$0xff]
    %v298 = vld [vmem:[#allocation8 + $0x380] sm:$0xff]
    %v299 = vld [vmem:[#allocation8 + $0x388] sm:$0xff]
    %v300 = vld [vmem:[#allocation8 + $0x390] sm:$0xff]
    %v301 = vld [vmem:[#allocation8 + $0x398] sm:$0xff]
    %v302 = vld [vmem:[#allocation8 + $0x3a0] sm:$0xff]
    %v303 = vld [vmem:[#allocation8 + $0x3a8] sm:$0xff]
    %v304 = vld [vmem:[#allocation8 + $0x3b0] sm:$0xff]
    %v305 = vld [vmem:[#allocation8 + $0x3b8] sm:$0xff]
    %v306 = vld [vmem:[#allocation8 + $0x3c0] sm:$0xff]
    %v307 = vld [vmem:[#allocation8 + $0x3c8] sm:$0xff]
    %v308 = vld [vmem:[#allocation8 + $0x3d0] sm:$0xff]
    %v309 = vld [vmem:[#allocation8 + $0x3d8] sm:$0xff]
    %v310 = vld [vmem:[#allocation8 + $0x3e0] sm:$0xff]
    %v311 = vld [vmem:[#allocation8 + $0x3e8] sm:$0xff]
    %v312 = vld [vmem:[#allocation8 + $0x3f0] sm:$0xff]
    %v313 = vld [vmem:[#allocation8 + $0x3f8] sm:$0xff]
    %v314 = vld [vmem:[#allocation8 + $0x400] sm:$0xff]
    %v315 = vld [vmem:[#allocation8 + $0x408] sm:$0xff]
    %v316 = vld [vmem:[#allocation8 + $0x410] sm:$0xff]
    %v317 = vld [vmem:[#allocation8 + $0x418] sm:$0xff]
    %v318 = vld [vmem:[#allocation8 + $0x420] sm:$0xff]
    %v319 = vld [vmem:[#allocation8 + $0x428] sm:$0xff]
    %v320 = vld [vmem:[#allocation8 + $0x430] sm:$0xff]
    %v321 = vld [vmem:[#allocation8 + $0x438] sm:$0xff]
    %v322 = vld [vmem:[#allocation8 + $0x440] sm:$0xff]
    %v323 = vld [vmem:[#allocation8 + $0x448] sm:$0xff]
    %v324 = vld [vmem:[#allocation8 + $0x450] sm:$0xff]
    %v325 = vld [vmem:[#allocation8 + $0x458] sm:$0xff]
    %v326 = vld [vmem:[#allocation8 + $0x460] sm:$0xff]
    %v327 = vld [vmem:[#allocation8 + $0x468] sm:$0xff]
    %v328 = vld [vmem:[#allocation8 + $0x470] sm:$0xff]
    %v329 = vld [vmem:[#allocation8 + $0x478] sm:$0xff]
    %v330 = vld [vmem:[#allocation8 + $0x480] sm:$0xff]
    %v331 = vld [vmem:[#allocation8 + $0x488] sm:$0xff]
    %v332 = vld [vmem:[#allocation8 + $0x490] sm:$0xff]
    %v333 = vld [vmem:[#allocation8 + $0x498] sm:$0xff]
    %v334 = vld [vmem:[#allocation8 + $0x4a0] sm:$0xff]
    %v335 = vld [vmem:[#allocation8 + $0x4a8] sm:$0xff]
    %v336 = vld [vmem:[#allocation8 + $0x4b0] sm:$0xff]
    %v337 = vld [vmem:[#allocation8 + $0x4b8] sm:$0xff]
    %v338 = vld [vmem:[#allocation8 + $0x4c0] sm:$0xff]
    %v339 = vld [vmem:[#allocation8 + $0x4c8] sm:$0xff]
    %v340 = vld [vmem:[#allocation8 + $0x4d0] sm:$0xff]
    %v341 = vld [vmem:[#allocation8 + $0x4d8] sm:$0xff]
    %v342 = vld [vmem:[#allocation8 + $0x4e0] sm:$0xff]
    %v343 = vld [vmem:[#allocation8 + $0x4e8] sm:$0xff]
    %v344 = vld [vmem:[#allocation8 + $0x4f0] sm:$0xff]
    %v345 = vld [vmem:[#allocation8 + $0x4f8] sm:$0xff]
    %v346 = vld [vmem:[#allocation8 + $0x500] sm:$0xff]
    %v347 = vld [vmem:[#allocation8 + $0x508] sm:$0xff]
    %v348 = vld [vmem:[#allocation8 + $0x510] sm:$0xff]
    %v349 = vld [vmem:[#allocation8 + $0x518] sm:$0xff]
    %v350 = vld [vmem:[#allocation8 + $0x520] sm:$0xff]
    %v351 = vld [vmem:[#allocation8 + $0x528] sm:$0xff]
    %v352 = vld [vmem:[#allocation8 + $0x530] sm:$0xff]
    %v353 = vld [vmem:[#allocation8 + $0x538] sm:$0xff]
    %v354 = vld [vmem:[#allocation8 + $0x540] sm:$0xff]
    %v355 = vld [vmem:[#allocation8 + $0x548] sm:$0xff]
    %v356 = vld [vmem:[#allocation8 + $0x550] sm:$0xff]
    %v357 = vld [vmem:[#allocation8 + $0x558] sm:$0xff]
    %v358 = vld [vmem:[#allocation8 + $0x560] sm:$0xff]
    %v359 = vld [vmem:[#allocation8 + $0x568] sm:$0xff]
    %v360 = vld [vmem:[#allocation8 + $0x570] sm:$0xff]
    %v361 = vld [vmem:[#allocation8 + $0x578] sm:$0xff]
    %v362 = vld [vmem:[#allocation8 + $0x580] sm:$0xff]
    %v363 = vld [vmem:[#allocation8 + $0x588] sm:$0xff]
    %v364 = vld [vmem:[#allocation8 + $0x590] sm:$0xff]
    %v365 = vld [vmem:[#allocation8 + $0x598] sm:$0xff]
    %v366 = vld [vmem:[#allocation8 + $0x5a0] sm:$0xff]
    %v367 = vld [vmem:[#allocation8 + $0x5a8] sm:$0xff]
    %v368 = vld [vmem:[#allocation8 + $0x5b0] sm:$0xff]
    %v369 = vld [vmem:[#allocation8 + $0x5b8] sm:$0xff]
    %v370 = vld [vmem:[#allocation8 + $0x5c0] sm:$0xff]
    %v371 = vld [vmem:[#allocation8 + $0x5c8] sm:$0xff]
    %v372 = vld [vmem:[#allocation8 + $0x5d0] sm:$0xff]
    %v373 = vld [vmem:[#allocation8 + $0x5d8] sm:$0xff]
    %v374 = vld [vmem:[#allocation8 + $0x5e0] sm:$0xff]
    %v375 = vld [vmem:[#allocation8 + $0x5e8] sm:$0xff]
    %v376 = vld [vmem:[#allocation8 + $0x5f0] sm:$0xff]
    %v377 = vld [vmem:[#allocation8 + $0x5f8] sm:$0xff]
    %v378 = vld [vmem:[#allocation8 + $0x600] sm:$0xff]
    %v379 = vld [vmem:[#allocation8 + $0x608] sm:$0xff]
    %v380 = vld [vmem:[#allocation8 + $0x610] sm:$0xff]
    %v381 = vld [vmem:[#allocation8 + $0x618] sm:$0xff]
    %v382 = vld [vmem:[#allocation8 + $0x620] sm:$0xff]
    %v383 = vld [vmem:[#allocation8 + $0x628] sm:$0xff]
    %v384 = vld [vmem:[#allocation8 + $0x630] sm:$0xff]
    %v385 = vld [vmem:[#allocation8 + $0x638] sm:$0xff]
    %v386 = vld [vmem:[#allocation8 + $0x640] sm:$0xff]
    %v387 = vld [vmem:[#allocation8 + $0x648] sm:$0xff]
    %v388 = vld [vmem:[#allocation8 + $0x650] sm:$0xff]
    %v389 = vld [vmem:[#allocation8 + $0x658] sm:$0xff]
    %v390 = vld [vmem:[#allocation8 + $0x660] sm:$0xff]
    %v391 = vld [vmem:[#allocation8 + $0x668] sm:$0xff]
    %v392 = vld [vmem:[#allocation8 + $0x670] sm:$0xff]
    %v393 = vld [vmem:[#allocation8 + $0x678] sm:$0xff]
    %v394 = vld [vmem:[#allocation8 + $0x680] sm:$0xff]
    %v395 = vld [vmem:[#allocation8 + $0x688] sm:$0xff]
    %v396 = vld [vmem:[#allocation8 + $0x690] sm:$0xff]
    %v397 = vld [vmem:[#allocation8 + $0x698] sm:$0xff]
    %v398 = vld [vmem:[#allocation8 + $0x6a0] sm:$0xff]
    %v399 = vld [vmem:[#allocation8 + $0x6a8] sm:$0xff]
    %v400 = vld [vmem:[#allocation8 + $0x6b0] sm:$0xff]
    %v401 = vld [vmem:[#allocation8 + $0x6b8] sm:$0xff]
    %v402 = vld [vmem:[#allocation8 + $0x6c0] sm:$0xff]
    %v403 = vld [vmem:[#allocation8 + $0x6c8] sm:$0xff]
    %v404 = vld [vmem:[#allocation8 + $0x6d0] sm:$0xff]
    %v405 = vld [vmem:[#allocation8 + $0x6d8] sm:$0xff]
    %v406 = vld [vmem:[#allocation8 + $0x6e0] sm:$0xff]
    %v407 = vld [vmem:[#allocation8 + $0x6e8] sm:$0xff]
    %v408 = vld [vmem:[#allocation8 + $0x6f0] sm:$0xff]
    %v409 = vld [vmem:[#allocation8 + $0x6f8] sm:$0xff]
    %410 = vmatprep.subr.mxu0 %v292
    %411 = vmatpush1.msra.mxu0 %v291
    %412 = vmatprep.subr.mxu0 %v285
    %413 = vmatpush1.msra.mxu0 %v284
    %414 = vmatprep.subr.mxu0 %v278
    %415 = vmatpush1.msra.mxu0 %v277
    %416 = vmatprep.subr.mxu0 %v271
    %417 = vmatpush1.msra.mxu0 %v270
    %418 = vmatprep.subr.mxu0 %v264
    %419 = vmatpush1.msra.mxu0 %v263
    %420 = vmatprep.subr.mxu0 %v257
    %421 = vmatpush1.msra.mxu0 %v256
    %422 = vmatprep.subr.mxu0 %v250
    %423 = vmatpush1.msra.mxu0 %v249
    %424 = vmatprep.subr.mxu0 %v243
    %425 = vmatpush1.msra.mxu0 %v242
    %426 = vmatprep.subr.mxu0 %v236
    %427 = vmatpush1.msra.mxu0 %v235
    %428 = vmatprep.subr.mxu0 %v229
    %429 = vmatpush1.msra.mxu0 %v228
    %430 = vmatprep.subr.mxu0 %v222
    %431 = vmatpush1.msra.mxu0 %v221
    %432 = vmatprep.subr.mxu0 %v215
    %433 = vmatpush1.msra.mxu0 %v214
    %434 = vmatprep.subr.mxu0 %v208
    %435 = vmatpush1.msra.mxu0 %v207
    %436 = vmatprep.subr.mxu0 %v201
    %437 = vmatpush1.msra.mxu0 %v200
    %438 = vmatprep.subr.mxu0 %v194
    %439 = vmatpush1.msra.mxu0 %v193
    %440 = vmatprep.subr.mxu0 %v187
    %441 = vmatpush1.msra.mxu0 %v186
    %442 = vmatprep.subr.mxu0 %v404
    %443 = vmatpush2.msra.mxu0 %v403
    %444 = vmatprep.subr.mxu0 %v397
    %445 = vmatpush2.msra.mxu0 %v396
    %446 = vmatprep.subr.mxu0 %v390
    %447 = vmatpush2.msra.mxu0 %v389
    %448 = vmatprep.subr.mxu0 %v383
    %449 = vmatpush2.msra.mxu0 %v382
    %450 = vmatprep.subr.mxu0 %v376
    %451 = vmatpush2.msra.mxu0 %v375
    %452 = vmatprep.subr.mxu0 %v369
    %453 = vmatpush2.msra.mxu0 %v368
    %454 = vmatprep.subr.mxu0 %v362
    %455 = vmatpush2.msra.mxu0 %v361
    %456 = vmatprep.subr.mxu0 %v355
    %457 = vmatpush2.msra.mxu0 %v354
    %458 = vmatprep.subr.mxu0 %v348
    %459 = vmatpush2.msra.mxu0 %v347
    %460 = vmatprep.subr.mxu0 %v341
    %461 = vmatpush2.msra.mxu0 %v340
    %462 = vmatprep.subr.mxu0 %v334
    %463 = vmatpush2.msra.mxu0 %v333
    %464 = vmatprep.subr.mxu0 %v327
    %465 = vmatpush2.msra.mxu0 %v326
    %466 = vmatprep.subr.mxu0 %v320
    %467 = vmatpush2.msra.mxu0 %v319
    %468 = vmatprep.subr.mxu0 %v313
    %469 = vmatpush2.msra.mxu0 %v312
    %470 = vmatprep.subr.mxu0 %v306
    %471 = vmatpush2.msra.mxu0 %v305
    %472 = vmatprep.subr.mxu0 %v299
    %473 = vmatpush2.msra.mxu0 %v298
    %474 = vmatprep.mubr.f32.mxu0 %v183
    %475 = vmatmul.mubr.f32.gmra.mxu0 %v182
    %v476 = vpop.f32.mrf.mxu0
    %v477 = vadd.f32 0.0, %v476
    %v478 = vpop.f32.mrf.mxu0
    %v479 = vadd.f32 0.0, %v478
    %480 = vmatprep.mubr.f32.mxu0 %v185
    %481 = vmatmul.mubr.f32.gmra.mxu0 %v184
    %v482 = vpop.f32.mrf.mxu0
    %v483 = vadd.f32 0.0, %v482
    %v484 = vpop.f32.mrf.mxu0
    %v485 = vadd.f32 0.0, %v484
    %486 = vdwg.mxu0
    %487 = vmatprep.subr.mxu0 %v294
    %488 = vmatpush1.msra.mxu0 %v293
    %489 = vmatprep.subr.mxu0 %v287
    %490 = vmatpush1.msra.mxu0 %v286
    %491 = vmatprep.subr.mxu0 %v280
    %492 = vmatpush1.msra.mxu0 %v279
    %493 = vmatprep.subr.mxu0 %v273
    %494 = vmatpush1.msra.mxu0 %v272
    %495 = vmatprep.subr.mxu0 %v266
    %496 = vmatpush1.msra.mxu0 %v265
    %497 = vmatprep.subr.mxu0 %v259
    %498 = vmatpush1.msra.mxu0 %v258
    %499 = vmatprep.subr.mxu0 %v252
    %500 = vmatpush1.msra.mxu0 %v251
    %501 = vmatprep.subr.mxu0 %v245
    %502 = vmatpush1.msra.mxu0 %v244
    %503 = vmatprep.subr.mxu0 %v238
    %504 = vmatpush1.msra.mxu0 %v237
    %505 = vmatprep.subr.mxu0 %v231
    %506 = vmatpush1.msra.mxu0 %v230
    %507 = vmatprep.subr.mxu0 %v224
    %508 = vmatpush1.msra.mxu0 %v223
    %509 = vmatprep.subr.mxu0 %v217
    %510 = vmatpush1.msra.mxu0 %v216
    %511 = vmatprep.subr.mxu0 %v210
    %512 = vmatpush1.msra.mxu0 %v209
    %513 = vmatprep.subr.mxu0 %v203
    %514 = vmatpush1.msra.mxu0 %v202
    %515 = vmatprep.subr.mxu0 %v196
    %516 = vmatpush1.msra.mxu0 %v195
    %517 = vmatprep.subr.mxu0 %v189
    %518 = vmatpush1.msra.mxu0 %v188
    %519 = vmatprep.subr.mxu0 %v406
    %520 = vmatpush2.msra.mxu0 %v405
    %521 = vmatprep.subr.mxu0 %v399
    %522 = vmatpush2.msra.mxu0 %v398
    %523 = vmatprep.subr.mxu0 %v392
    %524 = vmatpush2.msra.mxu0 %v391
    %525 = vmatprep.subr.mxu0 %v385
    %526 = vmatpush2.msra.mxu0 %v384
    %527 = vmatprep.subr.mxu0 %v378
    %528 = vmatpush2.msra.mxu0 %v377
    %529 = vmatprep.subr.mxu0 %v371
    %530 = vmatpush2.msra.mxu0 %v370
    %531 = vmatprep.subr.mxu0 %v364
    %532 = vmatpush2.msra.mxu0 %v363
    %533 = vmatprep.subr.mxu0 %v357
    %534 = vmatpush2.msra.mxu0 %v356
    %535 = vmatprep.subr.mxu0 %v350
    %536 = vmatpush2.msra.mxu0 %v349
    %537 = vmatprep.subr.mxu0 %v343
    %538 = vmatpush2.msra.mxu0 %v342
    %539 = vmatprep.subr.mxu0 %v336
    %540 = vmatpush2.msra.mxu0 %v335
    %541 = vmatprep.subr.mxu0 %v329
    %542 = vmatpush2.msra.mxu0 %v328
    %543 = vmatprep.subr.mxu0 %v322
    %544 = vmatpush2.msra.mxu0 %v321
    %545 = vmatprep.subr.mxu0 %v315
    %546 = vmatpush2.msra.mxu0 %v314
    %547 = vmatprep.subr.mxu0 %v308
    %548 = vmatpush2.msra.mxu0 %v307
    %549 = vmatprep.subr.mxu0 %v301
    %550 = vmatpush2.msra.mxu0 %v300
    %551 = vmatprep.mubr.f32.mxu0 %v183
    %552 = vmatmul.mubr.f32.gmra.mxu0 %v182
    %v553 = vpop.f32.mrf.mxu0
    %v554 = vadd.f32 0.0, %v553
    %v555 = vpop.f32.mrf.mxu0
    %v556 = vadd.f32 0.0, %v555
    %557 = vmatprep.mubr.f32.mxu0 %v185
    %558 = vmatmul.mubr.f32.gmra.mxu0 %v184
    %v559 = vpop.f32.mrf.mxu0
    %v560 = vadd.f32 0.0, %v559
    %v561 = vpop.f32.mrf.mxu0
    %v562 = vadd.f32 0.0, %v561
    %563 = vdwg.mxu0
    %564 = vmatprep.subr.mxu0 %v296
    %565 = vmatpush1.msra.mxu0 %v295
    %566 = vmatprep.subr.mxu0 %v289
    %567 = vmatpush1.msra.mxu0 %v288
    %568 = vmatprep.subr.mxu0 %v282
    %569 = vmatpush1.msra.mxu0 %v281
    %570 = vmatprep.subr.mxu0 %v275
    %571 = vmatpush1.msra.mxu0 %v274
    %572 = vmatprep.subr.mxu0 %v268
    %573 = vmatpush1.msra.mxu0 %v267
    %574 = vmatprep.subr.mxu0 %v261
    %575 = vmatpush1.msra.mxu0 %v260
    %576 = vmatprep.subr.mxu0 %v254
    %577 = vmatpush1.msra.mxu0 %v253
    %578 = vmatprep.subr.mxu0 %v247
    %579 = vmatpush1.msra.mxu0 %v246
    %580 = vmatprep.subr.mxu0 %v240
    %581 = vmatpush1.msra.mxu0 %v239
    %582 = vmatprep.subr.mxu0 %v233
    %583 = vmatpush1.msra.mxu0 %v232
    %584 = vmatprep.subr.mxu0 %v226
    %585 = vmatpush1.msra.mxu0 %v225
    %586 = vmatprep.subr.mxu0 %v219
    %587 = vmatpush1.msra.mxu0 %v218
    %588 = vmatprep.subr.mxu0 %v212
    %589 = vmatpush1.msra.mxu0 %v211
    %590 = vmatprep.subr.mxu0 %v205
    %591 = vmatpush1.msra.mxu0 %v204
    %592 = vmatprep.subr.mxu0 %v198
    %593 = vmatpush1.msra.mxu0 %v197
    %594 = vmatprep.subr.mxu0 %v191
    %595 = vmatpush1.msra.mxu0 %v190
    %596 = vmatprep.subr.mxu0 %v408
    %597 = vmatpush2.msra.mxu0 %v407
    %598 = vmatprep.subr.mxu0 %v401
    %599 = vmatpush2.msra.mxu0 %v400
    %600 = vmatprep.subr.mxu0 %v394
    %601 = vmatpush2.msra.mxu0 %v393
    %602 = vmatprep.subr.mxu0 %v387
    %603 = vmatpush2.msra.mxu0 %v386
    %604 = vmatprep.subr.mxu0 %v380
    %605 = vmatpush2.msra.mxu0 %v379
    %606 = vmatprep.subr.mxu0 %v373
    %607 = vmatpush2.msra.mxu0 %v372
    %608 = vmatprep.subr.mxu0 %v366
    %609 = vmatpush2.msra.mxu0 %v365
    %610 = vmatprep.subr.mxu0 %v359
    %611 = vmatpush2.msra.mxu0 %v358
    %612 = vmatprep.subr.mxu0 %v352
    %613 = vmatpush2.msra.mxu0 %v351
    %614 = vmatprep.subr.mxu0 %v345
    %615 = vmatpush2.msra.mxu0 %v344
    %616 = vmatprep.subr.mxu0 %v338
    %617 = vmatpush2.msra.mxu0 %v337
    %618 = vmatprep.subr.mxu0 %v331
    %619 = vmatpush2.msra.mxu0 %v330
    %620 = vmatprep.subr.mxu0 %v324
    %621 = vmatpush2.msra.mxu0 %v323
    %622 = vmatprep.subr.mxu0 %v317
    %623 = vmatpush2.msra.mxu0 %v316
    %624 = vmatprep.subr.mxu0 %v310
    %625 = vmatpush2.msra.mxu0 %v309
    %626 = vmatprep.subr.mxu0 %v303
    %627 = vmatpush2.msra.mxu0 %v302
    %628 = vmatprep.mubr.f32.mxu0 %v183
    %629 = vmatmul.mubr.f32.gmra.mxu0 %v182
    %v630 = vpop.f32.mrf.mxu0
    %v631 = vadd.f32 0.0, %v630
    %v632 = vpop.f32.mrf.mxu0
    %v633 = vadd.f32 0.0, %v632
    %634 = vmatprep.mubr.f32.mxu0 %v185
    %635 = vmatmul.mubr.f32.gmra.mxu0 %v184
    %v636 = vpop.f32.mrf.mxu0
    %v637 = vadd.f32 0.0, %v636
    %v638 = vpop.f32.mrf.mxu0
    %v639 = vadd.f32 0.0, %v638
    %640 = vdwg.mxu0
    %641 = vmatprep.subr.mxu0 0.0
    %642 = vmatpush1.msra.mxu0 %v297
    %643 = vmatprep.subr.mxu0 0.0
    %644 = vmatpush1.msra.mxu0 %v290
    %645 = vmatprep.subr.mxu0 0.0
    %646 = vmatpush1.msra.mxu0 %v283
    %647 = vmatprep.subr.mxu0 0.0
    %648 = vmatpush1.msra.mxu0 %v276
    %649 = vmatprep.subr.mxu0 0.0
    %650 = vmatpush1.msra.mxu0 %v269
    %651 = vmatprep.subr.mxu0 0.0
    %652 = vmatpush1.msra.mxu0 %v262
    %653 = vmatprep.subr.mxu0 0.0
    %654 = vmatpush1.msra.mxu0 %v255
    %655 = vmatprep.subr.mxu0 0.0
    %656 = vmatpush1.msra.mxu0 %v248
    %657 = vmatprep.subr.mxu0 0.0
    %658 = vmatpush1.msra.mxu0 %v241
    %659 = vmatprep.subr.mxu0 0.0
    %660 = vmatpush1.msra.mxu0 %v234
    %661 = vmatprep.subr.mxu0 0.0
    %662 = vmatpush1.msra.mxu0 %v227
    %663 = vmatprep.subr.mxu0 0.0
    %664 = vmatpush1.msra.mxu0 %v220
    %665 = vmatprep.subr.mxu0 0.0
    %666 = vmatpush1.msra.mxu0 %v213
    %667 = vmatprep.subr.mxu0 0.0
    %668 = vmatpush1.msra.mxu0 %v206
    %669 = vmatprep.subr.mxu0 0.0
    %670 = vmatpush1.msra.mxu0 %v199
    %671 = vmatprep.subr.mxu0 0.0
    %672 = vmatpush1.msra.mxu0 %v192
    %673 = vmatprep.subr.mxu0 0.0
    %674 = vmatpush2.msra.mxu0 %v409
    %675 = vmatprep.subr.mxu0 0.0
    %676 = vmatpush2.msra.mxu0 %v402
    %677 = vmatprep.subr.mxu0 0.0
    %678 = vmatpush2.msra.mxu0 %v395
    %679 = vmatprep.subr.mxu0 0.0
    %680 = vmatpush2.msra.mxu0 %v388
    %681 = vmatprep.subr.mxu0 0.0
    %682 = vmatpush2.msra.mxu0 %v381
    %683 = vmatprep.subr.mxu0 0.0
    %684 = vmatpush2.msra.mxu0 %v374
    %685 = vmatprep.subr.mxu0 0.0
    %686 = vmatpush2.msra.mxu0 %v367
    %687 = vmatprep.subr.mxu0 0.0
    %688 = vmatpush2.msra.mxu0 %v360
    %689 = vmatprep.subr.mxu0 0.0
    %690 = vmatpush2.msra.mxu0 %v353
    %691 = vmatprep.subr.mxu0 0.0
    %692 = vmatpush2.msra.mxu0 %v346
    %693 = vmatprep.subr.mxu0 0.0
    %694 = vmatpush2.msra.mxu0 %v339
    %695 = vmatprep.subr.mxu0 0.0
    %696 = vmatpush2.msra.mxu0 %v332
    %697 = vmatprep.subr.mxu0 0.0
    %698 = vmatpush2.msra.mxu0 %v325
    %699 = vmatprep.subr.mxu0 0.0
    %700 = vmatpush2.msra.mxu0 %v318
    %701 = vmatprep.subr.mxu0 0.0
    %702 = vmatpush2.msra.mxu0 %v311
    %703 = vmatprep.subr.mxu0 0.0
    %704 = vmatpush2.msra.mxu0 %v304
    %705 = vmatprep.mubr.f32.mxu0 %v183
    %706 = vmatmul.mubr.f32.gmra.mxu0 %v182
    %v707 = vpop.f32.mrf.mxu0
    %v708 = vadd.f32 0.0, %v707
    %v709 = vpop.f32.mrf.mxu0
    %710 = vmatprep.mubr.f32.mxu0 %v185
    %711 = vmatmul.mubr.f32.gmra.mxu0 %v184
    %v712 = vpop.f32.mrf.mxu0
    %v713 = vadd.f32 0.0, %v712
    %v714 = vpop.f32.mrf.mxu0
    %715 = vdwg.mxu0
    %v716 = vld [vmem:[#allocation5] sm:$0xff]
    %v717 = vld [vmem:[#allocation5 + $0x8] sm:$0xff]
    %v718 = vld [vmem:[#allocation5 + $0x10] sm:$0xff]
    %v719 = vld [vmem:[#allocation5 + $0x18] sm:$0xff]
    %v720 = vld [vmem:[#allocation5 + $0x20] sm:$0xff]
    %v721 = vld [vmem:[#allocation5 + $0x28] sm:$0xff]
    %v722 = vld [vmem:[#allocation7] sm:$0xff]
    %v723 = vld [vmem:[#allocation7 + $0x8] sm:$0xff]
    %v724 = vld [vmem:[#allocation7 + $0x10] sm:$0xff]
    %v725 = vld [vmem:[#allocation7 + $0x18] sm:$0xff]
    %v726 = vld [vmem:[#allocation7 + $0x20] sm:$0xff]
    %v727 = vld [vmem:[#allocation7 + $0x28] sm:$0xff]
    %v728 = vmul.f32 %v477, %v716
    %v729 = vmul.f32 %v479, %v717
    %v730 = vmul.f32 %v554, %v718
    %v731 = vmul.f32 %v483, %v719
    %v732 = vmul.f32 %v485, %v720
    %v733 = vmul.f32 %v560, %v721
    %v734 = vmul.f32 %v631, %v722
    %v735 = vmul.f32 %v633, %v723
    %v736 = vmul.f32 %v708, %v724
    %v737 = vmul.f32 %v637, %v725
    %v738 = vmul.f32 %v639, %v726
    %v739 = vmul.f32 %v713, %v727
    %v740 = vadd.f32 %v728, %v734
    %v741 = vadd.f32 %v729, %v735
    %v742 = vadd.f32 %v730, %v736
    %v743 = vadd.f32 %v731, %v737
    %v744 = vadd.f32 %v732, %v738
    %v745 = vadd.f32 %v733, %v739
    %v746 = vlaneseq
    %v747 = vshrl.u32 %v746, 7
    %v748 = vlaneseq
    %v749 = vand.u32 %v748, 127
    %vm750 = vcmp.le.s32.totalorder %v749, %v747
    %vm751 = vcmask 523264
    %v753 = vsel %vm751, %v740, 0
    %v756 = vsel %vm751, %v742, 0
    %758 = vmatprep.subr.mxu0 0.0
    %759 = vmatpush1.xpose.msra.mxu0 0.0
    %760 = vmatprep.subr.mxu0 0.0
    %761 = vmatpush1.xpose.msra.mxu0 0.0
    %762 = vmatprep.subr.mxu0 0.0
    %763 = vmatpush1.xpose.msra.mxu0 0.0
    %764 = vmatprep.subr.mxu0 0.0
    %765 = vmatpush1.xpose.msra.mxu0 0.0
    %766 = vmatprep.subr.mxu0 0.0
    %767 = vmatpush1.xpose.msra.mxu0 0.0
    %768 = vmatprep.subr.mxu0 0.0
    %769 = vmatpush1.xpose.msra.mxu0 0.0
    %770 = vmatprep.subr.mxu0 0.0
    %771 = vmatpush1.xpose.msra.mxu0 0.0
    %772 = vmatprep.subr.mxu0 0.0
    %773 = vmatpush1.xpose.msra.mxu0 0.0
    %774 = vmatprep.subr.mxu0 0.0
    %775 = vmatpush1.xpose.msra.mxu0 0.0
    %776 = vmatprep.subr.mxu0 0.0
    %777 = vmatpush1.xpose.msra.mxu0 0.0
    %778 = vmatprep.subr.mxu0 0.0
    %779 = vmatpush1.xpose.msra.mxu0 0.0
    %780 = vmatprep.subr.mxu0 0.0
    %781 = vmatpush1.xpose.msra.mxu0 0.0
    %782 = vmatprep.subr.mxu0 0.0
    %783 = vmatpush1.xpose.msra.mxu0 0.0
    %784 = vmatprep.subr.mxu0 0.0
    %785 = vmatpush1.xpose.msra.mxu0 0.0
    %786 = vmatprep.subr.mxu0 0.0
    %787 = vmatpush1.xpose.msra.mxu0 0.0
    %788 = vmatprep.subr.mxu0 0.0
    %789 = vmatpush1.xpose.msra.mxu0 %v756
    %790 = vmatprep.subr.mxu0 0.0
    %791 = vmatpush2.xpose.msra.mxu0 0.0
    %792 = vmatprep.subr.mxu0 0.0
    %793 = vmatpush2.xpose.msra.mxu0 0.0
    %794 = vmatprep.subr.mxu0 0.0
    %795 = vmatpush2.xpose.msra.mxu0 0.0
    %796 = vmatprep.subr.mxu0 0.0
    %797 = vmatpush2.xpose.msra.mxu0 0.0
    %798 = vmatprep.subr.mxu0 0.0
    %799 = vmatpush2.xpose.msra.mxu0 0.0
    %800 = vmatprep.subr.mxu0 0.0
    %801 = vmatpush2.xpose.msra.mxu0 0.0
    %802 = vmatprep.subr.mxu0 0.0
    %803 = vmatpush2.xpose.msra.mxu0 0.0
    %804 = vmatprep.subr.mxu0 0.0
    %805 = vmatpush2.xpose.msra.mxu0 0.0
    %806 = vmatprep.subr.mxu0 0.0
    %807 = vmatpush2.xpose.msra.mxu0 0.0
    %808 = vmatprep.subr.mxu0 0.0
    %809 = vmatpush2.xpose.msra.mxu0 0.0
    %810 = vmatprep.subr.mxu0 0.0
    %811 = vmatpush2.xpose.msra.mxu0 0.0
    %812 = vmatprep.subr.mxu0 0.0
    %813 = vmatpush2.xpose.msra.mxu0 0.0
    %814 = vmatprep.subr.mxu0 0.0
    %815 = vmatpush2.xpose.msra.mxu0 0.0
    %816 = vmatprep.subr.mxu0 0.0
    %817 = vmatpush2.xpose.msra.mxu0 0.0
    %818 = vmatprep.subr.mxu0 0.0
    %819 = vmatpush2.xpose.msra.mxu0 0.0
    %820 = vmatprep.subr.mxu0 0.0
    %821 = vmatpush2.xpose.msra.mxu0 0.0
    %822 = vmatprep.mubr.f32.mxu0 0.0
    %823 = vmatmul.mubr.f32.gmra.mxu0 %v753
    %v824 = vpop.f32.mrf.mxu0
    %v825 = vadd.f32 0.0, %v824
    %v826 = vpop.f32.mrf.mxu0
    %827 = vdwg.mxu0
    %v828 = vmul.f32 %v825, 0.125
    %v829 = vsel %vm750, %v828, -1e+30
    %vm830 = vcmask 64512
    %v831 = vsel %vm830, %v829, -inf
    %832 = vmax.xlane.f32.xlu0 %v831
    %v833 = vpop.xlane.xlu0 %832
    %v834 = vsub.f32 %v829, %v833
    %v835 = vmul.f32 %v834, 1.442695
    %v836 = vpow.pop %v835
    %v837 = vsel %vm830, %v836, 0.0
    %838 = vadd.xlane.f32.xlu0 %v837
    %v839 = vpop.xlane.xlu0 %838
    %v840 = vrcp.pop %v839
    %v841 = vmul.f32 %v836, %v840
    %v843 = vsel %vm830, %v841, 0
    %845 = vmatprep.subr.mxu0 0.0
    %846 = vmatpush1.msra.mxu0 0.0
    %847 = vmatprep.subr.mxu0 0.0
    %848 = vmatpush1.msra.mxu0 0.0
    %849 = vmatprep.subr.mxu0 0.0
    %850 = vmatpush1.msra.mxu0 0.0
    %851 = vmatprep.subr.mxu0 0.0
    %852 = vmatpush1.msra.mxu0 0.0
    %853 = vmatprep.subr.mxu0 0.0
    %854 = vmatpush1.msra.mxu0 0.0
    %855 = vmatprep.subr.mxu0 0.0
    %856 = vmatpush1.msra.mxu0 0.0
    %857 = vmatprep.subr.mxu0 0.0
    %858 = vmatpush1.msra.mxu0 0.0
    %859 = vmatprep.subr.mxu0 0.0
    %860 = vmatpush1.msra.mxu0 0.0
    %861 = vmatprep.subr.mxu0 0.0
    %862 = vmatpush1.msra.mxu0 0.0
    %863 = vmatprep.subr.mxu0 0.0
    %864 = vmatpush1.msra.mxu0 0.0
    %865 = vmatprep.subr.mxu0 0.0
    %866 = vmatpush1.msra.mxu0 0.0
    %867 = vmatprep.subr.mxu0 0.0
    %868 = vmatpush1.msra.mxu0 0.0
    %869 = vmatprep.subr.mxu0 0.0
    %870 = vmatpush1.msra.mxu0 0.0
    %871 = vmatprep.subr.mxu0 0.0
    %872 = vmatpush1.msra.mxu0 0.0
    %873 = vmatprep.subr.mxu0 0.0
    %874 = vmatpush1.msra.mxu0 0.0
    %875 = vmatprep.subr.mxu0 0.0
    %876 = vmatpush1.msra.mxu0 %v556
    %877 = vmatprep.subr.mxu0 0.0
    %878 = vmatpush2.msra.mxu0 0.0
    %879 = vmatprep.subr.mxu0 0.0
    %880 = vmatpush2.msra.mxu0 0.0
    %881 = vmatprep.subr.mxu0 0.0
    %882 = vmatpush2.msra.mxu0 0.0
    %883 = vmatprep.subr.mxu0 0.0
    %884 = vmatpush2.msra.mxu0 0.0
    %885 = vmatprep.subr.mxu0 0.0
    %886 = vmatpush2.msra.mxu0 0.0
    %887 = vmatprep.subr.mxu0 0.0
    %888 = vmatpush2.msra.mxu0 0.0
    %889 = vmatprep.subr.mxu0 0.0
    %890 = vmatpush2.msra.mxu0 0.0
    %891 = vmatprep.subr.mxu0 0.0
    %892 = vmatpush2.msra.mxu0 0.0
    %893 = vmatprep.subr.mxu0 0.0
    %894 = vmatpush2.msra.mxu0 0.0
    %895 = vmatprep.subr.mxu0 0.0
    %896 = vmatpush2.msra.mxu0 0.0
    %897 = vmatprep.subr.mxu0 0.0
    %898 = vmatpush2.msra.mxu0 0.0
    %899 = vmatprep.subr.mxu0 0.0
    %900 = vmatpush2.msra.mxu0 0.0
    %901 = vmatprep.subr.mxu0 0.0
    %902 = vmatpush2.msra.mxu0 0.0
    %903 = vmatprep.subr.mxu0 0.0
    %904 = vmatpush2.msra.mxu0 0.0
    %905 = vmatprep.subr.mxu0 0.0
    %906 = vmatpush2.msra.mxu0 0.0
    %907 = vmatprep.subr.mxu0 0.0
    %908 = vmatpush2.msra.mxu0 0.0
    %909 = vmatprep.mubr.f32.mxu0 0.0
    %910 = vmatmul.mubr.f32.gmra.mxu0 %v843
    %v911 = vpop.f32.mrf.mxu0
    %v912 = vadd.f32 0.0, %v911
    %v913 = vpop.f32.mrf.mxu0
    %914 = vdwg.mxu0
    %915 = vrot.lane.b32.xlu0 %v740, 64
    %v916 = vpop.permute.xlu0 %915
    %v917 = vsel %vm751, %v916, 0
    %919 = vmatprep.subr.mxu0 0.0
    %920 = vmatpush1.xpose.msra.mxu0 0.0
    %921 = vmatprep.subr.mxu0 0.0
    %922 = vmatpush1.xpose.msra.mxu0 0.0
    %923 = vmatprep.subr.mxu0 0.0
    %924 = vmatpush1.xpose.msra.mxu0 0.0
    %925 = vmatprep.subr.mxu0 0.0
    %926 = vmatpush1.xpose.msra.mxu0 0.0
    %927 = vmatprep.subr.mxu0 0.0
    %928 = vmatpush1.xpose.msra.mxu0 0.0
    %929 = vmatprep.subr.mxu0 0.0
    %930 = vmatpush1.xpose.msra.mxu0 0.0
    %931 = vmatprep.subr.mxu0 0.0
    %932 = vmatpush1.xpose.msra.mxu0 0.0
    %933 = vmatprep.subr.mxu0 0.0
    %934 = vmatpush1.xpose.msra.mxu0 0.0
    %935 = vmatprep.subr.mxu0 0.0
    %936 = vmatpush1.xpose.msra.mxu0 0.0
    %937 = vmatprep.subr.mxu0 0.0
    %938 = vmatpush1.xpose.msra.mxu0 0.0
    %939 = vmatprep.subr.mxu0 0.0
    %940 = vmatpush1.xpose.msra.mxu0 0.0
    %941 = vmatprep.subr.mxu0 0.0
    %942 = vmatpush1.xpose.msra.mxu0 0.0
    %943 = vmatprep.subr.mxu0 0.0
    %944 = vmatpush1.xpose.msra.mxu0 0.0
    %945 = vmatprep.subr.mxu0 0.0
    %946 = vmatpush1.xpose.msra.mxu0 0.0
    %947 = vmatprep.subr.mxu0 0.0
    %948 = vmatpush1.xpose.msra.mxu0 0.0
    %949 = vmatprep.subr.mxu0 0.0
    %950 = vmatpush1.xpose.msra.mxu0 %v756
    %951 = vmatprep.subr.mxu0 0.0
    %952 = vmatpush2.xpose.msra.mxu0 0.0
    %953 = vmatprep.subr.mxu0 0.0
    %954 = vmatpush2.xpose.msra.mxu0 0.0
    %955 = vmatprep.subr.mxu0 0.0
    %956 = vmatpush2.xpose.msra.mxu0 0.0
    %957 = vmatprep.subr.mxu0 0.0
    %958 = vmatpush2.xpose.msra.mxu0 0.0
    %959 = vmatprep.subr.mxu0 0.0
    %960 = vmatpush2.xpose.msra.mxu0 0.0
    %961 = vmatprep.subr.mxu0 0.0
    %962 = vmatpush2.xpose.msra.mxu0 0.0
    %963 = vmatprep.subr.mxu0 0.0
    %964 = vmatpush2.xpose.msra.mxu0 0.0
    %965 = vmatprep.subr.mxu0 0.0
    %966 = vmatpush2.xpose.msra.mxu0 0.0
    %967 = vmatprep.subr.mxu0 0.0
    %968 = vmatpush2.xpose.msra.mxu0 0.0
    %969 = vmatprep.subr.mxu0 0.0
    %970 = vmatpush2.xpose.msra.mxu0 0.0
    %971 = vmatprep.subr.mxu0 0.0
    %972 = vmatpush2.xpose.msra.mxu0 0.0
    %973 = vmatprep.subr.mxu0 0.0
    %974 = vmatpush2.xpose.msra.mxu0 0.0
    %975 = vmatprep.subr.mxu0 0.0
    %976 = vmatpush2.xpose.msra.mxu0 0.0
    %977 = vmatprep.subr.mxu0 0.0
    %978 = vmatpush2.xpose.msra.mxu0 0.0
    %979 = vmatprep.subr.mxu0 0.0
    %980 = vmatpush2.xpose.msra.mxu0 0.0
    %981 = vmatprep.subr.mxu0 0.0
    %982 = vmatpush2.xpose.msra.mxu0 0.0
    %983 = vmatprep.mubr.f32.mxu0 0.0
    %984 = vmatmul.mubr.f32.gmra.mxu0 %v917
    %v985 = vpop.f32.mrf.mxu0
    %v986 = vadd.f32 0.0, %v985
    %v987 = vpop.f32.mrf.mxu0
    %988 = vdwg.mxu0
    %v989 = vmul.f32 %v986, 0.125
    %v990 = vsel %vm750, %v989, -1e+30
    %v991 = vsel %vm830, %v990, -inf
    %992 = vmax.xlane.f32.xlu0 %v991
    %v993 = vpop.xlane.xlu0 %992
    %v994 = vsub.f32 %v990, %v993
    %v995 = vmul.f32 %v994, 1.442695
    %v996 = vpow.pop %v995
    %v997 = vsel %vm830, %v996, 0.0
    %998 = vadd.xlane.f32.xlu0 %v997
    %v999 = vpop.xlane.xlu0 %998
    %v1000 = vrcp.pop %v999
    %v1001 = vmul.f32 %v996, %v1000
    %v1003 = vsel %vm830, %v1001, 0
    %1005 = vmatprep.subr.mxu0 0.0
    %1006 = vmatpush1.msra.mxu0 0.0
    %1007 = vmatprep.subr.mxu0 0.0
    %1008 = vmatpush1.msra.mxu0 0.0
    %1009 = vmatprep.subr.mxu0 0.0
    %1010 = vmatpush1.msra.mxu0 0.0
    %1011 = vmatprep.subr.mxu0 0.0
    %1012 = vmatpush1.msra.mxu0 0.0
    %1013 = vmatprep.subr.mxu0 0.0
    %1014 = vmatpush1.msra.mxu0 0.0
    %1015 = vmatprep.subr.mxu0 0.0
    %1016 = vmatpush1.msra.mxu0 0.0
    %1017 = vmatprep.subr.mxu0 0.0
    %1018 = vmatpush1.msra.mxu0 0.0
    %1019 = vmatprep.subr.mxu0 0.0
    %1020 = vmatpush1.msra.mxu0 0.0
    %1021 = vmatprep.subr.mxu0 0.0
    %1022 = vmatpush1.msra.mxu0 0.0
    %1023 = vmatprep.subr.mxu0 0.0
    %1024 = vmatpush1.msra.mxu0 0.0
    %1025 = vmatprep.subr.mxu0 0.0
    %1026 = vmatpush1.msra.mxu0 0.0
    %1027 = vmatprep.subr.mxu0 0.0
    %1028 = vmatpush1.msra.mxu0 0.0
    %1029 = vmatprep.subr.mxu0 0.0
    %1030 = vmatpush1.msra.mxu0 0.0
    %1031 = vmatprep.subr.mxu0 0.0
    %1032 = vmatpush1.msra.mxu0 0.0
    %1033 = vmatprep.subr.mxu0 0.0
    %1034 = vmatpush1.msra.mxu0 0.0
    %1035 = vmatprep.subr.mxu0 0.0
    %1036 = vmatpush1.msra.mxu0 %v556
    %1037 = vmatprep.subr.mxu0 0.0
    %1038 = vmatpush2.msra.mxu0 0.0
    %1039 = vmatprep.subr.mxu0 0.0
    %1040 = vmatpush2.msra.mxu0 0.0
    %1041 = vmatprep.subr.mxu0 0.0
    %1042 = vmatpush2.msra.mxu0 0.0
    %1043 = vmatprep.subr.mxu0 0.0
    %1044 = vmatpush2.msra.mxu0 0.0
    %1045 = vmatprep.subr.mxu0 0.0
    %1046 = vmatpush2.msra.mxu0 0.0
    %1047 = vmatprep.subr.mxu0 0.0
    %1048 = vmatpush2.msra.mxu0 0.0
    %1049 = vmatprep.subr.mxu0 0.0
    %1050 = vmatpush2.msra.mxu0 0.0
    %1051 = vmatprep.subr.mxu0 0.0
    %1052 = vmatpush2.msra.mxu0 0.0
    %1053 = vmatprep.subr.mxu0 0.0
    %1054 = vmatpush2.msra.mxu0 0.0
    %1055 = vmatprep.subr.mxu0 0.0
    %1056 = vmatpush2.msra.mxu0 0.0
    %1057 = vmatprep.subr.mxu0 0.0
    %1058 = vmatpush2.msra.mxu0 0.0
    %1059 = vmatprep.subr.mxu0 0.0
    %1060 = vmatpush2.msra.mxu0 0.0
    %1061 = vmatprep.subr.mxu0 0.0
    %1062 = vmatpush2.msra.mxu0 0.0
    %1063 = vmatprep.subr.mxu0 0.0
    %1064 = vmatpush2.msra.mxu0 0.0
    %1065 = vmatprep.subr.mxu0 0.0
    %1066 = vmatpush2.msra.mxu0 0.0
    %1067 = vmatprep.subr.mxu0 0.0
    %1068 = vmatpush2.msra.mxu0 0.0
    %1069 = vmatprep.mubr.f32.mxu0 0.0
    %1070 = vmatmul.mubr.f32.gmra.mxu0 %v1003
    %v1071 = vpop.f32.mrf.mxu0
    %v1072 = vadd.f32 0.0, %v1071
    %v1073 = vpop.f32.mrf.mxu0
    %1074 = vdwg.mxu0
    %1075 = vrot.lane.b32.xlu0 %v742, 64
    %v1076 = vpop.permute.xlu0 %1075
    %v1078 = vsel %vm751, %v741, 0
    %v1080 = vsel %vm751, %v1076, 0
    %1082 = vmatprep.subr.mxu0 0.0
    %1083 = vmatpush1.xpose.msra.mxu0 0.0
    %1084 = vmatprep.subr.mxu0 0.0
    %1085 = vmatpush1.xpose.msra.mxu0 0.0
    %1086 = vmatprep.subr.mxu0 0.0
    %1087 = vmatpush1.xpose.msra.mxu0 0.0
    %1088 = vmatprep.subr.mxu0 0.0
    %1089 = vmatpush1.xpose.msra.mxu0 0.0
    %1090 = vmatprep.subr.mxu0 0.0
    %1091 = vmatpush1.xpose.msra.mxu0 0.0
    %1092 = vmatprep.subr.mxu0 0.0
    %1093 = vmatpush1.xpose.msra.mxu0 0.0
    %1094 = vmatprep.subr.mxu0 0.0
    %1095 = vmatpush1.xpose.msra.mxu0 0.0
    %1096 = vmatprep.subr.mxu0 0.0
    %1097 = vmatpush1.xpose.msra.mxu0 0.0
    %1098 = vmatprep.subr.mxu0 0.0
    %1099 = vmatpush1.xpose.msra.mxu0 0.0
    %1100 = vmatprep.subr.mxu0 0.0
    %1101 = vmatpush1.xpose.msra.mxu0 0.0
    %1102 = vmatprep.subr.mxu0 0.0
    %1103 = vmatpush1.xpose.msra.mxu0 0.0
    %1104 = vmatprep.subr.mxu0 0.0
    %1105 = vmatpush1.xpose.msra.mxu0 0.0
    %1106 = vmatprep.subr.mxu0 0.0
    %1107 = vmatpush1.xpose.msra.mxu0 0.0
    %1108 = vmatprep.subr.mxu0 0.0
    %1109 = vmatpush1.xpose.msra.mxu0 0.0
    %1110 = vmatprep.subr.mxu0 0.0
    %1111 = vmatpush1.xpose.msra.mxu0 0.0
    %1112 = vmatprep.subr.mxu0 0.0
    %1113 = vmatpush1.xpose.msra.mxu0 %v1080
    %1114 = vmatprep.subr.mxu0 0.0
    %1115 = vmatpush2.xpose.msra.mxu0 0.0
    %1116 = vmatprep.subr.mxu0 0.0
    %1117 = vmatpush2.xpose.msra.mxu0 0.0
    %1118 = vmatprep.subr.mxu0 0.0
    %1119 = vmatpush2.xpose.msra.mxu0 0.0
    %1120 = vmatprep.subr.mxu0 0.0
    %1121 = vmatpush2.xpose.msra.mxu0 0.0
    %1122 = vmatprep.subr.mxu0 0.0
    %1123 = vmatpush2.xpose.msra.mxu0 0.0
    %1124 = vmatprep.subr.mxu0 0.0
    %1125 = vmatpush2.xpose.msra.mxu0 0.0
    %1126 = vmatprep.subr.mxu0 0.0
    %1127 = vmatpush2.xpose.msra.mxu0 0.0
    %1128 = vmatprep.subr.mxu0 0.0
    %1129 = vmatpush2.xpose.msra.mxu0 0.0
    %1130 = vmatprep.subr.mxu0 0.0
    %1131 = vmatpush2.xpose.msra.mxu0 0.0
    %1132 = vmatprep.subr.mxu0 0.0
    %1133 = vmatpush2.xpose.msra.mxu0 0.0
    %1134 = vmatprep.subr.mxu0 0.0
    %1135 = vmatpush2.xpose.msra.mxu0 0.0
    %1136 = vmatprep.subr.mxu0 0.0
    %1137 = vmatpush2.xpose.msra.mxu0 0.0
    %1138 = vmatprep.subr.mxu0 0.0
    %1139 = vmatpush2.xpose.msra.mxu0 0.0
    %1140 = vmatprep.subr.mxu0 0.0
    %1141 = vmatpush2.xpose.msra.mxu0 0.0
    %1142 = vmatprep.subr.mxu0 0.0
    %1143 = vmatpush2.xpose.msra.mxu0 0.0
    %1144 = vmatprep.subr.mxu0 0.0
    %1145 = vmatpush2.xpose.msra.mxu0 0.0
    %1146 = vmatprep.mubr.f32.mxu0 0.0
    %1147 = vmatmul.mubr.f32.gmra.mxu0 %v1078
    %v1148 = vpop.f32.mrf.mxu0
    %v1149 = vadd.f32 0.0, %v1148
    %v1150 = vpop.f32.mrf.mxu0
    %1151 = vdwg.mxu0
    %v1152 = vmul.f32 %v1149, 0.125
    %v1153 = vsel %vm750, %v1152, -1e+30
    %v1154 = vsel %vm830, %v1153, -inf
    %1155 = vmax.xlane.f32.xlu0 %v1154
    %v1156 = vpop.xlane.xlu0 %1155
    %v1157 = vsub.f32 %v1153, %v1156
    %v1158 = vmul.f32 %v1157, 1.442695
    %v1159 = vpow.pop %v1158
    %v1160 = vsel %vm830, %v1159, 0.0
    %1161 = vadd.xlane.f32.xlu0 %v1160
    %v1162 = vpop.xlane.xlu0 %1161
    %v1163 = vrcp.pop %v1162
    %v1164 = vmul.f32 %v1159, %v1163
    %1166 = vrot.lane.b32.xlu0 %v556, 64
    %v1167 = vpop.permute.xlu0 %1166
    %v1170 = vsel %vm830, %v1164, 0
    %1172 = vmatprep.subr.mxu0 0.0
    %1173 = vmatpush1.msra.mxu0 0.0
    %1174 = vmatprep.subr.mxu0 0.0
    %1175 = vmatpush1.msra.mxu0 0.0
    %1176 = vmatprep.subr.mxu0 0.0
    %1177 = vmatpush1.msra.mxu0 0.0
    %1178 = vmatprep.subr.mxu0 0.0
    %1179 = vmatpush1.msra.mxu0 0.0
    %1180 = vmatprep.subr.mxu0 0.0
    %1181 = vmatpush1.msra.mxu0 0.0
    %1182 = vmatprep.subr.mxu0 0.0
    %1183 = vmatpush1.msra.mxu0 0.0
    %1184 = vmatprep.subr.mxu0 0.0
    %1185 = vmatpush1.msra.mxu0 0.0
    %1186 = vmatprep.subr.mxu0 0.0
    %1187 = vmatpush1.msra.mxu0 0.0
    %1188 = vmatprep.subr.mxu0 0.0
    %1189 = vmatpush1.msra.mxu0 0.0
    %1190 = vmatprep.subr.mxu0 0.0
    %1191 = vmatpush1.msra.mxu0 0.0
    %1192 = vmatprep.subr.mxu0 0.0
    %1193 = vmatpush1.msra.mxu0 0.0
    %1194 = vmatprep.subr.mxu0 0.0
    %1195 = vmatpush1.msra.mxu0 0.0
    %1196 = vmatprep.subr.mxu0 0.0
    %1197 = vmatpush1.msra.mxu0 0.0
    %1198 = vmatprep.subr.mxu0 0.0
    %1199 = vmatpush1.msra.mxu0 0.0
    %1200 = vmatprep.subr.mxu0 0.0
    %1201 = vmatpush1.msra.mxu0 0.0
    %1202 = vmatprep.subr.mxu0 0.0
    %1203 = vmatpush1.msra.mxu0 %v1167
    %1204 = vmatprep.subr.mxu0 0.0
    %1205 = vmatpush2.msra.mxu0 0.0
    %1206 = vmatprep.subr.mxu0 0.0
    %1207 = vmatpush2.msra.mxu0 0.0
    %1208 = vmatprep.subr.mxu0 0.0
    %1209 = vmatpush2.msra.mxu0 0.0
    %1210 = vmatprep.subr.mxu0 0.0
    %1211 = vmatpush2.msra.mxu0 0.0
    %1212 = vmatprep.subr.mxu0 0.0
    %1213 = vmatpush2.msra.mxu0 0.0
    %1214 = vmatprep.subr.mxu0 0.0
    %1215 = vmatpush2.msra.mxu0 0.0
    %1216 = vmatprep.subr.mxu0 0.0
    %1217 = vmatpush2.msra.mxu0 0.0
    %1218 = vmatprep.subr.mxu0 0.0
    %1219 = vmatpush2.msra.mxu0 0.0
    %1220 = vmatprep.subr.mxu0 0.0
    %1221 = vmatpush2.msra.mxu0 0.0
    %1222 = vmatprep.subr.mxu0 0.0
    %1223 = vmatpush2.msra.mxu0 0.0
    %1224 = vmatprep.subr.mxu0 0.0
    %1225 = vmatpush2.msra.mxu0 0.0
    %1226 = vmatprep.subr.mxu0 0.0
    %1227 = vmatpush2.msra.mxu0 0.0
    %1228 = vmatprep.subr.mxu0 0.0
    %1229 = vmatpush2.msra.mxu0 0.0
    %1230 = vmatprep.subr.mxu0 0.0
    %1231 = vmatpush2.msra.mxu0 0.0
    %1232 = vmatprep.subr.mxu0 0.0
    %1233 = vmatpush2.msra.mxu0 0.0
    %1234 = vmatprep.subr.mxu0 0.0
    %1235 = vmatpush2.msra.mxu0 0.0
    %1236 = vmatprep.mubr.f32.mxu0 0.0
    %1237 = vmatmul.mubr.f32.gmra.mxu0 %v1170
    %v1238 = vpop.f32.mrf.mxu0
    %v1239 = vadd.f32 0.0, %v1238
    %v1240 = vpop.f32.mrf.mxu0
    %1241 = vdwg.mxu0
    %1242 = vrot.lane.b32.xlu0 %v741, 64
    %v1243 = vpop.permute.xlu0 %1242
    %v1244 = vsel %vm751, %v1243, 0
    %1246 = vmatprep.subr.mxu0 0.0
    %1247 = vmatpush1.xpose.msra.mxu0 0.0
    %1248 = vmatprep.subr.mxu0 0.0
    %1249 = vmatpush1.xpose.msra.mxu0 0.0
    %1250 = vmatprep.subr.mxu0 0.0
    %1251 = vmatpush1.xpose.msra.mxu0 0.0
    %1252 = vmatprep.subr.mxu0 0.0
    %1253 = vmatpush1.xpose.msra.mxu0 0.0
    %1254 = vmatprep.subr.mxu0 0.0
    %1255 = vmatpush1.xpose.msra.mxu0 0.0
    %1256 = vmatprep.subr.mxu0 0.0
    %1257 = vmatpush1.xpose.msra.mxu0 0.0
    %1258 = vmatprep.subr.mxu0 0.0
    %1259 = vmatpush1.xpose.msra.mxu0 0.0
    %1260 = vmatprep.subr.mxu0 0.0
    %1261 = vmatpush1.xpose.msra.mxu0 0.0
    %1262 = vmatprep.subr.mxu0 0.0
    %1263 = vmatpush1.xpose.msra.mxu0 0.0
    %1264 = vmatprep.subr.mxu0 0.0
    %1265 = vmatpush1.xpose.msra.mxu0 0.0
    %1266 = vmatprep.subr.mxu0 0.0
    %1267 = vmatpush1.xpose.msra.mxu0 0.0
    %1268 = vmatprep.subr.mxu0 0.0
    %1269 = vmatpush1.xpose.msra.mxu0 0.0
    %1270 = vmatprep.subr.mxu0 0.0
    %1271 = vmatpush1.xpose.msra.mxu0 0.0
    %1272 = vmatprep.subr.mxu0 0.0
    %1273 = vmatpush1.xpose.msra.mxu0 0.0
    %1274 = vmatprep.subr.mxu0 0.0
    %1275 = vmatpush1.xpose.msra.mxu0 0.0
    %1276 = vmatprep.subr.mxu0 0.0
    %1277 = vmatpush1.xpose.msra.mxu0 %v1080
    %1278 = vmatprep.subr.mxu0 0.0
    %1279 = vmatpush2.xpose.msra.mxu0 0.0
    %1280 = vmatprep.subr.mxu0 0.0
    %1281 = vmatpush2.xpose.msra.mxu0 0.0
    %1282 = vmatprep.subr.mxu0 0.0
    %1283 = vmatpush2.xpose.msra.mxu0 0.0
    %1284 = vmatprep.subr.mxu0 0.0
    %1285 = vmatpush2.xpose.msra.mxu0 0.0
    %1286 = vmatprep.subr.mxu0 0.0
    %1287 = vmatpush2.xpose.msra.mxu0 0.0
    %1288 = vmatprep.subr.mxu0 0.0
    %1289 = vmatpush2.xpose.msra.mxu0 0.0
    %1290 = vmatprep.subr.mxu0 0.0
    %1291 = vmatpush2.xpose.msra.mxu0 0.0
    %1292 = vmatprep.subr.mxu0 0.0
    %1293 = vmatpush2.xpose.msra.mxu0 0.0
    %1294 = vmatprep.subr.mxu0 0.0
    %1295 = vmatpush2.xpose.msra.mxu0 0.0
    %1296 = vmatprep.subr.mxu0 0.0
    %1297 = vmatpush2.xpose.msra.mxu0 0.0
    %1298 = vmatprep.subr.mxu0 0.0
    %1299 = vmatpush2.xpose.msra.mxu0 0.0
    %1300 = vmatprep.subr.mxu0 0.0
    %1301 = vmatpush2.xpose.msra.mxu0 0.0
    %1302 = vmatprep.subr.mxu0 0.0
    %1303 = vmatpush2.xpose.msra.mxu0 0.0
    %1304 = vmatprep.subr.mxu0 0.0
    %1305 = vmatpush2.xpose.msra.mxu0 0.0
    %1306 = vmatprep.subr.mxu0 0.0
    %1307 = vmatpush2.xpose.msra.mxu0 0.0
    %1308 = vmatprep.subr.mxu0 0.0
    %1309 = vmatpush2.xpose.msra.mxu0 0.0
    %1310 = vmatprep.mubr.f32.mxu0 0.0
    %1311 = vmatmul.mubr.f32.gmra.mxu0 %v1244
    %v1312 = vpop.f32.mrf.mxu0
    %v1313 = vadd.f32 0.0, %v1312
    %v1314 = vpop.f32.mrf.mxu0
    %1315 = vdwg.mxu0
    %v1316 = vmul.f32 %v1313, 0.125
    %v1317 = vsel %vm750, %v1316, -1e+30
    %v1318 = vsel %vm830, %v1317, -inf
    %1319 = vmax.xlane.f32.xlu0 %v1318
    %v1320 = vpop.xlane.xlu0 %1319
    %v1321 = vsub.f32 %v1317, %v1320
    %v1322 = vmul.f32 %v1321, 1.442695
    %v1323 = vpow.pop %v1322
    %v1324 = vsel %vm830, %v1323, 0.0
    %1325 = vadd.xlane.f32.xlu0 %v1324
    %v1326 = vpop.xlane.xlu0 %1325
    %v1327 = vrcp.pop %v1326
    %v1328 = vmul.f32 %v1323, %v1327
    %v1330 = vsel %vm830, %v1328, 0
    %1332 = vmatprep.subr.mxu0 0.0
    %1333 = vmatpush1.msra.mxu0 0.0
    %1334 = vmatprep.subr.mxu0 0.0
    %1335 = vmatpush1.msra.mxu0 0.0
    %1336 = vmatprep.subr.mxu0 0.0
    %1337 = vmatpush1.msra.mxu0 0.0
    %1338 = vmatprep.subr.mxu0 0.0
    %1339 = vmatpush1.msra.mxu0 0.0
    %1340 = vmatprep.subr.mxu0 0.0
    %1341 = vmatpush1.msra.mxu0 0.0
    %1342 = vmatprep.subr.mxu0 0.0
    %1343 = vmatpush1.msra.mxu0 0.0
    %1344 = vmatprep.subr.mxu0 0.0
    %1345 = vmatpush1.msra.mxu0 0.0
    %1346 = vmatprep.subr.mxu0 0.0
    %1347 = vmatpush1.msra.mxu0 0.0
    %1348 = vmatprep.subr.mxu0 0.0
    %1349 = vmatpush1.msra.mxu0 0.0
    %1350 = vmatprep.subr.mxu0 0.0
    %1351 = vmatpush1.msra.mxu0 0.0
    %1352 = vmatprep.subr.mxu0 0.0
    %1353 = vmatpush1.msra.mxu0 0.0
    %1354 = vmatprep.subr.mxu0 0.0
    %1355 = vmatpush1.msra.mxu0 0.0
    %1356 = vmatprep.subr.mxu0 0.0
    %1357 = vmatpush1.msra.mxu0 0.0
    %1358 = vmatprep.subr.mxu0 0.0
    %1359 = vmatpush1.msra.mxu0 0.0
    %1360 = vmatprep.subr.mxu0 0.0
    %1361 = vmatpush1.msra.mxu0 0.0
    %1362 = vmatprep.subr.mxu0 0.0
    %1363 = vmatpush1.msra.mxu0 %v1167
    %1364 = vmatprep.subr.mxu0 0.0
    %1365 = vmatpush2.msra.mxu0 0.0
    %1366 = vmatprep.subr.mxu0 0.0
    %1367 = vmatpush2.msra.mxu0 0.0
    %1368 = vmatprep.subr.mxu0 0.0
    %1369 = vmatpush2.msra.mxu0 0.0
    %1370 = vmatprep.subr.mxu0 0.0
    %1371 = vmatpush2.msra.mxu0 0.0
    %1372 = vmatprep.subr.mxu0 0.0
    %1373 = vmatpush2.msra.mxu0 0.0
    %1374 = vmatprep.subr.mxu0 0.0
    %1375 = vmatpush2.msra.mxu0 0.0
    %1376 = vmatprep.subr.mxu0 0.0
    %1377 = vmatpush2.msra.mxu0 0.0
    %1378 = vmatprep.subr.mxu0 0.0
    %1379 = vmatpush2.msra.mxu0 0.0
    %1380 = vmatprep.subr.mxu0 0.0
    %1381 = vmatpush2.msra.mxu0 0.0
    %1382 = vmatprep.subr.mxu0 0.0
    %1383 = vmatpush2.msra.mxu0 0.0
    %1384 = vmatprep.subr.mxu0 0.0
    %1385 = vmatpush2.msra.mxu0 0.0
    %1386 = vmatprep.subr.mxu0 0.0
    %1387 = vmatpush2.msra.mxu0 0.0
    %1388 = vmatprep.subr.mxu0 0.0
    %1389 = vmatpush2.msra.mxu0 0.0
    %1390 = vmatprep.subr.mxu0 0.0
    %1391 = vmatpush2.msra.mxu0 0.0
    %1392 = vmatprep.subr.mxu0 0.0
    %1393 = vmatpush2.msra.mxu0 0.0
    %1394 = vmatprep.subr.mxu0 0.0
    %1395 = vmatpush2.msra.mxu0 0.0
    %1396 = vmatprep.mubr.f32.mxu0 0.0
    %1397 = vmatmul.mubr.f32.gmra.mxu0 %v1330
    %v1398 = vpop.f32.mrf.mxu0
    %v1399 = vadd.f32 0.0, %v1398
    %v1400 = vpop.f32.mrf.mxu0
    %1401 = vdwg.mxu0
    %1403 = vrot.lane.b32.xlu0 %v1072, 64
    %v1404 = vpop.permute.xlu0 %1403
    %1407 = vrot.lane.b32.xlu0 %v1399, 64
    %v1408 = vpop.permute.xlu0 %1407
    %v1410 = vsel %vm751, %v912, %v1404
    %v1411 = vsel %vm751, %v1239, %v1408
    %v1413 = vsel %vm751, %v743, 0
    %v1416 = vsel %vm751, %v745, 0
    %1418 = vmatprep.subr.mxu0 0.0
    %1419 = vmatpush1.xpose.msra.mxu0 0.0
    %1420 = vmatprep.subr.mxu0 0.0
    %1421 = vmatpush1.xpose.msra.mxu0 0.0
    %1422 = vmatprep.subr.mxu0 0.0
    %1423 = vmatpush1.xpose.msra.mxu0 0.0
    %1424 = vmatprep.subr.mxu0 0.0
    %1425 = vmatpush1.xpose.msra.mxu0 0.0
    %1426 = vmatprep.subr.mxu0 0.0
    %1427 = vmatpush1.xpose.msra.mxu0 0.0
    %1428 = vmatprep.subr.mxu0 0.0
    %1429 = vmatpush1.xpose.msra.mxu0 0.0
    %1430 = vmatprep.subr.mxu0 0.0
    %1431 = vmatpush1.xpose.msra.mxu0 0.0
    %1432 = vmatprep.subr.mxu0 0.0
    %1433 = vmatpush1.xpose.msra.mxu0 0.0
    %1434 = vmatprep.subr.mxu0 0.0
    %1435 = vmatpush1.xpose.msra.mxu0 0.0
    %1436 = vmatprep.subr.mxu0 0.0
    %1437 = vmatpush1.xpose.msra.mxu0 0.0
    %1438 = vmatprep.subr.mxu0 0.0
    %1439 = vmatpush1.xpose.msra.mxu0 0.0
    %1440 = vmatprep.subr.mxu0 0.0
    %1441 = vmatpush1.xpose.msra.mxu0 0.0
    %1442 = vmatprep.subr.mxu0 0.0
    %1443 = vmatpush1.xpose.msra.mxu0 0.0
    %1444 = vmatprep.subr.mxu0 0.0
    %1445 = vmatpush1.xpose.msra.mxu0 0.0
    %1446 = vmatprep.subr.mxu0 0.0
    %1447 = vmatpush1.xpose.msra.mxu0 0.0
    %1448 = vmatprep.subr.mxu0 0.0
    %1449 = vmatpush1.xpose.msra.mxu0 %v1416
    %1450 = vmatprep.subr.mxu0 0.0
    %1451 = vmatpush2.xpose.msra.mxu0 0.0
    %1452 = vmatprep.subr.mxu0 0.0
    %1453 = vmatpush2.xpose.msra.mxu0 0.0
    %1454 = vmatprep.subr.mxu0 0.0
    %1455 = vmatpush2.xpose.msra.mxu0 0.0
    %1456 = vmatprep.subr.mxu0 0.0
    %1457 = vmatpush2.xpose.msra.mxu0 0.0
    %1458 = vmatprep.subr.mxu0 0.0
    %1459 = vmatpush2.xpose.msra.mxu0 0.0
    %1460 = vmatprep.subr.mxu0 0.0
    %1461 = vmatpush2.xpose.msra.mxu0 0.0
    %1462 = vmatprep.subr.mxu0 0.0
    %1463 = vmatpush2.xpose.msra.mxu0 0.0
    %1464 = vmatprep.subr.mxu0 0.0
    %1465 = vmatpush2.xpose.msra.mxu0 0.0
    %1466 = vmatprep.subr.mxu0 0.0
    %1467 = vmatpush2.xpose.msra.mxu0 0.0
    %1468 = vmatprep.subr.mxu0 0.0
    %1469 = vmatpush2.xpose.msra.mxu0 0.0
    %1470 = vmatprep.subr.mxu0 0.0
    %1471 = vmatpush2.xpose.msra.mxu0 0.0
    %1472 = vmatprep.subr.mxu0 0.0
    %1473 = vmatpush2.xpose.msra.mxu0 0.0
    %1474 = vmatprep.subr.mxu0 0.0
    %1475 = vmatpush2.xpose.msra.mxu0 0.0
    %1476 = vmatprep.subr.mxu0 0.0
    %1477 = vmatpush2.xpose.msra.mxu0 0.0
    %1478 = vmatprep.subr.mxu0 0.0
    %1479 = vmatpush2.xpose.msra.mxu0 0.0
    %1480 = vmatprep.subr.mxu0 0.0
    %1481 = vmatpush2.xpose.msra.mxu0 0.0
    %1482 = vmatprep.mubr.f32.mxu0 0.0
    %1483 = vmatmul.mubr.f32.gmra.mxu0 %v1413
    %v1484 = vpop.f32.mrf.mxu0
    %v1485 = vadd.f32 0.0, %v1484
    %v1486 = vpop.f32.mrf.mxu0
    %1487 = vdwg.mxu0
    %v1488 = vmul.f32 %v1485, 0.125
    %v1489 = vsel %vm750, %v1488, -1e+30
    %v1490 = vsel %vm830, %v1489, -inf
    %1491 = vmax.xlane.f32.xlu0 %v1490
    %v1492 = vpop.xlane.xlu0 %1491
    %v1493 = vsub.f32 %v1489, %v1492
    %v1494 = vmul.f32 %v1493, 1.442695
    %v1495 = vpow.pop %v1494
    %v1496 = vsel %vm830, %v1495, 0.0
    %1497 = vadd.xlane.f32.xlu0 %v1496
    %v1498 = vpop.xlane.xlu0 %1497
    %v1499 = vrcp.pop %v1498
    %v1500 = vmul.f32 %v1495, %v1499
    %v1502 = vsel %vm830, %v1500, 0
    %1504 = vmatprep.subr.mxu0 0.0
    %1505 = vmatpush1.msra.mxu0 0.0
    %1506 = vmatprep.subr.mxu0 0.0
    %1507 = vmatpush1.msra.mxu0 0.0
    %1508 = vmatprep.subr.mxu0 0.0
    %1509 = vmatpush1.msra.mxu0 0.0
    %1510 = vmatprep.subr.mxu0 0.0
    %1511 = vmatpush1.msra.mxu0 0.0
    %1512 = vmatprep.subr.mxu0 0.0
    %1513 = vmatpush1.msra.mxu0 0.0
    %1514 = vmatprep.subr.mxu0 0.0
    %1515 = vmatpush1.msra.mxu0 0.0
    %1516 = vmatprep.subr.mxu0 0.0
    %1517 = vmatpush1.msra.mxu0 0.0
    %1518 = vmatprep.subr.mxu0 0.0
    %1519 = vmatpush1.msra.mxu0 0.0
    %1520 = vmatprep.subr.mxu0 0.0
    %1521 = vmatpush1.msra.mxu0 0.0
    %1522 = vmatprep.subr.mxu0 0.0
    %1523 = vmatpush1.msra.mxu0 0.0
    %1524 = vmatprep.subr.mxu0 0.0
    %1525 = vmatpush1.msra.mxu0 0.0
    %1526 = vmatprep.subr.mxu0 0.0
    %1527 = vmatpush1.msra.mxu0 0.0
    %1528 = vmatprep.subr.mxu0 0.0
    %1529 = vmatpush1.msra.mxu0 0.0
    %1530 = vmatprep.subr.mxu0 0.0
    %1531 = vmatpush1.msra.mxu0 0.0
    %1532 = vmatprep.subr.mxu0 0.0
    %1533 = vmatpush1.msra.mxu0 0.0
    %1534 = vmatprep.subr.mxu0 0.0
    %1535 = vmatpush1.msra.mxu0 %v562
    %1536 = vmatprep.subr.mxu0 0.0
    %1537 = vmatpush2.msra.mxu0 0.0
    %1538 = vmatprep.subr.mxu0 0.0
    %1539 = vmatpush2.msra.mxu0 0.0
    %1540 = vmatprep.subr.mxu0 0.0
    %1541 = vmatpush2.msra.mxu0 0.0
    %1542 = vmatprep.subr.mxu0 0.0
    %1543 = vmatpush2.msra.mxu0 0.0
    %1544 = vmatprep.subr.mxu0 0.0
    %1545 = vmatpush2.msra.mxu0 0.0
    %1546 = vmatprep.subr.mxu0 0.0
    %1547 = vmatpush2.msra.mxu0 0.0
    %1548 = vmatprep.subr.mxu0 0.0
    %1549 = vmatpush2.msra.mxu0 0.0
    %1550 = vmatprep.subr.mxu0 0.0
    %1551 = vmatpush2.msra.mxu0 0.0
    %1552 = vmatprep.subr.mxu0 0.0
    %1553 = vmatpush2.msra.mxu0 0.0
    %1554 = vmatprep.subr.mxu0 0.0
    %1555 = vmatpush2.msra.mxu0 0.0
    %1556 = vmatprep.subr.mxu0 0.0
    %1557 = vmatpush2.msra.mxu0 0.0
    %1558 = vmatprep.subr.mxu0 0.0
    %1559 = vmatpush2.msra.mxu0 0.0
    %1560 = vmatprep.subr.mxu0 0.0
    %1561 = vmatpush2.msra.mxu0 0.0
    %1562 = vmatprep.subr.mxu0 0.0
    %1563 = vmatpush2.msra.mxu0 0.0
    %1564 = vmatprep.subr.mxu0 0.0
    %1565 = vmatpush2.msra.mxu0 0.0
    %1566 = vmatprep.subr.mxu0 0.0
    %1567 = vmatpush2.msra.mxu0 0.0
    %1568 = vmatprep.mubr.f32.mxu0 0.0
    %1569 = vmatmul.mubr.f32.gmra.mxu0 %v1502
    %v1570 = vpop.f32.mrf.mxu0
    %v1571 = vadd.f32 0.0, %v1570
    %v1572 = vpop.f32.mrf.mxu0
    %1573 = vdwg.mxu0
    %1574 = vrot.lane.b32.xlu0 %v743, 64
    %v1575 = vpop.permute.xlu0 %1574
    %v1576 = vsel %vm751, %v1575, 0
    %1578 = vmatprep.subr.mxu0 0.0
    %1579 = vmatpush1.xpose.msra.mxu0 0.0
    %1580 = vmatprep.subr.mxu0 0.0
    %1581 = vmatpush1.xpose.msra.mxu0 0.0
    %1582 = vmatprep.subr.mxu0 0.0
    %1583 = vmatpush1.xpose.msra.mxu0 0.0
    %1584 = vmatprep.subr.mxu0 0.0
    %1585 = vmatpush1.xpose.msra.mxu0 0.0
    %1586 = vmatprep.subr.mxu0 0.0
    %1587 = vmatpush1.xpose.msra.mxu0 0.0
    %1588 = vmatprep.subr.mxu0 0.0
    %1589 = vmatpush1.xpose.msra.mxu0 0.0
    %1590 = vmatprep.subr.mxu0 0.0
    %1591 = vmatpush1.xpose.msra.mxu0 0.0
    %1592 = vmatprep.subr.mxu0 0.0
    %1593 = vmatpush1.xpose.msra.mxu0 0.0
    %1594 = vmatprep.subr.mxu0 0.0
    %1595 = vmatpush1.xpose.msra.mxu0 0.0
    %1596 = vmatprep.subr.mxu0 0.0
    %1597 = vmatpush1.xpose.msra.mxu0 0.0
    %1598 = vmatprep.subr.mxu0 0.0
    %1599 = vmatpush1.xpose.msra.mxu0 0.0
    %1600 = vmatprep.subr.mxu0 0.0
    %1601 = vmatpush1.xpose.msra.mxu0 0.0
    %1602 = vmatprep.subr.mxu0 0.0
    %1603 = vmatpush1.xpose.msra.mxu0 0.0
    %1604 = vmatprep.subr.mxu0 0.0
    %1605 = vmatpush1.xpose.msra.mxu0 0.0
    %1606 = vmatprep.subr.mxu0 0.0
    %1607 = vmatpush1.xpose.msra.mxu0 0.0
    %1608 = vmatprep.subr.mxu0 0.0
    %1609 = vmatpush1.xpose.msra.mxu0 %v1416
    %1610 = vmatprep.subr.mxu0 0.0
    %1611 = vmatpush2.xpose.msra.mxu0 0.0
    %1612 = vmatprep.subr.mxu0 0.0
    %1613 = vmatpush2.xpose.msra.mxu0 0.0
    %1614 = vmatprep.subr.mxu0 0.0
    %1615 = vmatpush2.xpose.msra.mxu0 0.0
    %1616 = vmatprep.subr.mxu0 0.0
    %1617 = vmatpush2.xpose.msra.mxu0 0.0
    %1618 = vmatprep.subr.mxu0 0.0
    %1619 = vmatpush2.xpose.msra.mxu0 0.0
    %1620 = vmatprep.subr.mxu0 0.0
    %1621 = vmatpush2.xpose.msra.mxu0 0.0
    %1622 = vmatprep.subr.mxu0 0.0
    %1623 = vmatpush2.xpose.msra.mxu0 0.0
    %1624 = vmatprep.subr.mxu0 0.0
    %1625 = vmatpush2.xpose.msra.mxu0 0.0
    %1626 = vmatprep.subr.mxu0 0.0
    %1627 = vmatpush2.xpose.msra.mxu0 0.0
    %1628 = vmatprep.subr.mxu0 0.0
    %1629 = vmatpush2.xpose.msra.mxu0 0.0
    %1630 = vmatprep.subr.mxu0 0.0
    %1631 = vmatpush2.xpose.msra.mxu0 0.0
    %1632 = vmatprep.subr.mxu0 0.0
    %1633 = vmatpush2.xpose.msra.mxu0 0.0
    %1634 = vmatprep.subr.mxu0 0.0
    %1635 = vmatpush2.xpose.msra.mxu0 0.0
    %1636 = vmatprep.subr.mxu0 0.0
    %1637 = vmatpush2.xpose.msra.mxu0 0.0
    %1638 = vmatprep.subr.mxu0 0.0
    %1639 = vmatpush2.xpose.msra.mxu0 0.0
    %1640 = vmatprep.subr.mxu0 0.0
    %1641 = vmatpush2.xpose.msra.mxu0 0.0
    %1642 = vmatprep.mubr.f32.mxu0 0.0
    %1643 = vmatmul.mubr.f32.gmra.mxu0 %v1576
    %v1644 = vpop.f32.mrf.mxu0
    %v1645 = vadd.f32 0.0, %v1644
    %v1646 = vpop.f32.mrf.mxu0
    %1647 = vdwg.mxu0
    %v1648 = vmul.f32 %v1645, 0.125
    %v1649 = vsel %vm750, %v1648, -1e+30
    %v1650 = vsel %vm830, %v1649, -inf
    %1651 = vmax.xlane.f32.xlu0 %v1650
    %v1652 = vpop.xlane.xlu0 %1651
    %v1653 = vsub.f32 %v1649, %v1652
    %v1654 = vmul.f32 %v1653, 1.442695
    %v1655 = vpow.pop %v1654
    %v1656 = vsel %vm830, %v1655, 0.0
    %1657 = vadd.xlane.f32.xlu0 %v1656
    %v1658 = vpop.xlane.xlu0 %1657
    %v1659 = vrcp.pop %v1658
    %v1660 = vmul.f32 %v1655, %v1659
    %v1662 = vsel %vm830, %v1660, 0
    %1664 = vmatprep.subr.mxu0 0.0
    %1665 = vmatpush1.msra.mxu0 0.0
    %1666 = vmatprep.subr.mxu0 0.0
    %1667 = vmatpush1.msra.mxu0 0.0
    %1668 = vmatprep.subr.mxu0 0.0
    %1669 = vmatpush1.msra.mxu0 0.0
    %1670 = vmatprep.subr.mxu0 0.0
    %1671 = vmatpush1.msra.mxu0 0.0
    %1672 = vmatprep.subr.mxu0 0.0
    %1673 = vmatpush1.msra.mxu0 0.0
    %1674 = vmatprep.subr.mxu0 0.0
    %1675 = vmatpush1.msra.mxu0 0.0
    %1676 = vmatprep.subr.mxu0 0.0
    %1677 = vmatpush1.msra.mxu0 0.0
    %1678 = vmatprep.subr.mxu0 0.0
    %1679 = vmatpush1.msra.mxu0 0.0
    %1680 = vmatprep.subr.mxu0 0.0
    %1681 = vmatpush1.msra.mxu0 0.0
    %1682 = vmatprep.subr.mxu0 0.0
    %1683 = vmatpush1.msra.mxu0 0.0
    %1684 = vmatprep.subr.mxu0 0.0
    %1685 = vmatpush1.msra.mxu0 0.0
    %1686 = vmatprep.subr.mxu0 0.0
    %1687 = vmatpush1.msra.mxu0 0.0
    %1688 = vmatprep.subr.mxu0 0.0
    %1689 = vmatpush1.msra.mxu0 0.0
    %1690 = vmatprep.subr.mxu0 0.0
    %1691 = vmatpush1.msra.mxu0 0.0
    %1692 = vmatprep.subr.mxu0 0.0
    %1693 = vmatpush1.msra.mxu0 0.0
    %1694 = vmatprep.subr.mxu0 0.0
    %1695 = vmatpush1.msra.mxu0 %v562
    %1696 = vmatprep.subr.mxu0 0.0
    %1697 = vmatpush2.msra.mxu0 0.0
    %1698 = vmatprep.subr.mxu0 0.0
    %1699 = vmatpush2.msra.mxu0 0.0
    %1700 = vmatprep.subr.mxu0 0.0
    %1701 = vmatpush2.msra.mxu0 0.0
    %1702 = vmatprep.subr.mxu0 0.0
    %1703 = vmatpush2.msra.mxu0 0.0
    %1704 = vmatprep.subr.mxu0 0.0
    %1705 = vmatpush2.msra.mxu0 0.0
    %1706 = vmatprep.subr.mxu0 0.0
    %1707 = vmatpush2.msra.mxu0 0.0
    %1708 = vmatprep.subr.mxu0 0.0
    %1709 = vmatpush2.msra.mxu0 0.0
    %1710 = vmatprep.subr.mxu0 0.0
    %1711 = vmatpush2.msra.mxu0 0.0
    %1712 = vmatprep.subr.mxu0 0.0
    %1713 = vmatpush2.msra.mxu0 0.0
    %1714 = vmatprep.subr.mxu0 0.0
    %1715 = vmatpush2.msra.mxu0 0.0
    %1716 = vmatprep.subr.mxu0 0.0
    %1717 = vmatpush2.msra.mxu0 0.0
    %1718 = vmatprep.subr.mxu0 0.0
    %1719 = vmatpush2.msra.mxu0 0.0
    %1720 = vmatprep.subr.mxu0 0.0
    %1721 = vmatpush2.msra.mxu0 0.0
    %1722 = vmatprep.subr.mxu0 0.0
    %1723 = vmatpush2.msra.mxu0 0.0
    %1724 = vmatprep.subr.mxu0 0.0
    %1725 = vmatpush2.msra.mxu0 0.0
    %1726 = vmatprep.subr.mxu0 0.0
    %1727 = vmatpush2.msra.mxu0 0.0
    %1728 = vmatprep.mubr.f32.mxu0 0.0
    %1729 = vmatmul.mubr.f32.gmra.mxu0 %v1662
    %v1730 = vpop.f32.mrf.mxu0
    %v1731 = vadd.f32 0.0, %v1730
    %v1732 = vpop.f32.mrf.mxu0
    %1733 = vdwg.mxu0
    %1734 = vrot.lane.b32.xlu0 %v745, 64
    %v1735 = vpop.permute.xlu0 %1734
    %v1737 = vsel %vm751, %v744, 0
    %v1739 = vsel %vm751, %v1735, 0
    %1741 = vmatprep.subr.mxu0 0.0
    %1742 = vmatpush1.xpose.msra.mxu0 0.0
    %1743 = vmatprep.subr.mxu0 0.0
    %1744 = vmatpush1.xpose.msra.mxu0 0.0
    %1745 = vmatprep.subr.mxu0 0.0
    %1746 = vmatpush1.xpose.msra.mxu0 0.0
    %1747 = vmatprep.subr.mxu0 0.0
    %1748 = vmatpush1.xpose.msra.mxu0 0.0
    %1749 = vmatprep.subr.mxu0 0.0
    %1750 = vmatpush1.xpose.msra.mxu0 0.0
    %1751 = vmatprep.subr.mxu0 0.0
    %1752 = vmatpush1.xpose.msra.mxu0 0.0
    %1753 = vmatprep.subr.mxu0 0.0
    %1754 = vmatpush1.xpose.msra.mxu0 0.0
    %1755 = vmatprep.subr.mxu0 0.0
    %1756 = vmatpush1.xpose.msra.mxu0 0.0
    %1757 = vmatprep.subr.mxu0 0.0
    %1758 = vmatpush1.xpose.msra.mxu0 0.0
    %1759 = vmatprep.subr.mxu0 0.0
    %1760 = vmatpush1.xpose.msra.mxu0 0.0
    %1761 = vmatprep.subr.mxu0 0.0
    %1762 = vmatpush1.xpose.msra.mxu0 0.0
    %1763 = vmatprep.subr.mxu0 0.0
    %1764 = vmatpush1.xpose.msra.mxu0 0.0
    %1765 = vmatprep.subr.mxu0 0.0
    %1766 = vmatpush1.xpose.msra.mxu0 0.0
    %1767 = vmatprep.subr.mxu0 0.0
    %1768 = vmatpush1.xpose.msra.mxu0 0.0
    %1769 = vmatprep.subr.mxu0 0.0
    %1770 = vmatpush1.xpose.msra.mxu0 0.0
    %1771 = vmatprep.subr.mxu0 0.0
    %1772 = vmatpush1.xpose.msra.mxu0 %v1739
    %1773 = vmatprep.subr.mxu0 0.0
    %1774 = vmatpush2.xpose.msra.mxu0 0.0
    %1775 = vmatprep.subr.mxu0 0.0
    %1776 = vmatpush2.xpose.msra.mxu0 0.0
    %1777 = vmatprep.subr.mxu0 0.0
    %1778 = vmatpush2.xpose.msra.mxu0 0.0
    %1779 = vmatprep.subr.mxu0 0.0
    %1780 = vmatpush2.xpose.msra.mxu0 0.0
    %1781 = vmatprep.subr.mxu0 0.0
    %1782 = vmatpush2.xpose.msra.mxu0 0.0
    %1783 = vmatprep.subr.mxu0 0.0
    %1784 = vmatpush2.xpose.msra.mxu0 0.0
    %1785 = vmatprep.subr.mxu0 0.0
    %1786 = vmatpush2.xpose.msra.mxu0 0.0
    %1787 = vmatprep.subr.mxu0 0.0
    %1788 = vmatpush2.xpose.msra.mxu0 0.0
    %1789 = vmatprep.subr.mxu0 0.0
    %1790 = vmatpush2.xpose.msra.mxu0 0.0
    %1791 = vmatprep.subr.mxu0 0.0
    %1792 = vmatpush2.xpose.msra.mxu0 0.0
    %1793 = vmatprep.subr.mxu0 0.0
    %1794 = vmatpush2.xpose.msra.mxu0 0.0
    %1795 = vmatprep.subr.mxu0 0.0
    %1796 = vmatpush2.xpose.msra.mxu0 0.0
    %1797 = vmatprep.subr.mxu0 0.0
    %1798 = vmatpush2.xpose.msra.mxu0 0.0
    %1799 = vmatprep.subr.mxu0 0.0
    %1800 = vmatpush2.xpose.msra.mxu0 0.0
    %1801 = vmatprep.subr.mxu0 0.0
    %1802 = vmatpush2.xpose.msra.mxu0 0.0
    %1803 = vmatprep.subr.mxu0 0.0
    %1804 = vmatpush2.xpose.msra.mxu0 0.0
    %1805 = vmatprep.mubr.f32.mxu0 0.0
    %1806 = vmatmul.mubr.f32.gmra.mxu0 %v1737
    %v1807 = vpop.f32.mrf.mxu0
    %v1808 = vadd.f32 0.0, %v1807
    %v1809 = vpop.f32.mrf.mxu0
    %1810 = vdwg.mxu0
    %v1811 = vmul.f32 %v1808, 0.125
    %v1812 = vsel %vm750, %v1811, -1e+30
    %v1813 = vsel %vm830, %v1812, -inf
    %1814 = vmax.xlane.f32.xlu0 %v1813
    %v1815 = vpop.xlane.xlu0 %1814
    %v1816 = vsub.f32 %v1812, %v1815
    %v1817 = vmul.f32 %v1816, 1.442695
    %v1818 = vpow.pop %v1817
    %v1819 = vsel %vm830, %v1818, 0.0
    %1820 = vadd.xlane.f32.xlu0 %v1819
    %v1821 = vpop.xlane.xlu0 %1820
    %v1822 = vrcp.pop %v1821
    %v1823 = vmul.f32 %v1818, %v1822
    %1825 = vrot.lane.b32.xlu0 %v562, 64
    %v1826 = vpop.permute.xlu0 %1825
    %v1829 = vsel %vm830, %v1823, 0
    %1831 = vmatprep.subr.mxu0 0.0
    %1832 = vmatpush1.msra.mxu0 0.0
    %1833 = vmatprep.subr.mxu0 0.0
    %1834 = vmatpush1.msra.mxu0 0.0
    %1835 = vmatprep.subr.mxu0 0.0
    %1836 = vmatpush1.msra.mxu0 0.0
    %1837 = vmatprep.subr.mxu0 0.0
    %1838 = vmatpush1.msra.mxu0 0.0
    %1839 = vmatprep.subr.mxu0 0.0
    %1840 = vmatpush1.msra.mxu0 0.0
    %1841 = vmatprep.subr.mxu0 0.0
    %1842 = vmatpush1.msra.mxu0 0.0
    %1843 = vmatprep.subr.mxu0 0.0
    %1844 = vmatpush1.msra.mxu0 0.0
    %1845 = vmatprep.subr.mxu0 0.0
    %1846 = vmatpush1.msra.mxu0 0.0
    %1847 = vmatprep.subr.mxu0 0.0
    %1848 = vmatpush1.msra.mxu0 0.0
    %1849 = vmatprep.subr.mxu0 0.0
    %1850 = vmatpush1.msra.mxu0 0.0
    %1851 = vmatprep.subr.mxu0 0.0
    %1852 = vmatpush1.msra.mxu0 0.0
    %1853 = vmatprep.subr.mxu0 0.0
    %1854 = vmatpush1.msra.mxu0 0.0
    %1855 = vmatprep.subr.mxu0 0.0
    %1856 = vmatpush1.msra.mxu0 0.0
    %1857 = vmatprep.subr.mxu0 0.0
    %1858 = vmatpush1.msra.mxu0 0.0
    %1859 = vmatprep.subr.mxu0 0.0
    %1860 = vmatpush1.msra.mxu0 0.0
    %1861 = vmatprep.subr.mxu0 0.0
    %1862 = vmatpush1.msra.mxu0 %v1826
    %1863 = vmatprep.subr.mxu0 0.0
    %1864 = vmatpush2.msra.mxu0 0.0
    %1865 = vmatprep.subr.mxu0 0.0
    %1866 = vmatpush2.msra.mxu0 0.0
    %1867 = vmatprep.subr.mxu0 0.0
    %1868 = vmatpush2.msra.mxu0 0.0
    %1869 = vmatprep.subr.mxu0 0.0
    %1870 = vmatpush2.msra.mxu0 0.0
    %1871 = vmatprep.subr.mxu0 0.0
    %1872 = vmatpush2.msra.mxu0 0.0
    %1873 = vmatprep.subr.mxu0 0.0
    %1874 = vmatpush2.msra.mxu0 0.0
    %1875 = vmatprep.subr.mxu0 0.0
    %1876 = vmatpush2.msra.mxu0 0.0
    %1877 = vmatprep.subr.mxu0 0.0
    %1878 = vmatpush2.msra.mxu0 0.0
    %1879 = vmatprep.subr.mxu0 0.0
    %1880 = vmatpush2.msra.mxu0 0.0
    %1881 = vmatprep.subr.mxu0 0.0
    %1882 = vmatpush2.msra.mxu0 0.0
    %1883 = vmatprep.subr.mxu0 0.0
    %1884 = vmatpush2.msra.mxu0 0.0
    %1885 = vmatprep.subr.mxu0 0.0
    %1886 = vmatpush2.msra.mxu0 0.0
    %1887 = vmatprep.subr.mxu0 0.0
    %1888 = vmatpush2.msra.mxu0 0.0
    %1889 = vmatprep.subr.mxu0 0.0
    %1890 = vmatpush2.msra.mxu0 0.0
    %1891 = vmatprep.subr.mxu0 0.0
    %1892 = vmatpush2.msra.mxu0 0.0
    %1893 = vmatprep.subr.mxu0 0.0
    %1894 = vmatpush2.msra.mxu0 0.0
    %1895 = vmatprep.mubr.f32.mxu0 0.0
    %1896 = vmatmul.mubr.f32.gmra.mxu0 %v1829
    %v1897 = vpop.f32.mrf.mxu0
    %v1898 = vadd.f32 0.0, %v1897
    %v1899 = vpop.f32.mrf.mxu0
    %1900 = vdwg.mxu0
    %1901 = vrot.lane.b32.xlu0 %v744, 64
    %v1902 = vpop.permute.xlu0 %1901
    %v1903 = vsel %vm751, %v1902, 0
    %1905 = vmatprep.subr.mxu0 0.0
    %1906 = vmatpush1.xpose.msra.mxu0 0.0
    %1907 = vmatprep.subr.mxu0 0.0
    %1908 = vmatpush1.xpose.msra.mxu0 0.0
    %1909 = vmatprep.subr.mxu0 0.0
    %1910 = vmatpush1.xpose.msra.mxu0 0.0
    %1911 = vmatprep.subr.mxu0 0.0
    %1912 = vmatpush1.xpose.msra.mxu0 0.0
    %1913 = vmatprep.subr.mxu0 0.0
    %1914 = vmatpush1.xpose.msra.mxu0 0.0
    %1915 = vmatprep.subr.mxu0 0.0
    %1916 = vmatpush1.xpose.msra.mxu0 0.0
    %1917 = vmatprep.subr.mxu0 0.0
    %1918 = vmatpush1.xpose.msra.mxu0 0.0
    %1919 = vmatprep.subr.mxu0 0.0
    %1920 = vmatpush1.xpose.msra.mxu0 0.0
    %1921 = vmatprep.subr.mxu0 0.0
    %1922 = vmatpush1.xpose.msra.mxu0 0.0
    %1923 = vmatprep.subr.mxu0 0.0
    %1924 = vmatpush1.xpose.msra.mxu0 0.0
    %1925 = vmatprep.subr.mxu0 0.0
    %1926 = vmatpush1.xpose.msra.mxu0 0.0
    %1927 = vmatprep.subr.mxu0 0.0
    %1928 = vmatpush1.xpose.msra.mxu0 0.0
    %1929 = vmatprep.subr.mxu0 0.0
    %1930 = vmatpush1.xpose.msra.mxu0 0.0
    %1931 = vmatprep.subr.mxu0 0.0
    %1932 = vmatpush1.xpose.msra.mxu0 0.0
    %1933 = vmatprep.subr.mxu0 0.0
    %1934 = vmatpush1.xpose.msra.mxu0 0.0
    %1935 = vmatprep.subr.mxu0 0.0
    %1936 = vmatpush1.xpose.msra.mxu0 %v1739
    %1937 = vmatprep.subr.mxu0 0.0
    %1938 = vmatpush2.xpose.msra.mxu0 0.0
    %1939 = vmatprep.subr.mxu0 0.0
    %1940 = vmatpush2.xpose.msra.mxu0 0.0
    %1941 = vmatprep.subr.mxu0 0.0
    %1942 = vmatpush2.xpose.msra.mxu0 0.0
    %1943 = vmatprep.subr.mxu0 0.0
    %1944 = vmatpush2.xpose.msra.mxu0 0.0
    %1945 = vmatprep.subr.mxu0 0.0
    %1946 = vmatpush2.xpose.msra.mxu0 0.0
    %1947 = vmatprep.subr.mxu0 0.0
    %1948 = vmatpush2.xpose.msra.mxu0 0.0
    %1949 = vmatprep.subr.mxu0 0.0
    %1950 = vmatpush2.xpose.msra.mxu0 0.0
    %1951 = vmatprep.subr.mxu0 0.0
    %1952 = vmatpush2.xpose.msra.mxu0 0.0
    %1953 = vmatprep.subr.mxu0 0.0
    %1954 = vmatpush2.xpose.msra.mxu0 0.0
    %1955 = vmatprep.subr.mxu0 0.0
    %1956 = vmatpush2.xpose.msra.mxu0 0.0
    %1957 = vmatprep.subr.mxu0 0.0
    %1958 = vmatpush2.xpose.msra.mxu0 0.0
    %1959 = vmatprep.subr.mxu0 0.0
    %1960 = vmatpush2.xpose.msra.mxu0 0.0
    %1961 = vmatprep.subr.mxu0 0.0
    %1962 = vmatpush2.xpose.msra.mxu0 0.0
    %1963 = vmatprep.subr.mxu0 0.0
    %1964 = vmatpush2.xpose.msra.mxu0 0.0
    %1965 = vmatprep.subr.mxu0 0.0
    %1966 = vmatpush2.xpose.msra.mxu0 0.0
    %1967 = vmatprep.subr.mxu0 0.0
    %1968 = vmatpush2.xpose.msra.mxu0 0.0
    %1969 = vmatprep.mubr.f32.mxu0 0.0
    %1970 = vmatmul.mubr.f32.gmra.mxu0 %v1903
    %v1971 = vpop.f32.mrf.mxu0
    %v1972 = vadd.f32 0.0, %v1971
    %v1973 = vpop.f32.mrf.mxu0
    %1974 = vdwg.mxu0
    %v1975 = vmul.f32 %v1972, 0.125
    %v1976 = vsel %vm750, %v1975, -1e+30
    %v1977 = vsel %vm830, %v1976, -inf
    %1978 = vmax.xlane.f32.xlu0 %v1977
    %v1979 = vpop.xlane.xlu0 %1978
    %v1980 = vsub.f32 %v1976, %v1979
    %v1981 = vmul.f32 %v1980, 1.442695
    %v1982 = vpow.pop %v1981
    %v1983 = vsel %vm830, %v1982, 0.0
    %1984 = vadd.xlane.f32.xlu0 %v1983
    %v1985 = vpop.xlane.xlu0 %1984
    %v1986 = vrcp.pop %v1985
    %v1987 = vmul.f32 %v1982, %v1986
    %v1989 = vsel %vm830, %v1987, 0
    %1991 = vmatprep.subr.mxu0 0.0
    %1992 = vmatpush1.msra.mxu0 0.0
    %1993 = vmatprep.subr.mxu0 0.0
    %1994 = vmatpush1.msra.mxu0 0.0
    %1995 = vmatprep.subr.mxu0 0.0
    %1996 = vmatpush1.msra.mxu0 0.0
    %1997 = vmatprep.subr.mxu0 0.0
    %1998 = vmatpush1.msra.mxu0 0.0
    %1999 = vmatprep.subr.mxu0 0.0
    %2000 = vmatpush1.msra.mxu0 0.0
    %2001 = vmatprep.subr.mxu0 0.0
    %2002 = vmatpush1.msra.mxu0 0.0
    %2003 = vmatprep.subr.mxu0 0.0
    %2004 = vmatpush1.msra.mxu0 0.0
    %2005 = vmatprep.subr.mxu0 0.0
    %2006 = vmatpush1.msra.mxu0 0.0
    %2007 = vmatprep.subr.mxu0 0.0
    %2008 = vmatpush1.msra.mxu0 0.0
    %2009 = vmatprep.subr.mxu0 0.0
    %2010 = vmatpush1.msra.mxu0 0.0
    %2011 = vmatprep.subr.mxu0 0.0
    %2012 = vmatpush1.msra.mxu0 0.0
    %2013 = vmatprep.subr.mxu0 0.0
    %2014 = vmatpush1.msra.mxu0 0.0
    %2015 = vmatprep.subr.mxu0 0.0
    %2016 = vmatpush1.msra.mxu0 0.0
    %2017 = vmatprep.subr.mxu0 0.0
    %2018 = vmatpush1.msra.mxu0 0.0
    %2019 = vmatprep.subr.mxu0 0.0
    %2020 = vmatpush1.msra.mxu0 0.0
    %2021 = vmatprep.subr.mxu0 0.0
    %2022 = vmatpush1.msra.mxu0 %v1826
    %2023 = vmatprep.subr.mxu0 0.0
    %2024 = vmatpush2.msra.mxu0 0.0
    %2025 = vmatprep.subr.mxu0 0.0
    %2026 = vmatpush2.msra.mxu0 0.0
    %2027 = vmatprep.subr.mxu0 0.0
    %2028 = vmatpush2.msra.mxu0 0.0
    %2029 = vmatprep.subr.mxu0 0.0
    %2030 = vmatpush2.msra.mxu0 0.0
    %2031 = vmatprep.subr.mxu0 0.0
    %2032 = vmatpush2.msra.mxu0 0.0
    %2033 = vmatprep.subr.mxu0 0.0
    %2034 = vmatpush2.msra.mxu0 0.0
    %2035 = vmatprep.subr.mxu0 0.0
    %2036 = vmatpush2.msra.mxu0 0.0
    %2037 = vmatprep.subr.mxu0 0.0
    %2038 = vmatpush2.msra.mxu0 0.0
    %2039 = vmatprep.subr.mxu0 0.0
    %2040 = vmatpush2.msra.mxu0 0.0
    %2041 = vmatprep.subr.mxu0 0.0
    %2042 = vmatpush2.msra.mxu0 0.0
    %2043 = vmatprep.subr.mxu0 0.0
    %2044 = vmatpush2.msra.mxu0 0.0
    %2045 = vmatprep.subr.mxu0 0.0
    %2046 = vmatpush2.msra.mxu0 0.0
    %2047 = vmatprep.subr.mxu0 0.0
    %2048 = vmatpush2.msra.mxu0 0.0
    %2049 = vmatprep.subr.mxu0 0.0
    %2050 = vmatpush2.msra.mxu0 0.0
    %2051 = vmatprep.subr.mxu0 0.0
    %2052 = vmatpush2.msra.mxu0 0.0
    %2053 = vmatprep.subr.mxu0 0.0
    %2054 = vmatpush2.msra.mxu0 0.0
    %2055 = vmatprep.mubr.f32.mxu0 0.0
    %2056 = vmatmul.mubr.f32.gmra.mxu0 %v1989
    %v2057 = vpop.f32.mrf.mxu0
    %v2058 = vadd.f32 0.0, %v2057
    %v2059 = vpop.f32.mrf.mxu0
    %2060 = vdwg.mxu0
    %2062 = vrot.lane.b32.xlu0 %v1731, 64
    %v2063 = vpop.permute.xlu0 %2062
    %2066 = vrot.lane.b32.xlu0 %v2058, 64
    %v2067 = vpop.permute.xlu0 %2066
    %v2069 = vsel %vm751, %v1571, %v2063
    %v2070 = vsel %vm751, %v1898, %v2067
    %v2071 = vld [vmem:[#allocation10] sm:$0xff]
    %v2072 = vld [vmem:[#allocation10 + $0x8] sm:$0xff]
    %v2073 = vld [vmem:[#allocation10 + $0x10] sm:$0xff]
    %v2074 = vld [vmem:[#allocation10 + $0x18] sm:$0xff]
    %v2075 = vld [vmem:[#allocation10 + $0x20] sm:$0xff]
    %v2076 = vld [vmem:[#allocation10 + $0x28] sm:$0xff]
    %v2077 = vld [vmem:[#allocation10 + $0x30] sm:$0xff]
    %v2078 = vld [vmem:[#allocation10 + $0x38] sm:$0xff]
    %v2079 = vld [vmem:[#allocation10 + $0x40] sm:$0xff]
    %v2080 = vld [vmem:[#allocation10 + $0x48] sm:$0xff]
    %v2081 = vld [vmem:[#allocation10 + $0x50] sm:$0xff]
    %v2082 = vld [vmem:[#allocation10 + $0x58] sm:$0xff]
    %v2083 = vld [vmem:[#allocation10 + $0x60] sm:$0xff]
    %v2084 = vld [vmem:[#allocation10 + $0x68] sm:$0xff]
    %v2085 = vld [vmem:[#allocation10 + $0x70] sm:$0xff]
    %v2086 = vld [vmem:[#allocation10 + $0x78] sm:$0xff]
    %v2087 = vld [vmem:[#allocation10 + $0x80] sm:$0xff]
    %v2088 = vld [vmem:[#allocation10 + $0x88] sm:$0xff]
    %v2089 = vld [vmem:[#allocation10 + $0x90] sm:$0xff]
    %v2090 = vld [vmem:[#allocation10 + $0x98] sm:$0xff]
    %v2091 = vld [vmem:[#allocation10 + $0xa0] sm:$0xff]
    %v2092 = vld [vmem:[#allocation10 + $0xa8] sm:$0xff]
    %v2093 = vld [vmem:[#allocation10 + $0xb0] sm:$0xff]
    %v2094 = vld [vmem:[#allocation10 + $0xb8] sm:$0xff]
    %v2095 = vld [vmem:[#allocation10 + $0xc0] sm:$0xff]
    %v2096 = vld [vmem:[#allocation10 + $0xc8] sm:$0xff]
    %v2097 = vld [vmem:[#allocation10 + $0xd0] sm:$0xff]
    %v2098 = vld [vmem:[#allocation10 + $0xd8] sm:$0xff]
    %v2099 = vld [vmem:[#allocation10 + $0xe0] sm:$0xff]
    %v2100 = vld [vmem:[#allocation10 + $0xe8] sm:$0xff]
    %v2101 = vld [vmem:[#allocation10 + $0xf0] sm:$0xff]
    %v2102 = vld [vmem:[#allocation10 + $0xf8] sm:$0xff]
    %v2103 = vld [vmem:[#allocation10 + $0x100] sm:$0xff]
    %v2104 = vld [vmem:[#allocation10 + $0x108] sm:$0xff]
    %v2105 = vld [vmem:[#allocation10 + $0x110] sm:$0xff]
    %v2106 = vld [vmem:[#allocation10 + $0x118] sm:$0xff]
    %v2107 = vld [vmem:[#allocation10 + $0x120] sm:$0xff]
    %v2108 = vld [vmem:[#allocation10 + $0x128] sm:$0xff]
    %v2109 = vld [vmem:[#allocation10 + $0x130] sm:$0xff]
    %v2110 = vld [vmem:[#allocation10 + $0x138] sm:$0xff]
    %v2111 = vld [vmem:[#allocation10 + $0x140] sm:$0xff]
    %v2112 = vld [vmem:[#allocation10 + $0x148] sm:$0xff]
    %v2113 = vld [vmem:[#allocation10 + $0x150] sm:$0xff]
    %v2114 = vld [vmem:[#allocation10 + $0x158] sm:$0xff]
    %v2115 = vld [vmem:[#allocation10 + $0x160] sm:$0xff]
    %v2116 = vld [vmem:[#allocation10 + $0x168] sm:$0xff]
    %v2117 = vld [vmem:[#allocation10 + $0x170] sm:$0xff]
    %v2118 = vld [vmem:[#allocation10 + $0x178] sm:$0xff]
    %v2119 = vld [vmem:[#allocation10 + $0x180] sm:$0xff]
    %v2120 = vld [vmem:[#allocation10 + $0x188] sm:$0xff]
    %v2121 = vld [vmem:[#allocation10 + $0x190] sm:$0xff]
    %v2122 = vld [vmem:[#allocation10 + $0x198] sm:$0xff]
    %v2123 = vld [vmem:[#allocation10 + $0x1a0] sm:$0xff]
    %v2124 = vld [vmem:[#allocation10 + $0x1a8] sm:$0xff]
    %v2125 = vld [vmem:[#allocation10 + $0x1b0] sm:$0xff]
    %v2126 = vld [vmem:[#allocation10 + $0x1b8] sm:$0xff]
    %v2127 = vld [vmem:[#allocation10 + $0x1c0] sm:$0xff]
    %v2128 = vld [vmem:[#allocation10 + $0x1c8] sm:$0xff]
    %v2129 = vld [vmem:[#allocation10 + $0x1d0] sm:$0xff]
    %v2130 = vld [vmem:[#allocation10 + $0x1d8] sm:$0xff]
    %v2131 = vld [vmem:[#allocation10 + $0x1e0] sm:$0xff]
    %v2132 = vld [vmem:[#allocation10 + $0x1e8] sm:$0xff]
    %v2133 = vld [vmem:[#allocation10 + $0x1f0] sm:$0xff]
    %v2134 = vld [vmem:[#allocation10 + $0x1f8] sm:$0xff]
    %2135 = vmatprep.subr.mxu0 %v2102
    %2136 = vmatpush1.msra.mxu0 %v2101
    %2137 = vmatprep.subr.mxu0 %v2100
    %2138 = vmatpush1.msra.mxu0 %v2099
    %2139 = vmatprep.subr.mxu0 %v2098
    %2140 = vmatpush1.msra.mxu0 %v2097
    %2141 = vmatprep.subr.mxu0 %v2096
    %2142 = vmatpush1.msra.mxu0 %v2095
    %2143 = vmatprep.subr.mxu0 %v2094
    %2144 = vmatpush1.msra.mxu0 %v2093
    %2145 = vmatprep.subr.mxu0 %v2092
    %2146 = vmatpush1.msra.mxu0 %v2091
    %2147 = vmatprep.subr.mxu0 %v2090
    %2148 = vmatpush1.msra.mxu0 %v2089
    %2149 = vmatprep.subr.mxu0 %v2088
    %2150 = vmatpush1.msra.mxu0 %v2087
    %2151 = vmatprep.subr.mxu0 %v2086
    %2152 = vmatpush1.msra.mxu0 %v2085
    %2153 = vmatprep.subr.mxu0 %v2084
    %2154 = vmatpush1.msra.mxu0 %v2083
    %2155 = vmatprep.subr.mxu0 %v2082
    %2156 = vmatpush1.msra.mxu0 %v2081
    %2157 = vmatprep.subr.mxu0 %v2080
    %2158 = vmatpush1.msra.mxu0 %v2079
    %2159 = vmatprep.subr.mxu0 %v2078
    %2160 = vmatpush1.msra.mxu0 %v2077
    %2161 = vmatprep.subr.mxu0 %v2076
    %2162 = vmatpush1.msra.mxu0 %v2075
    %2163 = vmatprep.subr.mxu0 %v2074
    %2164 = vmatpush1.msra.mxu0 %v2073
    %2165 = vmatprep.subr.mxu0 %v2072
    %2166 = vmatpush1.msra.mxu0 %v2071
    %2167 = vmatprep.subr.mxu0 %v2134
    %2168 = vmatpush2.msra.mxu0 %v2133
    %2169 = vmatprep.subr.mxu0 %v2132
    %2170 = vmatpush2.msra.mxu0 %v2131
    %2171 = vmatprep.subr.mxu0 %v2130
    %2172 = vmatpush2.msra.mxu0 %v2129
    %2173 = vmatprep.subr.mxu0 %v2128
    %2174 = vmatpush2.msra.mxu0 %v2127
    %2175 = vmatprep.subr.mxu0 %v2126
    %2176 = vmatpush2.msra.mxu0 %v2125
    %2177 = vmatprep.subr.mxu0 %v2124
    %2178 = vmatpush2.msra.mxu0 %v2123
    %2179 = vmatprep.subr.mxu0 %v2122
    %2180 = vmatpush2.msra.mxu0 %v2121
    %2181 = vmatprep.subr.mxu0 %v2120
    %2182 = vmatpush2.msra.mxu0 %v2119
    %2183 = vmatprep.subr.mxu0 %v2118
    %2184 = vmatpush2.msra.mxu0 %v2117
    %2185 = vmatprep.subr.mxu0 %v2116
    %2186 = vmatpush2.msra.mxu0 %v2115
    %2187 = vmatprep.subr.mxu0 %v2114
    %2188 = vmatpush2.msra.mxu0 %v2113
    %2189 = vmatprep.subr.mxu0 %v2112
    %2190 = vmatpush2.msra.mxu0 %v2111
    %2191 = vmatprep.subr.mxu0 %v2110
    %2192 = vmatpush2.msra.mxu0 %v2109
    %2193 = vmatprep.subr.mxu0 %v2108
    %2194 = vmatpush2.msra.mxu0 %v2107
    %2195 = vmatprep.subr.mxu0 %v2106
    %2196 = vmatpush2.msra.mxu0 %v2105
    %2197 = vmatprep.subr.mxu0 %v2104
    %2198 = vmatpush2.msra.mxu0 %v2103
    %2199 = vmatprep.mubr.f32.mxu0 %v1411
    %2200 = vmatmul.mubr.f32.gmra.mxu0 %v1410
    %v2201 = vpop.f32.mrf.mxu0
    %v2202 = vadd.f32 0.0, %v2201
    %v2203 = vpop.f32.mrf.mxu0
    %v2204 = vadd.f32 0.0, %v2203
    %2205 = vmatprep.mubr.f32.mxu0 %v2070
    %2206 = vmatmul.mubr.f32.gmra.mxu0 %v2069
    %v2207 = vpop.f32.mrf.mxu0
    %v2208 = vadd.f32 0.0, %v2207
    %v2209 = vpop.f32.mrf.mxu0
    %v2210 = vadd.f32 0.0, %v2209
    %2211 = vdwg.mxu0
    %v2212 = vadd.f32 %v145, %v2202
    %v2213 = vadd.f32 %v146, %v2204
    %v2214 = vadd.f32 %v147, %v2208
    %v2215 = vadd.f32 %v148, %v2210
    %v2216 = vmul.f32 %v2212, %v2212
    %v2217 = vmul.f32 %v2213, %v2213
    %v2218 = vmul.f32 %v2214, %v2214
    %v2219 = vmul.f32 %v2215, %v2215
    %v2220 = vadd.f32 %v2216, %v2217
    %2221 = vadd.xlane.f32.xlu0 %v2220
    %v2222 = vpop.xlane.xlu0 %2221
    %v2223 = vadd.f32 %v2218, %v2219
    %2224 = vadd.xlane.f32.xlu0 %v2223
    %v2225 = vpop.xlane.xlu0 %2224
    %v2226 = vmul.f32 %v2222, %v159
    %v2227 = vmul.f32 %v2225, %v159
    %v2228 = vadd.f32 %v2226, 1e-05
    %v2229 = vadd.f32 %v2227, 1e-05
    %v2230 = vrsqrt.pop %v2228
    %v2231 = vrsqrt.pop %v2229
    %v2232 = vmul.f32 %v2212, %v2230
    %v2233 = vmul.f32 %v2213, %v2230
    %v2234 = vmul.f32 %v2214, %v2231
    %v2235 = vmul.f32 %v2215, %v2231
    %v2236 = vld [vmem:[%s6] sm:$0x3]
    %v2238 = vlaneseq
    %v2239 = vshrl.u32 %v2238, 7
    %v2240 = vsub.s32 0, %v2239
    %v2241 = vrot.slane %v2236, %v2240
    %v2242 = vlaneseq
    %v2243 = vshrl.u32 %v2242, 7
    %v2244 = vsub.s32 1, %v2243
    %v2245 = vrot.slane %v2236, %v2244
    %v2248 = vmul.f32 %v2232, %v2241
    %v2249 = vmul.f32 %v2233, %v2245
    %v2250 = vmul.f32 %v2234, %v2241
    %v2251 = vmul.f32 %v2235, %v2245
    %v2252 = vld [vmem:[#allocation11] sm:$0xff]
    %v2253 = vld [vmem:[#allocation11 + $0x8] sm:$0xff]
    %v2254 = vld [vmem:[#allocation11 + $0x10] sm:$0xff]
    %v2255 = vld [vmem:[#allocation11 + $0x18] sm:$0xff]
    %v2256 = vld [vmem:[#allocation11 + $0x20] sm:$0xff]
    %v2257 = vld [vmem:[#allocation11 + $0x28] sm:$0xff]
    %v2258 = vld [vmem:[#allocation11 + $0x30] sm:$0xff]
    %v2259 = vld [vmem:[#allocation11 + $0x38] sm:$0xff]
    %v2260 = vld [vmem:[#allocation11 + $0x40] sm:$0xff]
    %v2261 = vld [vmem:[#allocation11 + $0x48] sm:$0xff]
    %v2262 = vld [vmem:[#allocation11 + $0x50] sm:$0xff]
    %v2263 = vld [vmem:[#allocation11 + $0x58] sm:$0xff]
    %v2264 = vld [vmem:[#allocation11 + $0x60] sm:$0xff]
    %v2265 = vld [vmem:[#allocation11 + $0x68] sm:$0xff]
    %v2266 = vld [vmem:[#allocation11 + $0x70] sm:$0xff]
    %v2267 = vld [vmem:[#allocation11 + $0x78] sm:$0xff]
    %v2268 = vld [vmem:[#allocation11 + $0x80] sm:$0xff]
    %v2269 = vld [vmem:[#allocation11 + $0x88] sm:$0xff]
    %v2270 = vld [vmem:[#allocation11 + $0x90] sm:$0xff]
    %v2271 = vld [vmem:[#allocation11 + $0x98] sm:$0xff]
    %v2272 = vld [vmem:[#allocation11 + $0xa0] sm:$0xff]
    %v2273 = vld [vmem:[#allocation11 + $0xa8] sm:$0xff]
    %v2274 = vld [vmem:[#allocation11 + $0xb0] sm:$0xff]
    %v2275 = vld [vmem:[#allocation11 + $0xb8] sm:$0xff]
    %v2276 = vld [vmem:[#allocation11 + $0xc0] sm:$0xff]
    %v2277 = vld [vmem:[#allocation11 + $0xc8] sm:$0xff]
    %v2278 = vld [vmem:[#allocation11 + $0xd0] sm:$0xff]
    %v2279 = vld [vmem:[#allocation11 + $0xd8] sm:$0xff]
    %v2280 = vld [vmem:[#allocation11 + $0xe0] sm:$0xff]
    %v2281 = vld [vmem:[#allocation11 + $0xe8] sm:$0xff]
    %v2282 = vld [vmem:[#allocation11 + $0xf0] sm:$0xff]
    %v2283 = vld [vmem:[#allocation11 + $0xf8] sm:$0xff]
    %v2284 = vld [vmem:[#allocation11 + $0x100] sm:$0xff]
    %v2285 = vld [vmem:[#allocation11 + $0x108] sm:$0xff]
    %v2286 = vld [vmem:[#allocation11 + $0x110] sm:$0xff]
    %v2287 = vld [vmem:[#allocation11 + $0x118] sm:$0xff]
    %v2288 = vld [vmem:[#allocation11 + $0x120] sm:$0xff]
    %v2289 = vld [vmem:[#allocation11 + $0x128] sm:$0xff]
    %v2290 = vld [vmem:[#allocation11 + $0x130] sm:$0xff]
    %v2291 = vld [vmem:[#allocation11 + $0x138] sm:$0xff]
    %v2292 = vld [vmem:[#allocation11 + $0x140] sm:$0xff]
    %v2293 = vld [vmem:[#allocation11 + $0x148] sm:$0xff]
    %v2294 = vld [vmem:[#allocation11 + $0x150] sm:$0xff]
    %v2295 = vld [vmem:[#allocation11 + $0x158] sm:$0xff]
    %v2296 = vld [vmem:[#allocation11 + $0x160] sm:$0xff]
    %v2297 = vld [vmem:[#allocation11 + $0x168] sm:$0xff]
    %v2298 = vld [vmem:[#allocation11 + $0x170] sm:$0xff]
    %v2299 = vld [vmem:[#allocation11 + $0x178] sm:$0xff]
    %v2300 = vld [vmem:[#allocation11 + $0x180] sm:$0xff]
    %v2301 = vld [vmem:[#allocation11 + $0x188] sm:$0xff]
    %v2302 = vld [vmem:[#allocation11 + $0x190] sm:$0xff]
    %v2303 = vld [vmem:[#allocation11 + $0x198] sm:$0xff]
    %v2304 = vld [vmem:[#allocation11 + $0x1a0] sm:$0xff]
    %v2305 = vld [vmem:[#allocation11 + $0x1a8] sm:$0xff]
    %v2306 = vld [vmem:[#allocation11 + $0x1b0] sm:$0xff]
    %v2307 = vld [vmem:[#allocation11 + $0x1b8] sm:$0xff]
    %v2308 = vld [vmem:[#allocation11 + $0x1c0] sm:$0xff]
    %v2309 = vld [vmem:[#allocation11 + $0x1c8] sm:$0xff]
    %v2310 = vld [vmem:[#allocation11 + $0x1d0] sm:$0xff]
    %v2311 = vld [vmem:[#allocation11 + $0x1d8] sm:$0xff]
    %v2312 = vld [vmem:[#allocation11 + $0x1e0] sm:$0xff]
    %v2313 = vld [vmem:[#allocation11 + $0x1e8] sm:$0xff]
    %v2314 = vld [vmem:[#allocation11 + $0x1f0] sm:$0xff]
    %v2315 = vld [vmem:[#allocation11 + $0x1f8] sm:$0xff]
    %v2316 = vld [vmem:[#allocation11 + $0x200] sm:$0xff]
    %v2317 = vld [vmem:[#allocation11 + $0x208] sm:$0xff]
    %v2318 = vld [vmem:[#allocation11 + $0x210] sm:$0xff]
    %v2319 = vld [vmem:[#allocation11 + $0x218] sm:$0xff]
    %v2320 = vld [vmem:[#allocation11 + $0x220] sm:$0xff]
    %v2321 = vld [vmem:[#allocation11 + $0x228] sm:$0xff]
    %v2322 = vld [vmem:[#allocation11 + $0x230] sm:$0xff]
    %v2323 = vld [vmem:[#allocation11 + $0x238] sm:$0xff]
    %v2324 = vld [vmem:[#allocation11 + $0x240] sm:$0xff]
    %v2325 = vld [vmem:[#allocation11 + $0x248] sm:$0xff]
    %v2326 = vld [vmem:[#allocation11 + $0x250] sm:$0xff]
    %v2327 = vld [vmem:[#allocation11 + $0x258] sm:$0xff]
    %v2328 = vld [vmem:[#allocation11 + $0x260] sm:$0xff]
    %v2329 = vld [vmem:[#allocation11 + $0x268] sm:$0xff]
    %v2330 = vld [vmem:[#allocation11 + $0x270] sm:$0xff]
    %v2331 = vld [vmem:[#allocation11 + $0x278] sm:$0xff]
    %v2332 = vld [vmem:[#allocation11 + $0x280] sm:$0xff]
    %v2333 = vld [vmem:[#allocation11 + $0x288] sm:$0xff]
    %v2334 = vld [vmem:[#allocation11 + $0x290] sm:$0xff]
    %v2335 = vld [vmem:[#allocation11 + $0x298] sm:$0xff]
    %v2336 = vld [vmem:[#allocation11 + $0x2a0] sm:$0xff]
    %v2337 = vld [vmem:[#allocation11 + $0x2a8] sm:$0xff]
    %v2338 = vld [vmem:[#allocation11 + $0x2b0] sm:$0xff]
    %v2339 = vld [vmem:[#allocation11 + $0x2b8] sm:$0xff]
    %v2340 = vld [vmem:[#allocation11 + $0x2c0] sm:$0xff]
    %v2341 = vld [vmem:[#allocation11 + $0x2c8] sm:$0xff]
    %v2342 = vld [vmem:[#allocation11 + $0x2d0] sm:$0xff]
    %v2343 = vld [vmem:[#allocation11 + $0x2d8] sm:$0xff]
    %v2344 = vld [vmem:[#allocation11 + $0x2e0] sm:$0xff]
    %v2345 = vld [vmem:[#allocation11 + $0x2e8] sm:$0xff]
    %v2346 = vld [vmem:[#allocation11 + $0x2f0] sm:$0xff]
    %v2347 = vld [vmem:[#allocation11 + $0x2f8] sm:$0xff]
    %v2348 = vld [vmem:[#allocation11 + $0x300] sm:$0xff]
    %v2349 = vld [vmem:[#allocation11 + $0x308] sm:$0xff]
    %v2350 = vld [vmem:[#allocation11 + $0x310] sm:$0xff]
    %v2351 = vld [vmem:[#allocation11 + $0x318] sm:$0xff]
    %v2352 = vld [vmem:[#allocation11 + $0x320] sm:$0xff]
    %v2353 = vld [vmem:[#allocation11 + $0x328] sm:$0xff]
    %v2354 = vld [vmem:[#allocation11 + $0x330] sm:$0xff]
    %v2355 = vld [vmem:[#allocation11 + $0x338] sm:$0xff]
    %v2356 = vld [vmem:[#allocation11 + $0x340] sm:$0xff]
    %v2357 = vld [vmem:[#allocation11 + $0x348] sm:$0xff]
    %v2358 = vld [vmem:[#allocation11 + $0x350] sm:$0xff]
    %v2359 = vld [vmem:[#allocation11 + $0x358] sm:$0xff]
    %v2360 = vld [vmem:[#allocation11 + $0x360] sm:$0xff]
    %v2361 = vld [vmem:[#allocation11 + $0x368] sm:$0xff]
    %v2362 = vld [vmem:[#allocation11 + $0x370] sm:$0xff]
    %v2363 = vld [vmem:[#allocation11 + $0x378] sm:$0xff]
    %v2364 = vld [vmem:[#allocation11 + $0x380] sm:$0xff]
    %v2365 = vld [vmem:[#allocation11 + $0x388] sm:$0xff]
    %v2366 = vld [vmem:[#allocation11 + $0x390] sm:$0xff]
    %v2367 = vld [vmem:[#allocation11 + $0x398] sm:$0xff]
    %v2368 = vld [vmem:[#allocation11 + $0x3a0] sm:$0xff]
    %v2369 = vld [vmem:[#allocation11 + $0x3a8] sm:$0xff]
    %v2370 = vld [vmem:[#allocation11 + $0x3b0] sm:$0xff]
    %v2371 = vld [vmem:[#allocation11 + $0x3b8] sm:$0xff]
    %v2372 = vld [vmem:[#allocation11 + $0x3c0] sm:$0xff]
    %v2373 = vld [vmem:[#allocation11 + $0x3c8] sm:$0xff]
    %v2374 = vld [vmem:[#allocation11 + $0x3d0] sm:$0xff]
    %v2375 = vld [vmem:[#allocation11 + $0x3d8] sm:$0xff]
    %v2376 = vld [vmem:[#allocation11 + $0x3e0] sm:$0xff]
    %v2377 = vld [vmem:[#allocation11 + $0x3e8] sm:$0xff]
    %v2378 = vld [vmem:[#allocation11 + $0x3f0] sm:$0xff]
    %v2379 = vld [vmem:[#allocation11 + $0x3f8] sm:$0xff]
    %2380 = vmatprep.subr.mxu0 %v2313
    %2381 = vmatpush1.msra.mxu0 %v2312
    %2382 = vmatprep.subr.mxu0 %v2309
    %2383 = vmatpush1.msra.mxu0 %v2308
    %2384 = vmatprep.subr.mxu0 %v2305
    %2385 = vmatpush1.msra.mxu0 %v2304
    %2386 = vmatprep.subr.mxu0 %v2301
    %2387 = vmatpush1.msra.mxu0 %v2300
    %2388 = vmatprep.subr.mxu0 %v2297
    %2389 = vmatpush1.msra.mxu0 %v2296
    %2390 = vmatprep.subr.mxu0 %v2293
    %2391 = vmatpush1.msra.mxu0 %v2292
    %2392 = vmatprep.subr.mxu0 %v2289
    %2393 = vmatpush1.msra.mxu0 %v2288
    %2394 = vmatprep.subr.mxu0 %v2285
    %2395 = vmatpush1.msra.mxu0 %v2284
    %2396 = vmatprep.subr.mxu0 %v2281
    %2397 = vmatpush1.msra.mxu0 %v2280
    %2398 = vmatprep.subr.mxu0 %v2277
    %2399 = vmatpush1.msra.mxu0 %v2276
    %2400 = vmatprep.subr.mxu0 %v2273
    %2401 = vmatpush1.msra.mxu0 %v2272
    %2402 = vmatprep.subr.mxu0 %v2269
    %2403 = vmatpush1.msra.mxu0 %v2268
    %2404 = vmatprep.subr.mxu0 %v2265
    %2405 = vmatpush1.msra.mxu0 %v2264
    %2406 = vmatprep.subr.mxu0 %v2261
    %2407 = vmatpush1.msra.mxu0 %v2260
    %2408 = vmatprep.subr.mxu0 %v2257
    %2409 = vmatpush1.msra.mxu0 %v2256
    %2410 = vmatprep.subr.mxu0 %v2253
    %2411 = vmatpush1.msra.mxu0 %v2252
    %2412 = vmatprep.subr.mxu0 %v2377
    %2413 = vmatpush2.msra.mxu0 %v2376
    %2414 = vmatprep.subr.mxu0 %v2373
    %2415 = vmatpush2.msra.mxu0 %v2372
    %2416 = vmatprep.subr.mxu0 %v2369
    %2417 = vmatpush2.msra.mxu0 %v2368
    %2418 = vmatprep.subr.mxu0 %v2365
    %2419 = vmatpush2.msra.mxu0 %v2364
    %2420 = vmatprep.subr.mxu0 %v2361
    %2421 = vmatpush2.msra.mxu0 %v2360
    %2422 = vmatprep.subr.mxu0 %v2357
    %2423 = vmatpush2.msra.mxu0 %v2356
    %2424 = vmatprep.subr.mxu0 %v2353
    %2425 = vmatpush2.msra.mxu0 %v2352
    %2426 = vmatprep.subr.mxu0 %v2349
    %2427 = vmatpush2.msra.mxu0 %v2348
    %2428 = vmatprep.subr.mxu0 %v2345
    %2429 = vmatpush2.msra.mxu0 %v2344
    %2430 = vmatprep.subr.mxu0 %v2341
    %2431 = vmatpush2.msra.mxu0 %v2340
    %2432 = vmatprep.subr.mxu0 %v2337
    %2433 = vmatpush2.msra.mxu0 %v2336
    %2434 = vmatprep.subr.mxu0 %v2333
    %2435 = vmatpush2.msra.mxu0 %v2332
    %2436 = vmatprep.subr.mxu0 %v2329
    %2437 = vmatpush2.msra.mxu0 %v2328
    %2438 = vmatprep.subr.mxu0 %v2325
    %2439 = vmatpush2.msra.mxu0 %v2324
    %2440 = vmatprep.subr.mxu0 %v2321
    %2441 = vmatpush2.msra.mxu0 %v2320
    %2442 = vmatprep.subr.mxu0 %v2317
    %2443 = vmatpush2.msra.mxu0 %v2316
    %2444 = vmatprep.mubr.f32.mxu0 %v2249
    %2445 = vmatmul.mubr.f32.gmra.mxu0 %v2248
    %v2446 = vpop.f32.mrf.mxu0
    %v2447 = vadd.f32 0.0, %v2446
    %v2448 = vpop.f32.mrf.mxu0
    %v2449 = vadd.f32 0.0, %v2448
    %2450 = vmatprep.mubr.f32.mxu0 %v2251
    %2451 = vmatmul.mubr.f32.gmra.mxu0 %v2250
    %v2452 = vpop.f32.mrf.mxu0
    %v2453 = vadd.f32 0.0, %v2452
    %v2454 = vpop.f32.mrf.mxu0
    %v2455 = vadd.f32 0.0, %v2454
    %2456 = vdwg.mxu0
    %2457 = vmatprep.subr.mxu0 %v2315
    %2458 = vmatpush1.msra.mxu0 %v2314
    %2459 = vmatprep.subr.mxu0 %v2311
    %2460 = vmatpush1.msra.mxu0 %v2310
    %2461 = vmatprep.subr.mxu0 %v2307
    %2462 = vmatpush1.msra.mxu0 %v2306
    %2463 = vmatprep.subr.mxu0 %v2303
    %2464 = vmatpush1.msra.mxu0 %v2302
    %2465 = vmatprep.subr.mxu0 %v2299
    %2466 = vmatpush1.msra.mxu0 %v2298
    %2467 = vmatprep.subr.mxu0 %v2295
    %2468 = vmatpush1.msra.mxu0 %v2294
    %2469 = vmatprep.subr.mxu0 %v2291
    %2470 = vmatpush1.msra.mxu0 %v2290
    %2471 = vmatprep.subr.mxu0 %v2287
    %2472 = vmatpush1.msra.mxu0 %v2286
    %2473 = vmatprep.subr.mxu0 %v2283
    %2474 = vmatpush1.msra.mxu0 %v2282
    %2475 = vmatprep.subr.mxu0 %v2279
    %2476 = vmatpush1.msra.mxu0 %v2278
    %2477 = vmatprep.subr.mxu0 %v2275
    %2478 = vmatpush1.msra.mxu0 %v2274
    %2479 = vmatprep.subr.mxu0 %v2271
    %2480 = vmatpush1.msra.mxu0 %v2270
    %2481 = vmatprep.subr.mxu0 %v2267
    %2482 = vmatpush1.msra.mxu0 %v2266
    %2483 = vmatprep.subr.mxu0 %v2263
    %2484 = vmatpush1.msra.mxu0 %v2262
    %2485 = vmatprep.subr.mxu0 %v2259
    %2486 = vmatpush1.msra.mxu0 %v2258
    %2487 = vmatprep.subr.mxu0 %v2255
    %2488 = vmatpush1.msra.mxu0 %v2254
    %2489 = vmatprep.subr.mxu0 %v2379
    %2490 = vmatpush2.msra.mxu0 %v2378
    %2491 = vmatprep.subr.mxu0 %v2375
    %2492 = vmatpush2.msra.mxu0 %v2374
    %2493 = vmatprep.subr.mxu0 %v2371
    %2494 = vmatpush2.msra.mxu0 %v2370
    %2495 = vmatprep.subr.mxu0 %v2367
    %2496 = vmatpush2.msra.mxu0 %v2366
    %2497 = vmatprep.subr.mxu0 %v2363
    %2498 = vmatpush2.msra.mxu0 %v2362
    %2499 = vmatprep.subr.mxu0 %v2359
    %2500 = vmatpush2.msra.mxu0 %v2358
    %2501 = vmatprep.subr.mxu0 %v2355
    %2502 = vmatpush2.msra.mxu0 %v2354
    %2503 = vmatprep.subr.mxu0 %v2351
    %2504 = vmatpush2.msra.mxu0 %v2350
    %2505 = vmatprep.subr.mxu0 %v2347
    %2506 = vmatpush2.msra.mxu0 %v2346
    %2507 = vmatprep.subr.mxu0 %v2343
    %2508 = vmatpush2.msra.mxu0 %v2342
    %2509 = vmatprep.subr.mxu0 %v2339
    %2510 = vmatpush2.msra.mxu0 %v2338
    %2511 = vmatprep.subr.mxu0 %v2335
    %2512 = vmatpush2.msra.mxu0 %v2334
    %2513 = vmatprep.subr.mxu0 %v2331
    %2514 = vmatpush2.msra.mxu0 %v2330
    %2515 = vmatprep.subr.mxu0 %v2327
    %2516 = vmatpush2.msra.mxu0 %v2326
    %2517 = vmatprep.subr.mxu0 %v2323
    %2518 = vmatpush2.msra.mxu0 %v2322
    %2519 = vmatprep.subr.mxu0 %v2319
    %2520 = vmatpush2.msra.mxu0 %v2318
    %2521 = vmatprep.mubr.f32.mxu0 %v2249
    %2522 = vmatmul.mubr.f32.gmra.mxu0 %v2248
    %v2523 = vpop.f32.mrf.mxu0
    %v2524 = vadd.f32 0.0, %v2523
    %v2525 = vpop.f32.mrf.mxu0
    %v2526 = vadd.f32 0.0, %v2525
    %2527 = vmatprep.mubr.f32.mxu0 %v2251
    %2528 = vmatmul.mubr.f32.gmra.mxu0 %v2250
    %v2529 = vpop.f32.mrf.mxu0
    %v2530 = vadd.f32 0.0, %v2529
    %v2531 = vpop.f32.mrf.mxu0
    %v2532 = vadd.f32 0.0, %v2531
    %2533 = vdwg.mxu0
    %v2534 = vxor.u32 %v2447, 2147483648
    %v2535 = vxor.u32 %v2449, 2147483648
    %v2536 = vxor.u32 %v2524, 2147483648
    %v2537 = vxor.u32 %v2526, 2147483648
    %v2538 = vxor.u32 %v2453, 2147483648
    %v2539 = vxor.u32 %v2455, 2147483648
    %v2540 = vxor.u32 %v2530, 2147483648
    %v2541 = vxor.u32 %v2532, 2147483648
    %v2542 = vmul.f32 %v2534, 1.442695
    %v2543 = vpow.pop %v2542
    %v2544 = vmul.f32 %v2535, 1.442695
    %v2545 = vpow.pop %v2544
    %v2546 = vmul.f32 %v2536, 1.442695
    %v2547 = vpow.pop %v2546
    %v2548 = vmul.f32 %v2537, 1.442695
    %v2549 = vpow.pop %v2548
    %v2550 = vmul.f32 %v2538, 1.442695
    %v2551 = vpow.pop %v2550
    %v2552 = vmul.f32 %v2539, 1.442695
    %v2553 = vpow.pop %v2552
    %v2554 = vmul.f32 %v2540, 1.442695
    %v2555 = vpow.pop %v2554
    %v2556 = vmul.f32 %v2541, 1.442695
    %v2557 = vpow.pop %v2556
    %v2558 = vadd.f32 %v2543, 1.0
    %v2559 = vadd.f32 %v2545, 1.0
    %v2560 = vadd.f32 %v2547, 1.0
    %v2561 = vadd.f32 %v2549, 1.0
    %v2562 = vadd.f32 %v2551, 1.0
    %v2563 = vadd.f32 %v2553, 1.0
    %v2564 = vadd.f32 %v2555, 1.0
    %v2565 = vadd.f32 %v2557, 1.0
    %v2566 = vrcp.pop %v2558
    %v2567 = vmul.f32 1.0, %v2566
    %v2568 = vrcp.pop %v2559
    %v2569 = vmul.f32 1.0, %v2568
    %v2570 = vrcp.pop %v2560
    %v2571 = vmul.f32 1.0, %v2570
    %v2572 = vrcp.pop %v2561
    %v2573 = vmul.f32 1.0, %v2572
    %v2574 = vrcp.pop %v2562
    %v2575 = vmul.f32 1.0, %v2574
    %v2576 = vrcp.pop %v2563
    %v2577 = vmul.f32 1.0, %v2576
    %v2578 = vrcp.pop %v2564
    %v2579 = vmul.f32 1.0, %v2578
    %v2580 = vrcp.pop %v2565
    %v2581 = vmul.f32 1.0, %v2580
    %v2582 = vmul.f32 %v2447, %v2567
    %v2583 = vmul.f32 %v2449, %v2569
    %v2584 = vmul.f32 %v2524, %v2571
    %v2585 = vmul.f32 %v2526, %v2573
    %v2586 = vmul.f32 %v2453, %v2575
    %v2587 = vmul.f32 %v2455, %v2577
    %v2588 = vmul.f32 %v2530, %v2579
    %v2589 = vmul.f32 %v2532, %v2581
    %v2590 = vld [vmem:[#allocation13] sm:$0xff]
    %v2591 = vld [vmem:[#allocation13 + $0x8] sm:$0xff]
    %v2592 = vld [vmem:[#allocation13 + $0x10] sm:$0xff]
    %v2593 = vld [vmem:[#allocation13 + $0x18] sm:$0xff]
    %v2594 = vld [vmem:[#allocation13 + $0x20] sm:$0xff]
    %v2595 = vld [vmem:[#allocation13 + $0x28] sm:$0xff]
    %v2596 = vld [vmem:[#allocation13 + $0x30] sm:$0xff]
    %v2597 = vld [vmem:[#allocation13 + $0x38] sm:$0xff]
    %v2598 = vld [vmem:[#allocation13 + $0x40] sm:$0xff]
    %v2599 = vld [vmem:[#allocation13 + $0x48] sm:$0xff]
    %v2600 = vld [vmem:[#allocation13 + $0x50] sm:$0xff]
    %v2601 = vld [vmem:[#allocation13 + $0x58] sm:$0xff]
    %v2602 = vld [vmem:[#allocation13 + $0x60] sm:$0xff]
    %v2603 = vld [vmem:[#allocation13 + $0x68] sm:$0xff]
    %v2604 = vld [vmem:[#allocation13 + $0x70] sm:$0xff]
    %v2605 = vld [vmem:[#allocation13 + $0x78] sm:$0xff]
    %v2606 = vld [vmem:[#allocation13 + $0x80] sm:$0xff]
    %v2607 = vld [vmem:[#allocation13 + $0x88] sm:$0xff]
    %v2608 = vld [vmem:[#allocation13 + $0x90] sm:$0xff]
    %v2609 = vld [vmem:[#allocation13 + $0x98] sm:$0xff]
    %v2610 = vld [vmem:[#allocation13 + $0xa0] sm:$0xff]
    %v2611 = vld [vmem:[#allocation13 + $0xa8] sm:$0xff]
    %v2612 = vld [vmem:[#allocation13 + $0xb0] sm:$0xff]
    %v2613 = vld [vmem:[#allocation13 + $0xb8] sm:$0xff]
    %v2614 = vld [vmem:[#allocation13 + $0xc0] sm:$0xff]
    %v2615 = vld [vmem:[#allocation13 + $0xc8] sm:$0xff]
    %v2616 = vld [vmem:[#allocation13 + $0xd0] sm:$0xff]
    %v2617 = vld [vmem:[#allocation13 + $0xd8] sm:$0xff]
    %v2618 = vld [vmem:[#allocation13 + $0xe0] sm:$0xff]
    %v2619 = vld [vmem:[#allocation13 + $0xe8] sm:$0xff]
    %v2620 = vld [vmem:[#allocation13 + $0xf0] sm:$0xff]
    %v2621 = vld [vmem:[#allocation13 + $0xf8] sm:$0xff]
    %v2622 = vld [vmem:[#allocation13 + $0x100] sm:$0xff]
    %v2623 = vld [vmem:[#allocation13 + $0x108] sm:$0xff]
    %v2624 = vld [vmem:[#allocation13 + $0x110] sm:$0xff]
    %v2625 = vld [vmem:[#allocation13 + $0x118] sm:$0xff]
    %v2626 = vld [vmem:[#allocation13 + $0x120] sm:$0xff]
    %v2627 = vld [vmem:[#allocation13 + $0x128] sm:$0xff]
    %v2628 = vld [vmem:[#allocation13 + $0x130] sm:$0xff]
    %v2629 = vld [vmem:[#allocation13 + $0x138] sm:$0xff]
    %v2630 = vld [vmem:[#allocation13 + $0x140] sm:$0xff]
    %v2631 = vld [vmem:[#allocation13 + $0x148] sm:$0xff]
    %v2632 = vld [vmem:[#allocation13 + $0x150] sm:$0xff]
    %v2633 = vld [vmem:[#allocation13 + $0x158] sm:$0xff]
    %v2634 = vld [vmem:[#allocation13 + $0x160] sm:$0xff]
    %v2635 = vld [vmem:[#allocation13 + $0x168] sm:$0xff]
    %v2636 = vld [vmem:[#allocation13 + $0x170] sm:$0xff]
    %v2637 = vld [vmem:[#allocation13 + $0x178] sm:$0xff]
    %v2638 = vld [vmem:[#allocation13 + $0x180] sm:$0xff]
    %v2639 = vld [vmem:[#allocation13 + $0x188] sm:$0xff]
    %v2640 = vld [vmem:[#allocation13 + $0x190] sm:$0xff]
    %v2641 = vld [vmem:[#allocation13 + $0x198] sm:$0xff]
    %v2642 = vld [vmem:[#allocation13 + $0x1a0] sm:$0xff]
    %v2643 = vld [vmem:[#allocation13 + $0x1a8] sm:$0xff]
    %v2644 = vld [vmem:[#allocation13 + $0x1b0] sm:$0xff]
    %v2645 = vld [vmem:[#allocation13 + $0x1b8] sm:$0xff]
    %v2646 = vld [vmem:[#allocation13 + $0x1c0] sm:$0xff]
    %v2647 = vld [vmem:[#allocation13 + $0x1c8] sm:$0xff]
    %v2648 = vld [vmem:[#allocation13 + $0x1d0] sm:$0xff]
    %v2649 = vld [vmem:[#allocation13 + $0x1d8] sm:$0xff]
    %v2650 = vld [vmem:[#allocation13 + $0x1e0] sm:$0xff]
    %v2651 = vld [vmem:[#allocation13 + $0x1e8] sm:$0xff]
    %v2652 = vld [vmem:[#allocation13 + $0x1f0] sm:$0xff]
    %v2653 = vld [vmem:[#allocation13 + $0x1f8] sm:$0xff]
    %v2654 = vld [vmem:[#allocation13 + $0x200] sm:$0xff]
    %v2655 = vld [vmem:[#allocation13 + $0x208] sm:$0xff]
    %v2656 = vld [vmem:[#allocation13 + $0x210] sm:$0xff]
    %v2657 = vld [vmem:[#allocation13 + $0x218] sm:$0xff]
    %v2658 = vld [vmem:[#allocation13 + $0x220] sm:$0xff]
    %v2659 = vld [vmem:[#allocation13 + $0x228] sm:$0xff]
    %v2660 = vld [vmem:[#allocation13 + $0x230] sm:$0xff]
    %v2661 = vld [vmem:[#allocation13 + $0x238] sm:$0xff]
    %v2662 = vld [vmem:[#allocation13 + $0x240] sm:$0xff]
    %v2663 = vld [vmem:[#allocation13 + $0x248] sm:$0xff]
    %v2664 = vld [vmem:[#allocation13 + $0x250] sm:$0xff]
    %v2665 = vld [vmem:[#allocation13 + $0x258] sm:$0xff]
    %v2666 = vld [vmem:[#allocation13 + $0x260] sm:$0xff]
    %v2667 = vld [vmem:[#allocation13 + $0x268] sm:$0xff]
    %v2668 = vld [vmem:[#allocation13 + $0x270] sm:$0xff]
    %v2669 = vld [vmem:[#allocation13 + $0x278] sm:$0xff]
    %v2670 = vld [vmem:[#allocation13 + $0x280] sm:$0xff]
    %v2671 = vld [vmem:[#allocation13 + $0x288] sm:$0xff]
    %v2672 = vld [vmem:[#allocation13 + $0x290] sm:$0xff]
    %v2673 = vld [vmem:[#allocation13 + $0x298] sm:$0xff]
    %v2674 = vld [vmem:[#allocation13 + $0x2a0] sm:$0xff]
    %v2675 = vld [vmem:[#allocation13 + $0x2a8] sm:$0xff]
    %v2676 = vld [vmem:[#allocation13 + $0x2b0] sm:$0xff]
    %v2677 = vld [vmem:[#allocation13 + $0x2b8] sm:$0xff]
    %v2678 = vld [vmem:[#allocation13 + $0x2c0] sm:$0xff]
    %v2679 = vld [vmem:[#allocation13 + $0x2c8] sm:$0xff]
    %v2680 = vld [vmem:[#allocation13 + $0x2d0] sm:$0xff]
    %v2681 = vld [vmem:[#allocation13 + $0x2d8] sm:$0xff]
    %v2682 = vld [vmem:[#allocation13 + $0x2e0] sm:$0xff]
    %v2683 = vld [vmem:[#allocation13 + $0x2e8] sm:$0xff]
    %v2684 = vld [vmem:[#allocation13 + $0x2f0] sm:$0xff]
    %v2685 = vld [vmem:[#allocation13 + $0x2f8] sm:$0xff]
    %v2686 = vld [vmem:[#allocation13 + $0x300] sm:$0xff]
    %v2687 = vld [vmem:[#allocation13 + $0x308] sm:$0xff]
    %v2688 = vld [vmem:[#allocation13 + $0x310] sm:$0xff]
    %v2689 = vld [vmem:[#allocation13 + $0x318] sm:$0xff]
    %v2690 = vld [vmem:[#allocation13 + $0x320] sm:$0xff]
    %v2691 = vld [vmem:[#allocation13 + $0x328] sm:$0xff]
    %v2692 = vld [vmem:[#allocation13 + $0x330] sm:$0xff]
    %v2693 = vld [vmem:[#allocation13 + $0x338] sm:$0xff]
    %v2694 = vld [vmem:[#allocation13 + $0x340] sm:$0xff]
    %v2695 = vld [vmem:[#allocation13 + $0x348] sm:$0xff]
    %v2696 = vld [vmem:[#allocation13 + $0x350] sm:$0xff]
    %v2697 = vld [vmem:[#allocation13 + $0x358] sm:$0xff]
    %v2698 = vld [vmem:[#allocation13 + $0x360] sm:$0xff]
    %v2699 = vld [vmem:[#allocation13 + $0x368] sm:$0xff]
    %v2700 = vld [vmem:[#allocation13 + $0x370] sm:$0xff]
    %v2701 = vld [vmem:[#allocation13 + $0x378] sm:$0xff]
    %v2702 = vld [vmem:[#allocation13 + $0x380] sm:$0xff]
    %v2703 = vld [vmem:[#allocation13 + $0x388] sm:$0xff]
    %v2704 = vld [vmem:[#allocation13 + $0x390] sm:$0xff]
    %v2705 = vld [vmem:[#allocation13 + $0x398] sm:$0xff]
    %v2706 = vld [vmem:[#allocation13 + $0x3a0] sm:$0xff]
    %v2707 = vld [vmem:[#allocation13 + $0x3a8] sm:$0xff]
    %v2708 = vld [vmem:[#allocation13 + $0x3b0] sm:$0xff]
    %v2709 = vld [vmem:[#allocation13 + $0x3b8] sm:$0xff]
    %v2710 = vld [vmem:[#allocation13 + $0x3c0] sm:$0xff]
    %v2711 = vld [vmem:[#allocation13 + $0x3c8] sm:$0xff]
    %v2712 = vld [vmem:[#allocation13 + $0x3d0] sm:$0xff]
    %v2713 = vld [vmem:[#allocation13 + $0x3d8] sm:$0xff]
    %v2714 = vld [vmem:[#allocation13 + $0x3e0] sm:$0xff]
    %v2715 = vld [vmem:[#allocation13 + $0x3e8] sm:$0xff]
    %v2716 = vld [vmem:[#allocation13 + $0x3f0] sm:$0xff]
    %v2717 = vld [vmem:[#allocation13 + $0x3f8] sm:$0xff]
    %2718 = vmatprep.subr.mxu0 %v2651
    %2719 = vmatpush1.msra.mxu0 %v2650
    %2720 = vmatprep.subr.mxu0 %v2647
    %2721 = vmatpush1.msra.mxu0 %v2646
    %2722 = vmatprep.subr.mxu0 %v2643
    %2723 = vmatpush1.msra.mxu0 %v2642
    %2724 = vmatprep.subr.mxu0 %v2639
    %2725 = vmatpush1.msra.mxu0 %v2638
    %2726 = vmatprep.subr.mxu0 %v2635
    %2727 = vmatpush1.msra.mxu0 %v2634
    %2728 = vmatprep.subr.mxu0 %v2631
    %2729 = vmatpush1.msra.mxu0 %v2630
    %2730 = vmatprep.subr.mxu0 %v2627
    %2731 = vmatpush1.msra.mxu0 %v2626
    %2732 = vmatprep.subr.mxu0 %v2623
    %2733 = vmatpush1.msra.mxu0 %v2622
    %2734 = vmatprep.subr.mxu0 %v2619
    %2735 = vmatpush1.msra.mxu0 %v2618
    %2736 = vmatprep.subr.mxu0 %v2615
    %2737 = vmatpush1.msra.mxu0 %v2614
    %2738 = vmatprep.subr.mxu0 %v2611
    %2739 = vmatpush1.msra.mxu0 %v2610
    %2740 = vmatprep.subr.mxu0 %v2607
    %2741 = vmatpush1.msra.mxu0 %v2606
    %2742 = vmatprep.subr.mxu0 %v2603
    %2743 = vmatpush1.msra.mxu0 %v2602
    %2744 = vmatprep.subr.mxu0 %v2599
    %2745 = vmatpush1.msra.mxu0 %v2598
    %2746 = vmatprep.subr.mxu0 %v2595
    %2747 = vmatpush1.msra.mxu0 %v2594
    %2748 = vmatprep.subr.mxu0 %v2591
    %2749 = vmatpush1.msra.mxu0 %v2590
    %2750 = vmatprep.subr.mxu0 %v2715
    %2751 = vmatpush2.msra.mxu0 %v2714
    %2752 = vmatprep.subr.mxu0 %v2711
    %2753 = vmatpush2.msra.mxu0 %v2710
    %2754 = vmatprep.subr.mxu0 %v2707
    %2755 = vmatpush2.msra.mxu0 %v2706
    %2756 = vmatprep.subr.mxu0 %v2703
    %2757 = vmatpush2.msra.mxu0 %v2702
    %2758 = vmatprep.subr.mxu0 %v2699
    %2759 = vmatpush2.msra.mxu0 %v2698
    %2760 = vmatprep.subr.mxu0 %v2695
    %2761 = vmatpush2.msra.mxu0 %v2694
    %2762 = vmatprep.subr.mxu0 %v2691
    %2763 = vmatpush2.msra.mxu0 %v2690
    %2764 = vmatprep.subr.mxu0 %v2687
    %2765 = vmatpush2.msra.mxu0 %v2686
    %2766 = vmatprep.subr.mxu0 %v2683
    %2767 = vmatpush2.msra.mxu0 %v2682
    %2768 = vmatprep.subr.mxu0 %v2679
    %2769 = vmatpush2.msra.mxu0 %v2678
    %2770 = vmatprep.subr.mxu0 %v2675
    %2771 = vmatpush2.msra.mxu0 %v2674
    %2772 = vmatprep.subr.mxu0 %v2671
    %2773 = vmatpush2.msra.mxu0 %v2670
    %2774 = vmatprep.subr.mxu0 %v2667
    %2775 = vmatpush2.msra.mxu0 %v2666
    %2776 = vmatprep.subr.mxu0 %v2663
    %2777 = vmatpush2.msra.mxu0 %v2662
    %2778 = vmatprep.subr.mxu0 %v2659
    %2779 = vmatpush2.msra.mxu0 %v2658
    %2780 = vmatprep.subr.mxu0 %v2655
    %2781 = vmatpush2.msra.mxu0 %v2654
    %2782 = vmatprep.mubr.f32.mxu0 %v2249
    %2783 = vmatmul.mubr.f32.gmra.mxu0 %v2248
    %v2784 = vpop.f32.mrf.mxu0
    %v2785 = vadd.f32 0.0, %v2784
    %v2786 = vpop.f32.mrf.mxu0
    %v2787 = vadd.f32 0.0, %v2786
    %2788 = vmatprep.mubr.f32.mxu0 %v2251
    %2789 = vmatmul.mubr.f32.gmra.mxu0 %v2250
    %v2790 = vpop.f32.mrf.mxu0
    %v2791 = vadd.f32 0.0, %v2790
    %v2792 = vpop.f32.mrf.mxu0
    %v2793 = vadd.f32 0.0, %v2792
    %2794 = vdwg.mxu0
    %2795 = vmatprep.subr.mxu0 %v2653
    %2796 = vmatpush1.msra.mxu0 %v2652
    %2797 = vmatprep.subr.mxu0 %v2649
    %2798 = vmatpush1.msra.mxu0 %v2648
    %2799 = vmatprep.subr.mxu0 %v2645
    %2800 = vmatpush1.msra.mxu0 %v2644
    %2801 = vmatprep.subr.mxu0 %v2641
    %2802 = vmatpush1.msra.mxu0 %v2640
    %2803 = vmatprep.subr.mxu0 %v2637
    %2804 = vmatpush1.msra.mxu0 %v2636
    %2805 = vmatprep.subr.mxu0 %v2633
    %2806 = vmatpush1.msra.mxu0 %v2632
    %2807 = vmatprep.subr.mxu0 %v2629
    %2808 = vmatpush1.msra.mxu0 %v2628
    %2809 = vmatprep.subr.mxu0 %v2625
    %2810 = vmatpush1.msra.mxu0 %v2624
    %2811 = vmatprep.subr.mxu0 %v2621
    %2812 = vmatpush1.msra.mxu0 %v2620
    %2813 = vmatprep.subr.mxu0 %v2617
    %2814 = vmatpush1.msra.mxu0 %v2616
    %2815 = vmatprep.subr.mxu0 %v2613
    %2816 = vmatpush1.msra.mxu0 %v2612
    %2817 = vmatprep.subr.mxu0 %v2609
    %2818 = vmatpush1.msra.mxu0 %v2608
    %2819 = vmatprep.subr.mxu0 %v2605
    %2820 = vmatpush1.msra.mxu0 %v2604
    %2821 = vmatprep.subr.mxu0 %v2601
    %2822 = vmatpush1.msra.mxu0 %v2600
    %2823 = vmatprep.subr.mxu0 %v2597
    %2824 = vmatpush1.msra.mxu0 %v2596
    %2825 = vmatprep.subr.mxu0 %v2593
    %2826 = vmatpush1.msra.mxu0 %v2592
    %2827 = vmatprep.subr.mxu0 %v2717
    %2828 = vmatpush2.msra.mxu0 %v2716
    %2829 = vmatprep.subr.mxu0 %v2713
    %2830 = vmatpush2.msra.mxu0 %v2712
    %2831 = vmatprep.subr.mxu0 %v2709
    %2832 = vmatpush2.msra.mxu0 %v2708
    %2833 = vmatprep.subr.mxu0 %v2705
    %2834 = vmatpush2.msra.mxu0 %v2704
    %2835 = vmatprep.subr.mxu0 %v2701
    %2836 = vmatpush2.msra.mxu0 %v2700
    %2837 = vmatprep.subr.mxu0 %v2697
    %2838 = vmatpush2.msra.mxu0 %v2696
    %2839 = vmatprep.subr.mxu0 %v2693
    %2840 = vmatpush2.msra.mxu0 %v2692
    %2841 = vmatprep.subr.mxu0 %v2689
    %2842 = vmatpush2.msra.mxu0 %v2688
    %2843 = vmatprep.subr.mxu0 %v2685
    %2844 = vmatpush2.msra.mxu0 %v2684
    %2845 = vmatprep.subr.mxu0 %v2681
    %2846 = vmatpush2.msra.mxu0 %v2680
    %2847 = vmatprep.subr.mxu0 %v2677
    %2848 = vmatpush2.msra.mxu0 %v2676
    %2849 = vmatprep.subr.mxu0 %v2673
    %2850 = vmatpush2.msra.mxu0 %v2672
    %2851 = vmatprep.subr.mxu0 %v2669
    %2852 = vmatpush2.msra.mxu0 %v2668
    %2853 = vmatprep.subr.mxu0 %v2665
    %2854 = vmatpush2.msra.mxu0 %v2664
    %2855 = vmatprep.subr.mxu0 %v2661
    %2856 = vmatpush2.msra.mxu0 %v2660
    %2857 = vmatprep.subr.mxu0 %v2657
    %2858 = vmatpush2.msra.mxu0 %v2656
    %2859 = vmatprep.mubr.f32.mxu0 %v2249
    %2860 = vmatmul.mubr.f32.gmra.mxu0 %v2248
    %v2861 = vpop.f32.mrf.mxu0
    %v2862 = vadd.f32 0.0, %v2861
    %v2863 = vpop.f32.mrf.mxu0
    %v2864 = vadd.f32 0.0, %v2863
    %2865 = vmatprep.mubr.f32.mxu0 %v2251
    %2866 = vmatmul.mubr.f32.gmra.mxu0 %v2250
    %v2867 = vpop.f32.mrf.mxu0
    %v2868 = vadd.f32 0.0, %v2867
    %v2869 = vpop.f32.mrf.mxu0
    %v2870 = vadd.f32 0.0, %v2869
    %2871 = vdwg.mxu0
    %v2872 = vmul.f32 %v2582, %v2785
    %v2873 = vmul.f32 %v2583, %v2787
    %v2874 = vmul.f32 %v2584, %v2862
    %v2875 = vmul.f32 %v2585, %v2864
    %v2876 = vmul.f32 %v2586, %v2791
    %v2877 = vmul.f32 %v2587, %v2793
    %v2878 = vmul.f32 %v2588, %v2868
    %v2879 = vmul.f32 %v2589, %v2870
    %v2880 = vld [vmem:[#allocation14] sm:$0xff]
    %v2881 = vld [vmem:[#allocation14 + $0x8] sm:$0xff]
    %v2882 = vld [vmem:[#allocation14 + $0x10] sm:$0xff]
    %v2883 = vld [vmem:[#allocation14 + $0x18] sm:$0xff]
    %v2884 = vld [vmem:[#allocation14 + $0x20] sm:$0xff]
    %v2885 = vld [vmem:[#allocation14 + $0x28] sm:$0xff]
    %v2886 = vld [vmem:[#allocation14 + $0x30] sm:$0xff]
    %v2887 = vld [vmem:[#allocation14 + $0x38] sm:$0xff]
    %v2888 = vld [vmem:[#allocation14 + $0x40] sm:$0xff]
    %v2889 = vld [vmem:[#allocation14 + $0x48] sm:$0xff]
    %v2890 = vld [vmem:[#allocation14 + $0x50] sm:$0xff]
    %v2891 = vld [vmem:[#allocation14 + $0x58] sm:$0xff]
    %v2892 = vld [vmem:[#allocation14 + $0x60] sm:$0xff]
    %v2893 = vld [vmem:[#allocation14 + $0x68] sm:$0xff]
    %v2894 = vld [vmem:[#allocation14 + $0x70] sm:$0xff]
    %v2895 = vld [vmem:[#allocation14 + $0x78] sm:$0xff]
    %v2896 = vld [vmem:[#allocation14 + $0x80] sm:$0xff]
    %v2897 = vld [vmem:[#allocation14 + $0x88] sm:$0xff]
    %v2898 = vld [vmem:[#allocation14 + $0x90] sm:$0xff]
    %v2899 = vld [vmem:[#allocation14 + $0x98] sm:$0xff]
    %v2900 = vld [vmem:[#allocation14 + $0xa0] sm:$0xff]
    %v2901 = vld [vmem:[#allocation14 + $0xa8] sm:$0xff]
    %v2902 = vld [vmem:[#allocation14 + $0xb0] sm:$0xff]
    %v2903 = vld [vmem:[#allocation14 + $0xb8] sm:$0xff]
    %v2904 = vld [vmem:[#allocation14 + $0xc0] sm:$0xff]
    %v2905 = vld [vmem:[#allocation14 + $0xc8] sm:$0xff]
    %v2906 = vld [vmem:[#allocation14 + $0xd0] sm:$0xff]
    %v2907 = vld [vmem:[#allocation14 + $0xd8] sm:$0xff]
    %v2908 = vld [vmem:[#allocation14 + $0xe0] sm:$0xff]
    %v2909 = vld [vmem:[#allocation14 + $0xe8] sm:$0xff]
    %v2910 = vld [vmem:[#allocation14 + $0xf0] sm:$0xff]
    %v2911 = vld [vmem:[#allocation14 + $0xf8] sm:$0xff]
    %v2912 = vld [vmem:[#allocation14 + $0x100] sm:$0xff]
    %v2913 = vld [vmem:[#allocation14 + $0x108] sm:$0xff]
    %v2914 = vld [vmem:[#allocation14 + $0x110] sm:$0xff]
    %v2915 = vld [vmem:[#allocation14 + $0x118] sm:$0xff]
    %v2916 = vld [vmem:[#allocation14 + $0x120] sm:$0xff]
    %v2917 = vld [vmem:[#allocation14 + $0x128] sm:$0xff]
    %v2918 = vld [vmem:[#allocation14 + $0x130] sm:$0xff]
    %v2919 = vld [vmem:[#allocation14 + $0x138] sm:$0xff]
    %v2920 = vld [vmem:[#allocation14 + $0x140] sm:$0xff]
    %v2921 = vld [vmem:[#allocation14 + $0x148] sm:$0xff]
    %v2922 = vld [vmem:[#allocation14 + $0x150] sm:$0xff]
    %v2923 = vld [vmem:[#allocation14 + $0x158] sm:$0xff]
    %v2924 = vld [vmem:[#allocation14 + $0x160] sm:$0xff]
    %v2925 = vld [vmem:[#allocation14 + $0x168] sm:$0xff]
    %v2926 = vld [vmem:[#allocation14 + $0x170] sm:$0xff]
    %v2927 = vld [vmem:[#allocation14 + $0x178] sm:$0xff]
    %v2928 = vld [vmem:[#allocation14 + $0x180] sm:$0xff]
    %v2929 = vld [vmem:[#allocation14 + $0x188] sm:$0xff]
    %v2930 = vld [vmem:[#allocation14 + $0x190] sm:$0xff]
    %v2931 = vld [vmem:[#allocation14 + $0x198] sm:$0xff]
    %v2932 = vld [vmem:[#allocation14 + $0x1a0] sm:$0xff]
    %v2933 = vld [vmem:[#allocation14 + $0x1a8] sm:$0xff]
    %v2934 = vld [vmem:[#allocation14 + $0x1b0] sm:$0xff]
    %v2935 = vld [vmem:[#allocation14 + $0x1b8] sm:$0xff]
    %v2936 = vld [vmem:[#allocation14 + $0x1c0] sm:$0xff]
    %v2937 = vld [vmem:[#allocation14 + $0x1c8] sm:$0xff]
    %v2938 = vld [vmem:[#allocation14 + $0x1d0] sm:$0xff]
    %v2939 = vld [vmem:[#allocation14 + $0x1d8] sm:$0xff]
    %v2940 = vld [vmem:[#allocation14 + $0x1e0] sm:$0xff]
    %v2941 = vld [vmem:[#allocation14 + $0x1e8] sm:$0xff]
    %v2942 = vld [vmem:[#allocation14 + $0x1f0] sm:$0xff]
    %v2943 = vld [vmem:[#allocation14 + $0x1f8] sm:$0xff]
    %v2944 = vld [vmem:[#allocation14 + $0x200] sm:$0xff]
    %v2945 = vld [vmem:[#allocation14 + $0x208] sm:$0xff]
    %v2946 = vld [vmem:[#allocation14 + $0x210] sm:$0xff]
    %v2947 = vld [vmem:[#allocation14 + $0x218] sm:$0xff]
    %v2948 = vld [vmem:[#allocation14 + $0x220] sm:$0xff]
    %v2949 = vld [vmem:[#allocation14 + $0x228] sm:$0xff]
    %v2950 = vld [vmem:[#allocation14 + $0x230] sm:$0xff]
    %v2951 = vld [vmem:[#allocation14 + $0x238] sm:$0xff]
    %v2952 = vld [vmem:[#allocation14 + $0x240] sm:$0xff]
    %v2953 = vld [vmem:[#allocation14 + $0x248] sm:$0xff]
    %v2954 = vld [vmem:[#allocation14 + $0x250] sm:$0xff]
    %v2955 = vld [vmem:[#allocation14 + $0x258] sm:$0xff]
    %v2956 = vld [vmem:[#allocation14 + $0x260] sm:$0xff]
    %v2957 = vld [vmem:[#allocation14 + $0x268] sm:$0xff]
    %v2958 = vld [vmem:[#allocation14 + $0x270] sm:$0xff]
    %v2959 = vld [vmem:[#allocation14 + $0x278] sm:$0xff]
    %v2960 = vld [vmem:[#allocation14 + $0x280] sm:$0xff]
    %v2961 = vld [vmem:[#allocation14 + $0x288] sm:$0xff]
    %v2962 = vld [vmem:[#allocation14 + $0x290] sm:$0xff]
    %v2963 = vld [vmem:[#allocation14 + $0x298] sm:$0xff]
    %v2964 = vld [vmem:[#allocation14 + $0x2a0] sm:$0xff]
    %v2965 = vld [vmem:[#allocation14 + $0x2a8] sm:$0xff]
    %v2966 = vld [vmem:[#allocation14 + $0x2b0] sm:$0xff]
    %v2967 = vld [vmem:[#allocation14 + $0x2b8] sm:$0xff]
    %v2968 = vld [vmem:[#allocation14 + $0x2c0] sm:$0xff]
    %v2969 = vld [vmem:[#allocation14 + $0x2c8] sm:$0xff]
    %v2970 = vld [vmem:[#allocation14 + $0x2d0] sm:$0xff]
    %v2971 = vld [vmem:[#allocation14 + $0x2d8] sm:$0xff]
    %v2972 = vld [vmem:[#allocation14 + $0x2e0] sm:$0xff]
    %v2973 = vld [vmem:[#allocation14 + $0x2e8] sm:$0xff]
    %v2974 = vld [vmem:[#allocation14 + $0x2f0] sm:$0xff]
    %v2975 = vld [vmem:[#allocation14 + $0x2f8] sm:$0xff]
    %v2976 = vld [vmem:[#allocation14 + $0x300] sm:$0xff]
    %v2977 = vld [vmem:[#allocation14 + $0x308] sm:$0xff]
    %v2978 = vld [vmem:[#allocation14 + $0x310] sm:$0xff]
    %v2979 = vld [vmem:[#allocation14 + $0x318] sm:$0xff]
    %v2980 = vld [vmem:[#allocation14 + $0x320] sm:$0xff]
    %v2981 = vld [vmem:[#allocation14 + $0x328] sm:$0xff]
    %v2982 = vld [vmem:[#allocation14 + $0x330] sm:$0xff]
    %v2983 = vld [vmem:[#allocation14 + $0x338] sm:$0xff]
    %v2984 = vld [vmem:[#allocation14 + $0x340] sm:$0xff]
    %v2985 = vld [vmem:[#allocation14 + $0x348] sm:$0xff]
    %v2986 = vld [vmem:[#allocation14 + $0x350] sm:$0xff]
    %v2987 = vld [vmem:[#allocation14 + $0x358] sm:$0xff]
    %v2988 = vld [vmem:[#allocation14 + $0x360] sm:$0xff]
    %v2989 = vld [vmem:[#allocation14 + $0x368] sm:$0xff]
    %v2990 = vld [vmem:[#allocation14 + $0x370] sm:$0xff]
    %v2991 = vld [vmem:[#allocation14 + $0x378] sm:$0xff]
    %v2992 = vld [vmem:[#allocation14 + $0x380] sm:$0xff]
    %v2993 = vld [vmem:[#allocation14 + $0x388] sm:$0xff]
    %v2994 = vld [vmem:[#allocation14 + $0x390] sm:$0xff]
    %v2995 = vld [vmem:[#allocation14 + $0x398] sm:$0xff]
    %v2996 = vld [vmem:[#allocation14 + $0x3a0] sm:$0xff]
    %v2997 = vld [vmem:[#allocation14 + $0x3a8] sm:$0xff]
    %v2998 = vld [vmem:[#allocation14 + $0x3b0] sm:$0xff]
    %v2999 = vld [vmem:[#allocation14 + $0x3b8] sm:$0xff]
    %v3000 = vld [vmem:[#allocation14 + $0x3c0] sm:$0xff]
    %v3001 = vld [vmem:[#allocation14 + $0x3c8] sm:$0xff]
    %v3002 = vld [vmem:[#allocation14 + $0x3d0] sm:$0xff]
    %v3003 = vld [vmem:[#allocation14 + $0x3d8] sm:$0xff]
    %v3004 = vld [vmem:[#allocation14 + $0x3e0] sm:$0xff]
    %v3005 = vld [vmem:[#allocation14 + $0x3e8] sm:$0xff]
    %v3006 = vld [vmem:[#allocation14 + $0x3f0] sm:$0xff]
    %v3007 = vld [vmem:[#allocation14 + $0x3f8] sm:$0xff]
    %3008 = vmatprep.subr.mxu0 %v2911
    %3009 = vmatpush1.msra.mxu0 %v2910
    %3010 = vmatprep.subr.mxu0 %v2909
    %3011 = vmatpush1.msra.mxu0 %v2908
    %3012 = vmatprep.subr.mxu0 %v2907
    %3013 = vmatpush1.msra.mxu0 %v2906
    %3014 = vmatprep.subr.mxu0 %v2905
    %3015 = vmatpush1.msra.mxu0 %v2904
    %3016 = vmatprep.subr.mxu0 %v2903
    %3017 = vmatpush1.msra.mxu0 %v2902
    %3018 = vmatprep.subr.mxu0 %v2901
    %3019 = vmatpush1.msra.mxu0 %v2900
    %3020 = vmatprep.subr.mxu0 %v2899
    %3021 = vmatpush1.msra.mxu0 %v2898
    %3022 = vmatprep.subr.mxu0 %v2897
    %3023 = vmatpush1.msra.mxu0 %v2896
    %3024 = vmatprep.subr.mxu0 %v2895
    %3025 = vmatpush1.msra.mxu0 %v2894
    %3026 = vmatprep.subr.mxu0 %v2893
    %3027 = vmatpush1.msra.mxu0 %v2892
    %3028 = vmatprep.subr.mxu0 %v2891
    %3029 = vmatpush1.msra.mxu0 %v2890
    %3030 = vmatprep.subr.mxu0 %v2889
    %3031 = vmatpush1.msra.mxu0 %v2888
    %3032 = vmatprep.subr.mxu0 %v2887
    %3033 = vmatpush1.msra.mxu0 %v2886
    %3034 = vmatprep.subr.mxu0 %v2885
    %3035 = vmatpush1.msra.mxu0 %v2884
    %3036 = vmatprep.subr.mxu0 %v2883
    %3037 = vmatpush1.msra.mxu0 %v2882
    %3038 = vmatprep.subr.mxu0 %v2881
    %3039 = vmatpush1.msra.mxu0 %v2880
    %3040 = vmatprep.subr.mxu0 %v2943
    %3041 = vmatpush2.msra.mxu0 %v2942
    %3042 = vmatprep.subr.mxu0 %v2941
    %3043 = vmatpush2.msra.mxu0 %v2940
    %3044 = vmatprep.subr.mxu0 %v2939
    %3045 = vmatpush2.msra.mxu0 %v2938
    %3046 = vmatprep.subr.mxu0 %v2937
    %3047 = vmatpush2.msra.mxu0 %v2936
    %3048 = vmatprep.subr.mxu0 %v2935
    %3049 = vmatpush2.msra.mxu0 %v2934
    %3050 = vmatprep.subr.mxu0 %v2933
    %3051 = vmatpush2.msra.mxu0 %v2932
    %3052 = vmatprep.subr.mxu0 %v2931
    %3053 = vmatpush2.msra.mxu0 %v2930
    %3054 = vmatprep.subr.mxu0 %v2929
    %3055 = vmatpush2.msra.mxu0 %v2928
    %3056 = vmatprep.subr.mxu0 %v2927
    %3057 = vmatpush2.msra.mxu0 %v2926
    %3058 = vmatprep.subr.mxu0 %v2925
    %3059 = vmatpush2.msra.mxu0 %v2924
    %3060 = vmatprep.subr.mxu0 %v2923
    %3061 = vmatpush2.msra.mxu0 %v2922
    %3062 = vmatprep.subr.mxu0 %v2921
    %3063 = vmatpush2.msra.mxu0 %v2920
    %3064 = vmatprep.subr.mxu0 %v2919
    %3065 = vmatpush2.msra.mxu0 %v2918
    %3066 = vmatprep.subr.mxu0 %v2917
    %3067 = vmatpush2.msra.mxu0 %v2916
    %3068 = vmatprep.subr.mxu0 %v2915
    %3069 = vmatpush2.msra.mxu0 %v2914
    %3070 = vmatprep.subr.mxu0 %v2913
    %3071 = vmatpush2.msra.mxu0 %v2912
    %3072 = vmatprep.mubr.f32.mxu0 %v2873
    %3073 = vmatmul.mubr.f32.gmra.mxu0 %v2872
    %v3074 = vpop.f32.mrf.mxu0
    %v3075 = vadd.f32 0.0, %v3074
    %v3076 = vpop.f32.mrf.mxu0
    %v3077 = vadd.f32 0.0, %v3076
    %3078 = vmatprep.mubr.f32.mxu0 %v2877
    %3079 = vmatmul.mubr.f32.gmra.mxu0 %v2876
    %v3080 = vpop.f32.mrf.mxu0
    %v3081 = vadd.f32 0.0, %v3080
    %v3082 = vpop.f32.mrf.mxu0
    %v3083 = vadd.f32 0.0, %v3082
    %3084 = vdwg.mxu0
    %3085 = vmatprep.subr.mxu0 %v2975
    %3086 = vmatpush1.msra.mxu0 %v2974
    %3087 = vmatprep.subr.mxu0 %v2973
    %3088 = vmatpush1.msra.mxu0 %v2972
    %3089 = vmatprep.subr.mxu0 %v2971
    %3090 = vmatpush1.msra.mxu0 %v2970
    %3091 = vmatprep.subr.mxu0 %v2969
    %3092 = vmatpush1.msra.mxu0 %v2968
    %3093 = vmatprep.subr.mxu0 %v2967
    %3094 = vmatpush1.msra.mxu0 %v2966
    %3095 = vmatprep.subr.mxu0 %v2965
    %3096 = vmatpush1.msra.mxu0 %v2964
    %3097 = vmatprep.subr.mxu0 %v2963
    %3098 = vmatpush1.msra.mxu0 %v2962
    %3099 = vmatprep.subr.mxu0 %v2961
    %3100 = vmatpush1.msra.mxu0 %v2960
    %3101 = vmatprep.subr.mxu0 %v2959
    %3102 = vmatpush1.msra.mxu0 %v2958
    %3103 = vmatprep.subr.mxu0 %v2957
    %3104 = vmatpush1.msra.mxu0 %v2956
    %3105 = vmatprep.subr.mxu0 %v2955
    %3106 = vmatpush1.msra.mxu0 %v2954
    %3107 = vmatprep.subr.mxu0 %v2953
    %3108 = vmatpush1.msra.mxu0 %v2952
    %3109 = vmatprep.subr.mxu0 %v2951
    %3110 = vmatpush1.msra.mxu0 %v2950
    %3111 = vmatprep.subr.mxu0 %v2949
    %3112 = vmatpush1.msra.mxu0 %v2948
    %3113 = vmatprep.subr.mxu0 %v2947
    %3114 = vmatpush1.msra.mxu0 %v2946
    %3115 = vmatprep.subr.mxu0 %v2945
    %3116 = vmatpush1.msra.mxu0 %v2944
    %3117 = vmatprep.subr.mxu0 %v3007
    %3118 = vmatpush2.msra.mxu0 %v3006
    %3119 = vmatprep.subr.mxu0 %v3005
    %3120 = vmatpush2.msra.mxu0 %v3004
    %3121 = vmatprep.subr.mxu0 %v3003
    %3122 = vmatpush2.msra.mxu0 %v3002
    %3123 = vmatprep.subr.mxu0 %v3001
    %3124 = vmatpush2.msra.mxu0 %v3000
    %3125 = vmatprep.subr.mxu0 %v2999
    %3126 = vmatpush2.msra.mxu0 %v2998
    %3127 = vmatprep.subr.mxu0 %v2997
    %3128 = vmatpush2.msra.mxu0 %v2996
    %3129 = vmatprep.subr.mxu0 %v2995
    %3130 = vmatpush2.msra.mxu0 %v2994
    %3131 = vmatprep.subr.mxu0 %v2993
    %3132 = vmatpush2.msra.mxu0 %v2992
    %3133 = vmatprep.subr.mxu0 %v2991
    %3134 = vmatpush2.msra.mxu0 %v2990
    %3135 = vmatprep.subr.mxu0 %v2989
    %3136 = vmatpush2.msra.mxu0 %v2988
    %3137 = vmatprep.subr.mxu0 %v2987
    %3138 = vmatpush2.msra.mxu0 %v2986
    %3139 = vmatprep.subr.mxu0 %v2985
    %3140 = vmatpush2.msra.mxu0 %v2984
    %3141 = vmatprep.subr.mxu0 %v2983
    %3142 = vmatpush2.msra.mxu0 %v2982
    %3143 = vmatprep.subr.mxu0 %v2981
    %3144 = vmatpush2.msra.mxu0 %v2980
    %3145 = vmatprep.subr.mxu0 %v2979
    %3146 = vmatpush2.msra.mxu0 %v2978
    %3147 = vmatprep.subr.mxu0 %v2977
    %3148 = vmatpush2.msra.mxu0 %v2976
    %3149 = vmatprep.mubr.f32.mxu0 %v2875
    %3150 = vmatmul.mubr.f32.gmra.mxu0 %v2874
    %v3151 = vpop.f32.mrf.mxu0
    %v3152 = vadd.f32 %v3075, %v3151
    %v3153 = vpop.f32.mrf.mxu0
    %v3154 = vadd.f32 %v3077, %v3153
    %3155 = vmatprep.mubr.f32.mxu0 %v2879
    %3156 = vmatmul.mubr.f32.gmra.mxu0 %v2878
    %v3157 = vpop.f32.mrf.mxu0
    %v3158 = vadd.f32 %v3081, %v3157
    %v3159 = vpop.f32.mrf.mxu0
    %v3160 = vadd.f32 %v3083, %v3159
    %3161 = vdwg.mxu0
    %v3162 = vadd.f32 %v2212, %v3152
    %v3163 = vadd.f32 %v2213, %v3154
    %v3164 = vadd.f32 %v2214, %v3158
    %v3165 = vadd.f32 %v2215, %v3160
    %3166 = vst [vmem:[#allocation16] sm:$0xff] %v3162
    %3167 = vst [vmem:[#allocation16 + $0x8] sm:$0xff] %v3163
    %3168 = vst [vmem:[#allocation16 + $0x10] sm:$0xff] %v3164
    %3169 = vst [vmem:[#allocation16 + $0x18] sm:$0xff] %v3165
    // Predicated region
    $region74: #{tpu_custom_call.1} parent=1 // pred_check
      _
    $region75: #{tpu_custom_call.1} parent=1 // pred_check_branch
      %3171 = sbr.rel (0) target = $region77
    $region76: #{tpu_custom_call.1} parent=1 // pred_region
      %s3173 = ssub.s32 512, 512
      %3174 = vsyncadd [#allocation4], %s3173
      %s3175 = sshll.u32 [#allocation16], 4
      %s3176 = int_to_ptr.vmem [resolvable:$true] %s3175
      %3181 = dma.vmem_to_hbm [thread:$0]  %s3176, 512, %s10, [#allocation4], 256, 256, 16
    $region77: #{tpu_custom_call.1} parent=1 // pred_fallthru
      _
    // Predicated region
    $region78: #{tpu_custom_call.1} parent=1 // pred_check
      _
    $region79: #{tpu_custom_call.1} parent=1 // pred_check_branch
      %3183 = sbr.rel (0) target = $region81
    $region80: #{tpu_custom_call.1} parent=1 // pred_region
      %3184 = dma.done [#allocation4], 512
    $region81: #{tpu_custom_call.1} parent=1 // pred_fallthru
      _
    %3185 = vsyncpa [#allocation3], 1
    %3186 = vsyncpa [#allocation6], 1
    %3187 = vsyncpa [#allocation9], 1
    %3188 = vsyncpa [#allocation12], 1
    %3189 = vsyncpa [#allocation15], 1
    %3190 = vsyncpa [#allocation4], 1

</llo_original>
